<compile_context>
chip_gen: v7x
topology: tpu7x:2x2x1
jax: 0.10.0
libtpu: 0.0.40
codegen_flags: <defaults>
</compile_context>

<pallas_src>
import math

import numpy as np
import jax
import jax.numpy as jnp
from jax import lax
from jax.experimental import pallas as pl
from jax.experimental.pallas import tpu as pltpu

NODE_TYPES = ['AST', 'Add', 'And', 'AnnAssign', 'Assert', 'Assign', 'AsyncFor',
              'AsyncFunctionDef', 'AsyncWith', 'Attribute', 'AugAssign', 'AugLoad',
              'AugStore', 'Await', 'BinOp', 'BitAnd', 'BitOr', 'BitXor', 'BoolOp',
              'Break', 'Bytes', 'Call', 'ClassDef', 'Compare', 'Constant', 'Continue',
              'Del', 'Delete', 'Dict', 'DictComp', 'Div', 'Ellipsis', 'Eq',
              'ExceptHandler', 'Expr', 'Expression', 'ExtSlice', 'FloorDiv', 'For',
              'FormattedValue', 'FunctionDef', 'GeneratorExp', 'Global', 'Gt', 'GtE',
              'If', 'IfExp', 'Import', 'ImportFrom', 'In', 'Index', 'Interactive',
              'Invert', 'Is', 'IsNot', 'JoinedStr', 'LShift', 'Lambda', 'List',
              'ListComp', 'Load', 'Lt', 'LtE', 'MatMult', 'Mod', 'Module', 'Mult',
              'Name', 'NameConstant', 'NodeTransformer', 'NodeVisitor', 'Nonlocal',
              'Not', 'NotEq', 'NotIn', 'Num', 'Or', 'Param', 'Pass', 'Pow',
              'PyCF_ONLY_AST', 'RShift', 'Raise', 'Return', 'Set', 'SetComp', 'Slice',
              'Starred', 'Store', 'Str', 'Sub', 'Subscript', 'Suite', 'Try', 'Tuple',
              'UAdd', 'USub', 'UnaryOp', 'While', 'With', 'Yield', 'YieldFrom',
              '_NUM_TYPES', '__builtins__', '__cached__', '__doc__', '__file__',
              '__loader__', '__name__', '__package__', '__spec__', 'alias', 'arg',
              'arguments', 'boolop', 'cmpop', 'comprehension', 'copy_location',
              'dump', 'excepthandler', 'expr', 'expr_context',
              'fix_missing_locations', 'get_docstring', 'increment_lineno',
              'iter_child_nodes', 'iter_fields', 'keyword', 'literal_eval', 'mod',
              'operator', 'parse', 'slice', 'stmt', 'unaryop', 'walk', 'withitem']
NODE_MAP = {name: i for i, name in enumerate(NODE_TYPES)}


# ---------------- Pallas kernel (one grid step == one tree level) ----------------

def tree_lstm_kernel(emb_init_ref, gather_ref, mask_ref, scat_ref, scatmask_ref,
                     wih_ref, whh_ref, b_ref, emb_ref):
    """Batched single-layer LSTM over Np padded sequences for one wavefront level.

    emb_init_ref: (Ntot_pad, D)   initial node (type) embeddings, loaded once.
    gather_ref:   (Tmax*Np, Ntot_pad) one-hot rows picking this level's time-major
                  input sequence out of the resident embedding state.
    mask_ref:     (Tmax*Np, 1)    f32, 1.0 where timestep t < sequence length.
    scat_ref:     (Ntot_pad, Np)  one-hot columns scattering h into parent rows.
    scatmask_ref: (Ntot_pad, 1)   f32, 1.0 on rows overwritten by this level.
    wih_ref/whh_ref: (D, 4D)      lane-fused transposed gate weights (i,f,g,o).
    b_ref:        (1, 4D)         bias_ih + bias_hh.
    emb_ref:      (Ntot_pad, D)   OUTPUT: embedding state, VMEM-resident across grid.
    """
    D = wih_ref.shape[0]
    Np = scat_ref.shape[1]
    Tmax = gather_ref.shape[0] // Np
    hp = jax.lax.Precision.HIGHEST

    # Initialize the resident state once (first level).
    @pl.when(pl.program_id(0) == 0)
    def _():
        emb_ref[...] = emb_init_ref[...]

    emb = emb_ref[...]                                          # (Ntot_pad, D)

    # Gather this level's inputs (time-major) via one-hot matmul (exact copy).
    x = jnp.dot(gather_ref[...], emb, precision=hp,
                preferred_element_type=jnp.float32)             # (Tmax*Np, D)
    # Input projection hoisted out of the recurrence: one lane-dense matmul.
    gx = jnp.dot(x, wih_ref[...], precision=hp,
                 preferred_element_type=jnp.float32) + b_ref[...]   # (Tmax*Np, 4D)
    mask = mask_ref[...]                                        # (Tmax*Np, 1)
    whh = whh_ref[...]                                          # (D, 4D)

    h = jnp.zeros((Np, D), jnp.float32)
    c = jnp.zeros((Np, D), jnp.float32)

    # Static unroll; padded timesteps (mask == 0) must NOT update h / c.
    for t in range(Tmax):
        lo = t * Np
        g = gx[lo:lo + Np] + jnp.dot(h, whh, precision=hp,
                                     preferred_element_type=jnp.float32)  # (Np, 4D)
        i_g = jax.nn.sigmoid(g[:, 0:D])
        f_g = jax.nn.sigmoid(g[:, D:2 * D])
        g_g = jnp.tanh(g[:, 2 * D:3 * D])
        o_g = jax.nn.sigmoid(g[:, 3 * D:4 * D])
        c_new = f_g * c + i_g * g_g
        h_new = o_g * jnp.tanh(c_new)
        m = mask[lo:lo + Np]                                    # (Np, 1) f32 0/1
        c = c + m * (c_new - c)
        h = h + m * (h_new - h)

    # Scatter last-valid hidden states into their parent rows (one-hot matmul);
    # rows not owned by this level keep their previous value.
    upd = jnp.dot(scat_ref[...], h, precision=hp,
                  preferred_element_type=jnp.float32)           # (Ntot_pad, D)
    emb_ref[...] = emb * (1.0 - scatmask_ref[...]) + upd


# ---------------- host-side schedule construction (glue) ----------------

def build_batch_arrays(trees):
    """Flatten trees into a global node list and build per-level one-hot
    gather/scatter matrices + timestep masks. Levels: leaf=0,
    internal = 1 + max(child level); one level == one wavefront batch."""
    type_idx, children, roots = [], [], []

    def add(tree):
        name, kids = tree
        nid = len(type_idx)
        type_idx.append(NODE_MAP[name])
        children.append([])
        kid_ids = [add(k) for k in kids]
        children[nid] = kid_ids
        return nid

    for t in trees:
        roots.append(add(t))

    n_total = len(type_idx)
    level = [0] * n_total
    for nid in reversed(range(n_total)):          # preorder: children have larger ids
        if children[nid]:
            level[nid] = 1 + max(level[k] for k in children[nid])

    # TODO(synk): a root with no children (single-leaf program) would bypass the
    #             LSTM entirely; not needed for these synthetic ASTs.
    assert all(level[r] >= 1 for r in roots)

    Lmax = max(level)
    by_level = [[] for _ in range(Lmax)]
    for nid in range(n_total):
        if children[nid]:
            by_level[level[nid] - 1].append(nid)

    max_nodes = max(len(v) for v in by_level)
    Np = max(8, ((max_nodes + 7) // 8) * 8)                 # node batch, sublane pad
    Tmax = max(1 + len(children[nid]) for lv in by_level for nid in lv)
    Ntot_pad = ((n_total + 7) // 8) * 8                     # state rows, sublane pad
    TN = Tmax * Np

    gather_oh = np.zeros((Lmax, TN, Ntot_pad), np.float32)  # time-major one-hot gather
    step_mask = np.zeros((Lmax, TN, 1), np.float32)         # 1.0 iff t < seq len
    scatter_oh = np.zeros((Lmax, Ntot_pad, Np), np.float32)  # h -> parent row
    scatter_rm = np.zeros((Lmax, Ntot_pad, 1), np.float32)   # rows owned by level

    for l, nids in enumerate(by_level):
        for j, nid in enumerate(nids):
            seq = [nid] + children[nid]                     # [own type emb, children]
            assert len(seq) <= Tmax
            for t, src in enumerate(seq):
                assert 0 <= src < n_total
                gather_oh[l, t * Np + j, src] = 1.0
                step_mask[l, t * Np + j, 0] = 1.0
            scatter_oh[l, nid, j] = 1.0
            scatter_rm[l, nid, 0] = 1.0

    return dict(
        type_idx=np.array(type_idx, np.int32),
        children=children, roots=roots,
        gather_oh=gather_oh, step_mask=step_mask,
        scatter_oh=scatter_oh, scatter_rm=scatter_rm,
        Np=Np, Tmax=Tmax, Lmax=Lmax, n_total=n_total, Ntot_pad=Ntot_pad,
    )


# ---------------- forward wrapper ----------------

def prep_params(w_ih, w_hh, b_ih, b_hh, head_w, head_b, D, C):
    """PyTorch layouts -> lane-fused kernel layouts (gate order i,f,g,o)."""
    wih_cat = jnp.asarray(w_ih, jnp.float32).T               # (D, 4D) = (32, 128)
    whh_cat = jnp.asarray(w_hh, jnp.float32).T               # (D, 4D)
    b_cat = (jnp.asarray(b_ih, jnp.float32)
             + jnp.asarray(b_hh, jnp.float32)).reshape(1, 4 * D)
    head_wt = jnp.asarray(head_w, jnp.float32).T              # (D, C)
    head_bv = jnp.asarray(head_b, jnp.float32).reshape(1, C)
    return wih_cat, whh_cat, b_cat, head_wt, head_bv


def make_forward(sched, D, C):
    Np, Tmax = sched["Np"], sched["Tmax"]
    Lmax, Ntot_pad = sched["Lmax"], sched["Ntot_pad"]
    n_total = sched["n_total"]
    TN = Tmax * Np

    tree_call = pl.pallas_call(
        tree_lstm_kernel,
        out_shape=jax.ShapeDtypeStruct((Ntot_pad, D), jnp.float32),
        grid=(Lmax,),
        in_specs=[
            # constant index_maps -> loaded into VMEM exactly once for all levels
            pl.BlockSpec((Ntot_pad, D), lambda l: (0, 0)),          # emb_init
            pl.BlockSpec((None, TN, Ntot_pad), lambda l: (l, 0, 0)),  # gather one-hot
            pl.BlockSpec((None, TN, 1), lambda l: (l, 0, 0)),         # timestep mask
            pl.BlockSpec((None, Ntot_pad, Np), lambda l: (l, 0, 0)),  # scatter one-hot
            pl.BlockSpec((None, Ntot_pad, 1), lambda l: (l, 0, 0)),   # scatter row mask
            pl.BlockSpec((D, 4 * D), lambda l: (0, 0)),             # W_ih^T fused
            pl.BlockSpec((D, 4 * D), lambda l: (0, 0)),             # W_hh^T fused
            pl.BlockSpec((1, 4 * D), lambda l: (0, 0)),             # bias
        ],
        # constant block index -> embedding state stays VMEM-resident across levels
        out_specs=pl.BlockSpec((Ntot_pad, D), lambda l: (0, 0)),
        compiler_params=pltpu.CompilerParams(
            dimension_semantics=("arbitrary",)),                     # levels sequential
    )

    gather_oh = jnp.asarray(sched["gather_oh"])
    step_mask = jnp.asarray(sched["step_mask"])
    scatter_oh = jnp.asarray(sched["scatter_oh"])
    scatter_rm = jnp.asarray(sched["scatter_rm"])
    type_idx = jnp.asarray(sched["type_idx"])
    root_ids = jnp.asarray(np.array(sched["roots"], np.int32))

    @jax.jit
    def forward(emb_table, wih_cat, whh_cat, b_cat, head_wt, head_bv):
        # Every node starts as its type embedding (leaves keep it; internal
        # nodes get overwritten by their subtree-LSTM hidden state in-kernel).
        emb_init = jnp.zeros((Ntot_pad, D), jnp.float32)
        emb_init = emb_init.at[:n_total, :].set(emb_table[type_idx])

        emb_final = tree_call(emb_init, gather_oh, step_mask,
                              scatter_oh, scatter_rm, wih_cat, whh_cat, b_cat)

        # Head only on the B root rows (tiny) -- plain XLA epilogue.
        reps = emb_final[root_ids]                                  # (B, D)
        return jnp.dot(reps, head_wt,
                       precision=jax.lax.Precision.HIGHEST) + head_bv   # (B, C)

    return forward


# ---------------- pure-JAX reference (matches PyTorch semantics) ----------------

def reference_logits(sched, emb_table, w_ih, w_hh, b_ih, b_hh, head_w, head_b):
    D = emb_table.shape[1]
    hp = jax.lax.Precision.HIGHEST
    type_idx, children = sched["type_idx"], sched["children"]

    def embed(nid):
        node_emb = emb_table[type_idx[nid]]
        if not children[nid]:
            return node_emb
        seq = [node_emb] + [embed(k) for k in children[nid]]
        h = jnp.zeros((D,), jnp.float32)
        c = jnp.zeros((D,), jnp.float32)
        for x_t in seq:
            gates = (jnp.dot(w_ih, x_t, precision=hp) + b_ih
                     + jnp.dot(w_hh, h, precision=hp) + b_hh)
            i = jax.nn.sigmoid(gates[0:D])
            f = jax.nn.sigmoid(gates[D:2 * D])
            g = jnp.tanh(gates[2 * D:3 * D])
            o = jax.nn.sigmoid(gates[3 * D:4 * D])
            c = f * c + i * g
            h = o * jnp.tanh(c)
        return h

    reps = jnp.stack([embed(r) for r in sched["roots"]], axis=0)
    return jnp.dot(reps, head_w.T, precision=hp) + head_b


# ---------------- parameter init (deterministic) ----------------

def xavier_normal(key, shape):
    fan_out, fan_in = shape[0], shape[1]
    std = math.sqrt(2.0 / (fan_in + fan_out))
    return std * jax.random.normal(key, shape, dtype=jnp.float32)


if __name__ == "__main__":
    D = 32          # embedding_dims
    C = 8           # n_classes
    n_nodes = len(NODE_TYPES)

    key = jax.random.PRNGKey(0)
    k_emb, k_ih, k_hh, k_head, k_hb = jax.random.split(key, 5)

    emb_table = xavier_normal(k_emb, (n_nodes, D))              # Embedding.weight
    w_ih = xavier_normal(k_ih, (4 * D, D))                      # weight_ih_l0
    w_hh = xavier_normal(k_hh, (4 * D, D))                      # weight_hh_l0
    b_ih = jnp.zeros((4 * D,), jnp.float32)                     # bias_ih_l0 = 0
    b_hh = jnp.ones((4 * D,), jnp.float32)                      # bias_hh_l0 = 1
    head_w = xavier_normal(k_head, (C, D))                      # Linear.weight
    head_b = 0.01 * jax.random.normal(k_hb, (C,), dtype=jnp.float32)

    # Two small synthetic ASTs (node-type name, children) — stand-ins for
    # ast.parse(code), since parsing has no Pallas equivalent.
    tree0 = ('Module', [
        ('FunctionDef', [
            ('arguments', []),
            ('Return', [
                ('BinOp', [('Name', []), ('Add', []), ('Name', [])]),
            ]),
        ]),
    ])
    tree1 = ('Module', [
        ('Assign', [
            ('Name', []),
            ('Call', [('Name', []), ('Constant', []), ('Constant', [])]),
        ]),
        ('Expr', [('Compare', [('Name', []), ('Lt', []), ('Num', [])])]),
    ])
    trees = [tree0, tree1]
    B = len(trees)

    sched = build_batch_arrays(trees)
    wih_cat, whh_cat, b_cat, head_wt, head_bv = prep_params(
        w_ih, w_hh, b_ih, b_hh, head_w, head_b, D, C)

    forward = make_forward(sched, D, C)
    logits = jax.block_until_ready(
        forward(emb_table, wih_cat, whh_cat, b_cat, head_wt, head_bv))   # (B, C)

    # Correctness check against a straightforward pure-JAX recursion.
    ref = jax.block_until_ready(
        reference_logits(sched, emb_table, w_ih, w_hh, b_ih, b_hh, head_w, head_b))

    assert logits.shape == (B, C)
    assert bool(jnp.all(jnp.isfinite(logits)))
    assert np.allclose(np.asarray(logits), np.asarray(ref), rtol=5e-3, atol=5e-3)
    print("KERNEL_OK")
</pallas_src>

<mosaic_0001>
module attributes {stable_mosaic.version = 11 : i64} {
  func.func @tree_lstm_kernel(%arg0: i32, %arg1: memref<24x32xf32, #tpu.memory_space<vmem>>, %arg2: memref<1x32x24xf32, #tpu.memory_space<vmem>>, %arg3: memref<1x32x1xf32, #tpu.memory_space<vmem>>, %arg4: memref<1x24x8xf32, #tpu.memory_space<vmem>>, %arg5: memref<1x24x1xf32, #tpu.memory_space<vmem>>, %arg6: memref<32x128xf32, #tpu.memory_space<vmem>>, %arg7: memref<32x128xf32, #tpu.memory_space<vmem>>, %arg8: memref<1x128xf32, #tpu.memory_space<vmem>>, %arg9: memref<24x32xf32, #tpu.memory_space<vmem>>) attributes {dimension_semantics = [#tpu.dimension_semantics<arbitrary>], iteration_bounds = array<i64: 4>, scalar_prefetch = 0 : i64, scratch_operands = 0 : i64, tpu.core_type = #tpu.core_type<tc>, window_params = [{pipeline_mode = #tpu.pipeline_mode<synchronous>, transform_indices = @transform_0, window_bounds = array<i64: 24, 32>}, {transform_indices = @transform_1, window_bounds = array<i64: 1, 32, 24>}, {transform_indices = @transform_2, window_bounds = array<i64: 1, 32, 1>}, {transform_indices = @transform_3, window_bounds = array<i64: 1, 24, 8>}, {transform_indices = @transform_4, window_bounds = array<i64: 1, 24, 1>}, {pipeline_mode = #tpu.pipeline_mode<synchronous>, transform_indices = @transform_5, window_bounds = array<i64: 32, 128>}, {pipeline_mode = #tpu.pipeline_mode<synchronous>, transform_indices = @transform_6, window_bounds = array<i64: 32, 128>}, {pipeline_mode = #tpu.pipeline_mode<synchronous>, transform_indices = @transform_7, window_bounds = array<i64: 1, 128>}, {pipeline_mode = #tpu.pipeline_mode<synchronous>, transform_indices = @transform_8, window_bounds = array<i64: 24, 32>}]} {
    %c0_i32 = arith.constant 0 : i32
    %0 = arith.cmpi eq, %arg0, %c0_i32 : i32
    %1 = arith.extui %0 : i1 to i32
    %c0_i32_0 = arith.constant 0 : i32
    %2 = arith.cmpi ne, %1, %c0_i32_0 : i32
    scf.if %2 {
      %c0_43 = arith.constant 0 : index
      %c0_44 = arith.constant 0 : index
      %172 = vector.load %arg1[%c0_43, %c0_44] : memref<24x32xf32, #tpu.memory_space<vmem>>, vector<24x32xf32>
      %c0_45 = arith.constant 0 : index
      %c0_46 = arith.constant 0 : index
      %173 = vector.load %arg9[%c0_45, %c0_46] : memref<24x32xf32, #tpu.memory_space<vmem>>, vector<24x32xf32>
      tpu.vector_store %arg9[%c0_45, %c0_46], %172 {strides = array<i32>} : memref<24x32xf32, #tpu.memory_space<vmem>>, vector<24x32xf32>,
    } else {
    }
    %c0 = arith.constant 0 : index
    %c0_1 = arith.constant 0 : index
    %3 = vector.load %arg9[%c0, %c0_1] : memref<24x32xf32, #tpu.memory_space<vmem>>, vector<24x32xf32>
    %c0_2 = arith.constant 0 : index
    %c0_3 = arith.constant 0 : index
    %c0_4 = arith.constant 0 : index
    %4 = vector.load %arg2[%c0_2, %c0_3, %c0_4] : memref<1x32x24xf32, #tpu.memory_space<vmem>>, vector<1x32x24xf32>
    %5 = vector.shape_cast %4 : vector<1x32x24xf32> to vector<32x24xf32>
    %cst = arith.constant dense<0.000000e+00> : vector<32x32xf32>
    %6 = tpu.matmul %5, %3, %cst {dimension_numbers = #tpu.dot_dimension_numbers<[1], [0], [0], [1], [0, 0, 1, 1], [], []>, precision = #tpu.contract_precision<fp32>} : vector<32x24xf32>, vector<24x32xf32>, vector<32x32xf32> -> vector<32x32xf32>
    %c0_5 = arith.constant 0 : index
    %c0_6 = arith.constant 0 : index
    %7 = vector.load %arg6[%c0_5, %c0_6] : memref<32x128xf32, #tpu.memory_space<vmem>>, vector<32x128xf32>
    %cst_7 = arith.constant dense<0.000000e+00> : vector<32x128xf32>
    %8 = tpu.matmul %6, %7, %cst_7 {dimension_numbers = #tpu.dot_dimension_numbers<[1], [0], [0], [1], [0, 0, 1, 1], [], []>, precision = #tpu.contract_precision<fp32>} : vector<32x32xf32>, vector<32x128xf32>, vector<32x128xf32> -> vector<32x128xf32>
    %c0_8 = arith.constant 0 : index
    %c0_9 = arith.constant 0 : index
    %9 = vector.load %arg8[%c0_8, %c0_9] : memref<1x128xf32, #tpu.memory_space<vmem>>, vector<1x128xf32>
    %10 = vector.broadcast %9 : vector<1x128xf32> to vector<32x128xf32>
    %11 = arith.addf %8, %10 : vector<32x128xf32>
    %c0_10 = arith.constant 0 : index
    %c0_11 = arith.constant 0 : index
    %c0_12 = arith.constant 0 : index
    %12 = vector.load %arg3[%c0_10, %c0_11, %c0_12] : memref<1x32x1xf32, #tpu.memory_space<vmem>>, vector<1x32x1xf32>
    %13 = vector.shape_cast %12 : vector<1x32x1xf32> to vector<32x1xf32>
    %c0_13 = arith.constant 0 : index
    %c0_14 = arith.constant 0 : index
    %14 = vector.load %arg7[%c0_13, %c0_14] : memref<32x128xf32, #tpu.memory_space<vmem>>, vector<32x128xf32>
    %cst_15 = arith.constant 0.000000e+00 : f32
    %15 = vector.broadcast %cst_15 : f32 to vector<8x32xf32>
    %cst_16 = arith.constant 0.000000e+00 : f32
    %16 = vector.broadcast %cst_16 : f32 to vector<8x32xf32>
    %17 = vector.extract_strided_slice %11 {offsets = [0, 0], sizes = [8, 128], strides = [1, 1]} : vector<32x128xf32> to vector<8x128xf32>
    %cst_17 = arith.constant dense<0.000000e+00> : vector<8x128xf32>
    %18 = tpu.matmul %15, %14, %cst_17 {dimension_numbers = #tpu.dot_dimension_numbers<[1], [0], [0], [1], [0, 0, 1, 1], [], []>, precision = #tpu.contract_precision<fp32>} : vector<8x32xf32>, vector<32x128xf32>, vector<8x128xf32> -> vector<8x128xf32>
    %19 = arith.addf %17, %18 : vector<8x128xf32>
    %20 = vector.extract_strided_slice %19 {offsets = [0, 0], sizes = [8, 32], strides = [1, 1]} : vector<8x128xf32> to vector<8x32xf32>
    %21 = arith.negf %20 : vector<8x32xf32>
    %22 = math.exp %21 : vector<8x32xf32>
    %cst_18 = arith.constant 1.000000e+00 : f32
    %23 = vector.broadcast %cst_18 : f32 to vector<8x32xf32>
    %24 = arith.addf %23, %22 : vector<8x32xf32>
    %25 = arith.divf %23, %24 : vector<8x32xf32>
    %26 = vector.extract_strided_slice %19 {offsets = [0, 32], sizes = [8, 32], strides = [1, 1]} : vector<8x128xf32> to vector<8x32xf32>
    %27 = arith.negf %26 : vector<8x32xf32>
    %28 = math.exp %27 : vector<8x32xf32>
    %cst_19 = arith.constant 1.000000e+00 : f32
    %29 = vector.broadcast %cst_19 : f32 to vector<8x32xf32>
    %30 = arith.addf %29, %28 : vector<8x32xf32>
    %31 = arith.divf %29, %30 : vector<8x32xf32>
    %32 = vector.extract_strided_slice %19 {offsets = [0, 64], sizes = [8, 32], strides = [1, 1]} : vector<8x128xf32> to vector<8x32xf32>
    %33 = math.tanh %32 : vector<8x32xf32>
    %34 = vector.extract_strided_slice %19 {offsets = [0, 96], sizes = [8, 32], strides = [1, 1]} : vector<8x128xf32> to vector<8x32xf32>
    %35 = arith.negf %34 : vector<8x32xf32>
    %36 = math.exp %35 : vector<8x32xf32>
    %cst_20 = arith.constant 1.000000e+00 : f32
    %37 = vector.broadcast %cst_20 : f32 to vector<8x32xf32>
    %38 = arith.addf %37, %36 : vector<8x32xf32>
    %39 = arith.divf %37, %38 : vector<8x32xf32>
    %40 = arith.mulf %31, %16 : vector<8x32xf32>
    %41 = arith.mulf %25, %33 : vector<8x32xf32>
    %42 = arith.addf %40, %41 : vector<8x32xf32>
    %43 = math.tanh %42 : vector<8x32xf32>
    %44 = arith.mulf %39, %43 : vector<8x32xf32>
    %45 = vector.extract_strided_slice %13 {offsets = [0, 0], sizes = [8, 1], strides = [1, 1]} : vector<32x1xf32> to vector<8x1xf32>
    %46 = arith.subf %42, %16 : vector<8x32xf32>
    %47 = vector.broadcast %45 : vector<8x1xf32> to vector<8x32xf32>
    %48 = arith.mulf %47, %46 : vector<8x32xf32>
    %49 = arith.addf %16, %48 : vector<8x32xf32>
    %50 = arith.subf %44, %15 : vector<8x32xf32>
    %51 = vector.broadcast %45 : vector<8x1xf32> to vector<8x32xf32>
    %52 = arith.mulf %51, %50 : vector<8x32xf32>
    %53 = arith.addf %15, %52 : vector<8x32xf32>
    %54 = vector.extract_strided_slice %11 {offsets = [8, 0], sizes = [8, 128], strides = [1, 1]} : vector<32x128xf32> to vector<8x128xf32>
    %cst_21 = arith.constant dense<0.000000e+00> : vector<8x128xf32>
    %55 = tpu.matmul %53, %14, %cst_21 {dimension_numbers = #tpu.dot_dimension_numbers<[1], [0], [0], [1], [0, 0, 1, 1], [], []>, precision = #tpu.contract_precision<fp32>} : vector<8x32xf32>, vector<32x128xf32>, vector<8x128xf32> -> vector<8x128xf32>
    %56 = arith.addf %54, %55 : vector<8x128xf32>
    %57 = vector.extract_strided_slice %56 {offsets = [0, 0], sizes = [8, 32], strides = [1, 1]} : vector<8x128xf32> to vector<8x32xf32>
    %58 = arith.negf %57 : vector<8x32xf32>
    %59 = math.exp %58 : vector<8x32xf32>
    %cst_22 = arith.constant 1.000000e+00 : f32
    %60 = vector.broadcast %cst_22 : f32 to vector<8x32xf32>
    %61 = arith.addf %60, %59 : vector<8x32xf32>
    %62 = arith.divf %60, %61 : vector<8x32xf32>
    %63 = vector.extract_strided_slice %56 {offsets = [0, 32], sizes = [8, 32], strides = [1, 1]} : vector<8x128xf32> to vector<8x32xf32>
    %64 = arith.negf %63 : vector<8x32xf32>
    %65 = math.exp %64 : vector<8x32xf32>
    %cst_23 = arith.constant 1.000000e+00 : f32
    %66 = vector.broadcast %cst_23 : f32 to vector<8x32xf32>
    %67 = arith.addf %66, %65 : vector<8x32xf32>
    %68 = arith.divf %66, %67 : vector<8x32xf32>
    %69 = vector.extract_strided_slice %56 {offsets = [0, 64], sizes = [8, 32], strides = [1, 1]} : vector<8x128xf32> to vector<8x32xf32>
    %70 = math.tanh %69 : vector<8x32xf32>
    %71 = vector.extract_strided_slice %56 {offsets = [0, 96], sizes = [8, 32], strides = [1, 1]} : vector<8x128xf32> to vector<8x32xf32>
    %72 = arith.negf %71 : vector<8x32xf32>
    %73 = math.exp %72 : vector<8x32xf32>
    %cst_24 = arith.constant 1.000000e+00 : f32
    %74 = vector.broadcast %cst_24 : f32 to vector<8x32xf32>
    %75 = arith.addf %74, %73 : vector<8x32xf32>
    %76 = arith.divf %74, %75 : vector<8x32xf32>
    %77 = arith.mulf %68, %49 : vector<8x32xf32>
    %78 = arith.mulf %62, %70 : vector<8x32xf32>
    %79 = arith.addf %77, %78 : vector<8x32xf32>
    %80 = math.tanh %79 : vector<8x32xf32>
    %81 = arith.mulf %76, %80 : vector<8x32xf32>
    %82 = vector.extract_strided_slice %13 {offsets = [8, 0], sizes = [8, 1], strides = [1, 1]} : vector<32x1xf32> to vector<8x1xf32>
    %83 = arith.subf %79, %49 : vector<8x32xf32>
    %84 = vector.broadcast %82 : vector<8x1xf32> to vector<8x32xf32>
    %85 = arith.mulf %84, %83 : vector<8x32xf32>
    %86 = arith.addf %49, %85 : vector<8x32xf32>
    %87 = arith.subf %81, %53 : vector<8x32xf32>
    %88 = vector.broadcast %82 : vector<8x1xf32> to vector<8x32xf32>
    %89 = arith.mulf %88, %87 : vector<8x32xf32>
    %90 = arith.addf %53, %89 : vector<8x32xf32>
    %91 = vector.extract_strided_slice %11 {offsets = [16, 0], sizes = [8, 128], strides = [1, 1]} : vector<32x128xf32> to vector<8x128xf32>
    %cst_25 = arith.constant dense<0.000000e+00> : vector<8x128xf32>
    %92 = tpu.matmul %90, %14, %cst_25 {dimension_numbers = #tpu.dot_dimension_numbers<[1], [0], [0], [1], [0, 0, 1, 1], [], []>, precision = #tpu.contract_precision<fp32>} : vector<8x32xf32>, vector<32x128xf32>, vector<8x128xf32> -> vector<8x128xf32>
    %93 = arith.addf %91, %92 : vector<8x128xf32>
    %94 = vector.extract_strided_slice %93 {offsets = [0, 0], sizes = [8, 32], strides = [1, 1]} : vector<8x128xf32> to vector<8x32xf32>
    %95 = arith.negf %94 : vector<8x32xf32>
    %96 = math.exp %95 : vector<8x32xf32>
    %cst_26 = arith.constant 1.000000e+00 : f32
    %97 = vector.broadcast %cst_26 : f32 to vector<8x32xf32>
    %98 = arith.addf %97, %96 : vector<8x32xf32>
    %99 = arith.divf %97, %98 : vector<8x32xf32>
    %100 = vector.extract_strided_slice %93 {offsets = [0, 32], sizes = [8, 32], strides = [1, 1]} : vector<8x128xf32> to vector<8x32xf32>
    %101 = arith.negf %100 : vector<8x32xf32>
    %102 = math.exp %101 : vector<8x32xf32>
    %cst_27 = arith.constant 1.000000e+00 : f32
    %103 = vector.broadcast %cst_27 : f32 to vector<8x32xf32>
    %104 = arith.addf %103, %102 : vector<8x32xf32>
    %105 = arith.divf %103, %104 : vector<8x32xf32>
    %106 = vector.extract_strided_slice %93 {offsets = [0, 64], sizes = [8, 32], strides = [1, 1]} : vector<8x128xf32> to vector<8x32xf32>
    %107 = math.tanh %106 : vector<8x32xf32>
    %108 = vector.extract_strided_slice %93 {offsets = [0, 96], sizes = [8, 32], strides = [1, 1]} : vector<8x128xf32> to vector<8x32xf32>
    %109 = arith.negf %108 : vector<8x32xf32>
    %110 = math.exp %109 : vector<8x32xf32>
    %cst_28 = arith.constant 1.000000e+00 : f32
    %111 = vector.broadcast %cst_28 : f32 to vector<8x32xf32>
    %112 = arith.addf %111, %110 : vector<8x32xf32>
    %113 = arith.divf %111, %112 : vector<8x32xf32>
    %114 = arith.mulf %105, %86 : vector<8x32xf32>
    %115 = arith.mulf %99, %107 : vector<8x32xf32>
    %116 = arith.addf %114, %115 : vector<8x32xf32>
    %117 = math.tanh %116 : vector<8x32xf32>
    %118 = arith.mulf %113, %117 : vector<8x32xf32>
    %119 = vector.extract_strided_slice %13 {offsets = [16, 0], sizes = [8, 1], strides = [1, 1]} : vector<32x1xf32> to vector<8x1xf32>
    %120 = arith.subf %116, %86 : vector<8x32xf32>
    %121 = vector.broadcast %119 : vector<8x1xf32> to vector<8x32xf32>
    %122 = arith.mulf %121, %120 : vector<8x32xf32>
    %123 = arith.addf %86, %122 : vector<8x32xf32>
    %124 = arith.subf %118, %90 : vector<8x32xf32>
    %125 = vector.broadcast %119 : vector<8x1xf32> to vector<8x32xf32>
    %126 = arith.mulf %125, %124 : vector<8x32xf32>
    %127 = arith.addf %90, %126 : vector<8x32xf32>
    %128 = vector.extract_strided_slice %11 {offsets = [24, 0], sizes = [8, 128], strides = [1, 1]} : vector<32x128xf32> to vector<8x128xf32>
    %cst_29 = arith.constant dense<0.000000e+00> : vector<8x128xf32>
    %129 = tpu.matmul %127, %14, %cst_29 {dimension_numbers = #tpu.dot_dimension_numbers<[1], [0], [0], [1], [0, 0, 1, 1], [], []>, precision = #tpu.contract_precision<fp32>} : vector<8x32xf32>, vector<32x128xf32>, vector<8x128xf32> -> vector<8x128xf32>
    %130 = arith.addf %128, %129 : vector<8x128xf32>
    %131 = vector.extract_strided_slice %130 {offsets = [0, 0], sizes = [8, 32], strides = [1, 1]} : vector<8x128xf32> to vector<8x32xf32>
    %132 = arith.negf %131 : vector<8x32xf32>
    %133 = math.exp %132 : vector<8x32xf32>
    %cst_30 = arith.constant 1.000000e+00 : f32
    %134 = vector.broadcast %cst_30 : f32 to vector<8x32xf32>
    %135 = arith.addf %134, %133 : vector<8x32xf32>
    %136 = arith.divf %134, %135 : vector<8x32xf32>
    %137 = vector.extract_strided_slice %130 {offsets = [0, 32], sizes = [8, 32], strides = [1, 1]} : vector<8x128xf32> to vector<8x32xf32>
    %138 = arith.negf %137 : vector<8x32xf32>
    %139 = math.exp %138 : vector<8x32xf32>
    %cst_31 = arith.constant 1.000000e+00 : f32
    %140 = vector.broadcast %cst_31 : f32 to vector<8x32xf32>
    %141 = arith.addf %140, %139 : vector<8x32xf32>
    %142 = arith.divf %140, %141 : vector<8x32xf32>
    %143 = vector.extract_strided_slice %130 {offsets = [0, 64], sizes = [8, 32], strides = [1, 1]} : vector<8x128xf32> to vector<8x32xf32>
    %144 = math.tanh %143 : vector<8x32xf32>
    %145 = vector.extract_strided_slice %130 {offsets = [0, 96], sizes = [8, 32], strides = [1, 1]} : vector<8x128xf32> to vector<8x32xf32>
    %146 = arith.negf %145 : vector<8x32xf32>
    %147 = math.exp %146 : vector<8x32xf32>
    %cst_32 = arith.constant 1.000000e+00 : f32
    %148 = vector.broadcast %cst_32 : f32 to vector<8x32xf32>
    %149 = arith.addf %148, %147 : vector<8x32xf32>
    %150 = arith.divf %148, %149 : vector<8x32xf32>
    %151 = arith.mulf %142, %123 : vector<8x32xf32>
    %152 = arith.mulf %136, %144 : vector<8x32xf32>
    %153 = arith.addf %151, %152 : vector<8x32xf32>
    %154 = math.tanh %153 : vector<8x32xf32>
    %155 = arith.mulf %150, %154 : vector<8x32xf32>
    %156 = vector.extract_strided_slice %13 {offsets = [24, 0], sizes = [8, 1], strides = [1, 1]} : vector<32x1xf32> to vector<8x1xf32>
    %157 = arith.subf %155, %127 : vector<8x32xf32>
    %158 = vector.broadcast %156 : vector<8x1xf32> to vector<8x32xf32>
    %159 = arith.mulf %158, %157 : vector<8x32xf32>
    %160 = arith.addf %127, %159 : vector<8x32xf32>
    %c0_33 = arith.constant 0 : index
    %c0_34 = arith.constant 0 : index
    %c0_35 = arith.constant 0 : index
    %161 = vector.load %arg4[%c0_33, %c0_34, %c0_35] : memref<1x24x8xf32, #tpu.memory_space<vmem>>, vector<1x24x8xf32>
    %162 = vector.shape_cast %161 : vector<1x24x8xf32> to vector<24x8xf32>
    %cst_36 = arith.constant dense<0.000000e+00> : vector<24x32xf32>
    %163 = tpu.matmul %162, %160, %cst_36 {dimension_numbers = #tpu.dot_dimension_numbers<[1], [0], [0], [1], [0, 0, 1, 1], [], []>, precision = #tpu.contract_precision<fp32>} : vector<24x8xf32>, vector<8x32xf32>, vector<24x32xf32> -> vector<24x32xf32>
    %c0_37 = arith.constant 0 : index
    %c0_38 = arith.constant 0 : index
    %c0_39 = arith.constant 0 : index
    %164 = vector.load %arg5[%c0_37, %c0_38, %c0_39] : memref<1x24x1xf32, #tpu.memory_space<vmem>>, vector<1x24x1xf32>
    %165 = vector.shape_cast %164 : vector<1x24x1xf32> to vector<24x1xf32>
    %cst_40 = arith.constant 1.000000e+00 : f32
    %166 = vector.broadcast %cst_40 : f32 to vector<24x1xf32>
    %167 = arith.subf %166, %165 : vector<24x1xf32>
    %168 = vector.broadcast %167 : vector<24x1xf32> to vector<24x32xf32>
    %169 = arith.mulf %3, %168 : vector<24x32xf32>
    %170 = arith.addf %169, %163 : vector<24x32xf32>
    %c0_41 = arith.constant 0 : index
    %c0_42 = arith.constant 0 : index
    %171 = vector.load %arg9[%c0_41, %c0_42] : memref<24x32xf32, #tpu.memory_space<vmem>>, vector<24x32xf32>
    tpu.vector_store %arg9[%c0_41, %c0_42], %170 {strides = array<i32>} : memref<24x32xf32, #tpu.memory_space<vmem>>, vector<24x32xf32>,
    return
  }
  func.func @transform_0(%arg0: i32) -> (i32, i32) {
    %c0_i32 = arith.constant 0 : i32
    %c0_i32_0 = arith.constant 0 : i32
    %c0_i32_1 = arith.constant 0 : i32
    return %c0_i32, %c0_i32_0 : i32, i32
  }
  func.func @transform_1(%arg0: i32) -> (i32, i32, i32) {
    %c0_i32 = arith.constant 0 : i32
    %c0_i32_0 = arith.constant 0 : i32
    %c0_i32_1 = arith.constant 0 : i32
    return %arg0, %c0_i32, %c0_i32_0 : i32, i32, i32
  }
  func.func @transform_2(%arg0: i32) -> (i32, i32, i32) {
    %c0_i32 = arith.constant 0 : i32
    %c0_i32_0 = arith.constant 0 : i32
    %c0_i32_1 = arith.constant 0 : i32
    return %arg0, %c0_i32, %c0_i32_0 : i32, i32, i32
  }
  func.func @transform_3(%arg0: i32) -> (i32, i32, i32) {
    %c0_i32 = arith.constant 0 : i32
    %c0_i32_0 = arith.constant 0 : i32
    %c0_i32_1 = arith.constant 0 : i32
    return %arg0, %c0_i32, %c0_i32_0 : i32, i32, i32
  }
  func.func @transform_4(%arg0: i32) -> (i32, i32, i32) {
    %c0_i32 = arith.constant 0 : i32
    %c0_i32_0 = arith.constant 0 : i32
    %c0_i32_1 = arith.constant 0 : i32
    return %arg0, %c0_i32, %c0_i32_0 : i32, i32, i32
  }
  func.func @transform_5(%arg0: i32) -> (i32, i32) {
    %c0_i32 = arith.constant 0 : i32
    %c0_i32_0 = arith.constant 0 : i32
    %c0_i32_1 = arith.constant 0 : i32
    return %c0_i32, %c0_i32_0 : i32, i32
  }
  func.func @transform_6(%arg0: i32) -> (i32, i32) {
    %c0_i32 = arith.constant 0 : i32
    %c0_i32_0 = arith.constant 0 : i32
    %c0_i32_1 = arith.constant 0 : i32
    return %c0_i32, %c0_i32_0 : i32, i32
  }
  func.func @transform_7(%arg0: i32) -> (i32, i32) {
    %c0_i32 = arith.constant 0 : i32
    %c0_i32_0 = arith.constant 0 : i32
    %c0_i32_1 = arith.constant 0 : i32
    return %c0_i32, %c0_i32_0 : i32, i32
  }
  func.func @transform_8(%arg0: i32) -> (i32, i32) {
    %c0_i32 = arith.constant 0 : i32
    %c0_i32_0 = arith.constant 0 : i32
    %c0_i32_1 = arith.constant 0 : i32
    return %c0_i32, %c0_i32_0 : i32, i32
  }
}

</mosaic_0001>

<llo_original>
// kernel: forward.1
$region0: #{forward.1}
  #allocation0 [shape = 'u32[]', space=smem, size = 0x4, offset = 0x4, fixed_abs, tag = 'smem constant byte address 0x4 - core index']
  #allocation1 [shape = 'u32[144,128]{1,0:T(1,128)}', space=vmem, size = 0x12000, scoped, tag = 'internal scratch']
  %s0 = inlined_call_operand.vmem [shape: f32[24,32], index: 0, kind: input, shape index: {}]
  %s1 = inlined_call_operand.vmem [shape: f32[4,32,24], index: 1, kind: input, shape index: {}]
  %s2 = inlined_call_operand.vmem [shape: f32[4,32,1], index: 2, kind: input, shape index: {}]
  %s3 = inlined_call_operand.vmem [shape: f32[4,24,8], index: 3, kind: input, shape index: {}]
  %s4 = inlined_call_operand.vmem [shape: f32[4,24,1], index: 4, kind: input, shape index: {}]
  %s5 = inlined_call_operand.vmem [shape: f32[32,128], index: 5, kind: input, shape index: {}]
  %s6 = inlined_call_operand.hbm [shape: f32[32,128], index: 6, kind: input, shape index: {}]
  %s7 = inlined_call_operand.vmem [shape: f32[1,128], index: 7, kind: input, shape index: {}]
  %s8 = inlined_call_operand.vmem [shape: f32[24,32], index: 8, kind: output, shape index: {}]
  %s9 = sld [smem:[#allocation0]]
  $region73: #{forward.1} parent=0
    _
  %s11 = ssub.s32 1, %s9
  %s12 = scalar_select 0, %s11, %s9
  $region1: #{forward.1} parent=0
    #allocation2 [shape = 'u8[16384]{0}', space=vmem, size = 0x4000, scoped, tag = 'input window, operand 6, single buffered']
    #allocation3 [shape = 's32[2]{0}', space=sflag, size = 0x8, scoped, tag = 'scoped memory for forward.1']
    %13 = vsyncpa [#allocation3], 0
    loop: start=0, step=1, limit=6
    $region2: #{forward.1} parent=1 // loop_pre_header
      _
    $region3: #{forward.1} parent=1 // loop_header
      %s15 = sphi 0, %s19
      %p16 = scmp.ge.s32.totalorder %s15, 6
      %s23 = sphi 0, %s23
      %s25 = sphi 0, %s23
      %s26 = sphi 0, %s25
      %s40 = sphi 0, %s26
      %s46 = sphi 0, %s48
      %s49 = sphi 0, %s46
      %s50 = sphi 0, %s49
      %s66 = sphi 0, %s50
      %s72 = sphi 0, %s74
      %s75 = sphi 0, %s72
      %s76 = sphi 0, %s75
      %s92 = sphi 0, %s76
      %s98 = sphi 0, %s100
      %s101 = sphi 0, %s98
      %s102 = sphi 0, %s101
      %s118 = sphi 0, %s102
      %s124 = sphi 0, %s126
      %s127 = sphi 0, %s124
      %s128 = sphi 0, %s127
      %s144 = sphi 0, %s128
      %s148 = sphi 0, %s148
      %s150 = sphi 0, %s148
      %s151 = sphi 0, %s150
      %s165 = sphi 0, %s151
      %s169 = sphi 0, %s169
      %s171 = sphi 0, %s169
      %s172 = sphi 0, %s171
      %s186 = sphi 0, %s172
      %s190 = sphi 0, %s190
      %s192 = sphi 0, %s190
      %s193 = sphi 0, %s192
      %s207 = sphi 0, %s193
      %s211 = sphi 0, %s211
      %s213 = sphi 0, %s211
      %s214 = sphi 0, %s213
      %s228 = sphi 0, %s214
    $region4: #{forward.1} parent=1 // loop_header_branch
      %18 = sbr.rel (%p16) target = $region8
    $region5: #{forward.1} parent=1 // loop_body
      %s20 = ssub.s32 %s15, 1
      %s21 = ssub.s32 %s15, 2
      %s22 = sadd.s32 %s15, 1
      %s24 = sadd.s32 %s23, 1
      %p27 = scmp.eq.s32.totalorder %s15, 3
      %p28 = scmp.ne.s32.totalorder %s23, %s25
      %p29 = scmp.eq.s32.totalorder %s15, 0
      %p30 = por %p28, %p29
      %p31 = scmp.ne.s32.totalorder %s23, %s25
      %p32 = scmp.eq.s32.totalorder %s20, 3
      %p33 = por %p31, %p32
      %p34 = scmp.ne.s32.totalorder %s25, %s26
      %p35 = scmp.eq.s32.totalorder %s20, 0
      %p36 = por %p34, %p35
      %p37 = scmp.ne.s32.totalorder %s25, %s26
      %p38 = scmp.eq.s32.totalorder %s21, 3
      %p39 = por %p37, %p38
      %p41 = scmp.ne.s32.totalorder %s26, %s40
      %p42 = scmp.eq.s32.totalorder %s21, 0
      %p43 = por %p41, %p42
      %s44 = ssub.s32 %s15, %s22
      %p45 = scmp.eq.s32.totalorder %s44, 0
      %s47 = sadd.s32 %s46, 1
      %s48 = scalar_select %p45, %s46, %s47
      %p51 = pneg %p45
      %p52 = scmp.eq.s32.totalorder %s15, 3
      %p53 = por %p51, %p52
      %p54 = scmp.ne.s32.totalorder %s46, %s49
      %p55 = scmp.eq.s32.totalorder %s15, 0
      %p56 = por %p54, %p55
      %p57 = scmp.ne.s32.totalorder %s46, %s49
      %p58 = scmp.eq.s32.totalorder %s20, 3
      %p59 = por %p57, %p58
      %p60 = scmp.ne.s32.totalorder %s49, %s50
      %p61 = scmp.eq.s32.totalorder %s20, 0
      %p62 = por %p60, %p61
      %p63 = scmp.ne.s32.totalorder %s49, %s50
      %p64 = scmp.eq.s32.totalorder %s21, 3
      %p65 = por %p63, %p64
      %p67 = scmp.ne.s32.totalorder %s50, %s66
      %p68 = scmp.eq.s32.totalorder %s21, 0
      %p69 = por %p67, %p68
      %s70 = ssub.s32 %s15, %s22
      %p71 = scmp.eq.s32.totalorder %s70, 0
      %s73 = sadd.s32 %s72, 1
      %s74 = scalar_select %p71, %s72, %s73
      %p77 = pneg %p71
      %p78 = scmp.eq.s32.totalorder %s15, 3
      %p79 = por %p77, %p78
      %p80 = scmp.ne.s32.totalorder %s72, %s75
      %p81 = scmp.eq.s32.totalorder %s15, 0
      %p82 = por %p80, %p81
      %p83 = scmp.ne.s32.totalorder %s72, %s75
      %p84 = scmp.eq.s32.totalorder %s20, 3
      %p85 = por %p83, %p84
      %p86 = scmp.ne.s32.totalorder %s75, %s76
      %p87 = scmp.eq.s32.totalorder %s20, 0
      %p88 = por %p86, %p87
      %p89 = scmp.ne.s32.totalorder %s75, %s76
      %p90 = scmp.eq.s32.totalorder %s21, 3
      %p91 = por %p89, %p90
      %p93 = scmp.ne.s32.totalorder %s76, %s92
      %p94 = scmp.eq.s32.totalorder %s21, 0
      %p95 = por %p93, %p94
      %s96 = ssub.s32 %s15, %s22
      %p97 = scmp.eq.s32.totalorder %s96, 0
      %s99 = sadd.s32 %s98, 1
      %s100 = scalar_select %p97, %s98, %s99
      %p103 = pneg %p97
      %p104 = scmp.eq.s32.totalorder %s15, 3
      %p105 = por %p103, %p104
      %p106 = scmp.ne.s32.totalorder %s98, %s101
      %p107 = scmp.eq.s32.totalorder %s15, 0
      %p108 = por %p106, %p107
      %p109 = scmp.ne.s32.totalorder %s98, %s101
      %p110 = scmp.eq.s32.totalorder %s20, 3
      %p111 = por %p109, %p110
      %p112 = scmp.ne.s32.totalorder %s101, %s102
      %p113 = scmp.eq.s32.totalorder %s20, 0
      %p114 = por %p112, %p113
      %p115 = scmp.ne.s32.totalorder %s101, %s102
      %p116 = scmp.eq.s32.totalorder %s21, 3
      %p117 = por %p115, %p116
      %p119 = scmp.ne.s32.totalorder %s102, %s118
      %p120 = scmp.eq.s32.totalorder %s21, 0
      %p121 = por %p119, %p120
      %s122 = ssub.s32 %s15, %s22
      %p123 = scmp.eq.s32.totalorder %s122, 0
      %s125 = sadd.s32 %s124, 1
      %s126 = scalar_select %p123, %s124, %s125
      %p129 = pneg %p123
      %p130 = scmp.eq.s32.totalorder %s15, 3
      %p131 = por %p129, %p130
      %p132 = scmp.ne.s32.totalorder %s124, %s127
      %p133 = scmp.eq.s32.totalorder %s15, 0
      %p134 = por %p132, %p133
      %p135 = scmp.ne.s32.totalorder %s124, %s127
      %p136 = scmp.eq.s32.totalorder %s20, 3
      %p137 = por %p135, %p136
      %p138 = scmp.ne.s32.totalorder %s127, %s128
      %p139 = scmp.eq.s32.totalorder %s20, 0
      %p140 = por %p138, %p139
      %p141 = scmp.ne.s32.totalorder %s127, %s128
      %p142 = scmp.eq.s32.totalorder %s21, 3
      %p143 = por %p141, %p142
      %p145 = scmp.ne.s32.totalorder %s128, %s144
      %p146 = scmp.eq.s32.totalorder %s21, 0
      %p147 = por %p145, %p146
      %s149 = sadd.s32 %s148, 1
      %p152 = scmp.eq.s32.totalorder %s15, 3
      %p153 = scmp.ne.s32.totalorder %s148, %s150
      %p154 = scmp.eq.s32.totalorder %s15, 0
      %p155 = por %p153, %p154
      %p156 = scmp.ne.s32.totalorder %s148, %s150
      %p157 = scmp.eq.s32.totalorder %s20, 3
      %p158 = por %p156, %p157
      %p159 = scmp.ne.s32.totalorder %s150, %s151
      %p160 = scmp.eq.s32.totalorder %s20, 0
      %p161 = por %p159, %p160
      %p162 = scmp.ne.s32.totalorder %s150, %s151
      %p163 = scmp.eq.s32.totalorder %s21, 3
      %p164 = por %p162, %p163
      %p166 = scmp.ne.s32.totalorder %s151, %s165
      %p167 = scmp.eq.s32.totalorder %s21, 0
      %p168 = por %p166, %p167
      %s170 = sadd.s32 %s169, 1
      %p173 = scmp.eq.s32.totalorder %s15, 3
      %p174 = scmp.ne.s32.totalorder %s169, %s171
      %p175 = scmp.eq.s32.totalorder %s15, 0
      %p176 = por %p174, %p175
      %p177 = scmp.ne.s32.totalorder %s169, %s171
      %p178 = scmp.eq.s32.totalorder %s20, 3
      %p179 = por %p177, %p178
      %p180 = scmp.ne.s32.totalorder %s171, %s172
      %p181 = scmp.eq.s32.totalorder %s20, 0
      %p182 = por %p180, %p181
      %p183 = scmp.ne.s32.totalorder %s171, %s172
      %p184 = scmp.eq.s32.totalorder %s21, 3
      %p185 = por %p183, %p184
      %p187 = scmp.ne.s32.totalorder %s172, %s186
      %p188 = scmp.eq.s32.totalorder %s21, 0
      %p189 = por %p187, %p188
      %s191 = sadd.s32 %s190, 1
      %p194 = scmp.eq.s32.totalorder %s15, 3
      %p195 = scmp.ne.s32.totalorder %s190, %s192
      %p196 = scmp.eq.s32.totalorder %s15, 0
      %p197 = por %p195, %p196
      %p198 = scmp.ne.s32.totalorder %s190, %s192
      %p199 = scmp.eq.s32.totalorder %s20, 3
      %p200 = por %p198, %p199
      %p201 = scmp.ne.s32.totalorder %s192, %s193
      %p202 = scmp.eq.s32.totalorder %s20, 0
      %p203 = por %p201, %p202
      %p204 = scmp.ne.s32.totalorder %s192, %s193
      %p205 = scmp.eq.s32.totalorder %s21, 3
      %p206 = por %p204, %p205
      %p208 = scmp.ne.s32.totalorder %s193, %s207
      %p209 = scmp.eq.s32.totalorder %s21, 0
      %p210 = por %p208, %p209
      %s212 = sadd.s32 %s211, 1
      %p215 = scmp.eq.s32.totalorder %s15, 3
      %p216 = scmp.ne.s32.totalorder %s211, %s213
      %p217 = scmp.eq.s32.totalorder %s15, 0
      %p218 = por %p216, %p217
      %p219 = scmp.ne.s32.totalorder %s211, %s213
      %p220 = scmp.eq.s32.totalorder %s20, 3
      %p221 = por %p219, %p220
      %p222 = scmp.ne.s32.totalorder %s213, %s214
      %p223 = scmp.eq.s32.totalorder %s20, 0
      %p224 = por %p222, %p223
      %p225 = scmp.ne.s32.totalorder %s213, %s214
      %p226 = scmp.eq.s32.totalorder %s21, 3
      %p227 = por %p225, %p226
      %p229 = scmp.ne.s32.totalorder %s214, %s228
      %p230 = scmp.eq.s32.totalorder %s21, 0
      %p231 = por %p229, %p230
      %p232 = scmp.le.s32.totalorder 1, %s15
      %p233 = scmp.lt.s32.totalorder %s15, 5
      %p234 = pnand %p232, %p233
      %p235 = pneg %p234
      // Predicated region
      $region9: #{forward.1} parent=5 // pred_check
        _
      $region10: #{forward.1} parent=5 // pred_check_branch
        %237 = sbr.rel (%p234) target = $region12
      $region11: #{forward.1} parent=5 // pred_region
        %s238 = ssub.s32 %s15, 1
        // Predicated region
        $region13: #{forward.1} parent=11 // pred_check
          %p239 = pneg %p36
        $region14: #{forward.1} parent=11 // pred_check_branch
          %241 = sbr.rel (%p239) target = $region16
        $region15: #{forward.1} parent=11 // pred_region
          _
        $region16: #{forward.1} parent=11 // pred_fallthru
          _
        // Predicated region
        $region17: #{forward.1} parent=11 // pred_check
          %p242 = pneg %p161
        $region18: #{forward.1} parent=11 // pred_check_branch
          %244 = sbr.rel (%p242) target = $region20
        $region19: #{forward.1} parent=11 // pred_region
          _
        $region20: #{forward.1} parent=11 // pred_fallthru
          _
        // Predicated region
        $region21: #{forward.1} parent=11 // pred_check
          %p245 = pneg %p182
        $region22: #{forward.1} parent=11 // pred_check_branch
          %247 = sbr.rel (%p245) target = $region24
        $region23: #{forward.1} parent=11 // pred_region
          %s249 = ssub.s32 512, 512
          %250 = vsyncadd [#allocation3], %s249
          %s251 = sshll.u32 [#allocation2], 4
          %s252 = int_to_ptr.vmem [resolvable:$true] %s251
          %257 = dma.hbm_to_vmem [thread:$0]  %s6, 512, %s252, [#allocation3], 128, 128, 8
        $region24: #{forward.1} parent=11 // pred_fallthru
          _
        // Predicated region
        $region25: #{forward.1} parent=11 // pred_check
          %p258 = pneg %p203
        $region26: #{forward.1} parent=11 // pred_check_branch
          %260 = sbr.rel (%p258) target = $region28
        $region27: #{forward.1} parent=11 // pred_region
          _
        $region28: #{forward.1} parent=11 // pred_fallthru
          _
      $region12: #{forward.1} parent=5 // pred_fallthru
        _
      %p261 = scmp.lt.s32.totalorder %s15, 4
      // Predicated region
      $region29: #{forward.1} parent=5 // pred_check
        %p262 = pneg %p261
      $region30: #{forward.1} parent=5 // pred_check_branch
        %264 = sbr.rel (%p262) target = $region32
      $region31: #{forward.1} parent=5 // pred_region
        // Predicated region
        $region33: #{forward.1} parent=31 // pred_check
          %p265 = pneg %p56
        $region34: #{forward.1} parent=31 // pred_check_branch
          %267 = sbr.rel (%p265) target = $region36
        $region35: #{forward.1} parent=31 // pred_region
          %p268 = scmp.lt.s32.totalorder %s15, 3
          %s269 = scalar_select %p268, %s15, 3
          %s270 = smul.addr %s269, 4
          %s271 = smul.addr %s270, 8
          %s272 = scalar_lea.vmem %s1, %s271
        $region36: #{forward.1} parent=31 // pred_fallthru
          _
        // Predicated region
        $region37: #{forward.1} parent=31 // pred_check
          %p273 = pneg %p82
        $region38: #{forward.1} parent=31 // pred_check_branch
          %275 = sbr.rel (%p273) target = $region40
        $region39: #{forward.1} parent=31 // pred_region
          %p276 = scmp.lt.s32.totalorder %s15, 3
          %s277 = scalar_select %p276, %s15, 3
          %s278 = smul.addr %s277, 4
          %s279 = smul.addr %s278, 8
          %s280 = scalar_lea.vmem %s2, %s279
        $region40: #{forward.1} parent=31 // pred_fallthru
          _
        // Predicated region
        $region41: #{forward.1} parent=31 // pred_check
          %p281 = pneg %p108
        $region42: #{forward.1} parent=31 // pred_check_branch
          %283 = sbr.rel (%p281) target = $region44
        $region43: #{forward.1} parent=31 // pred_region
          %p284 = scmp.lt.s32.totalorder %s15, 3
          %s285 = scalar_select %p284, %s15, 3
          %s286 = smul.addr %s285, 3
          %s287 = smul.addr %s286, 8
          %s288 = scalar_lea.vmem %s3, %s287
        $region44: #{forward.1} parent=31 // pred_fallthru
          _
        // Predicated region
        $region45: #{forward.1} parent=31 // pred_check
          %p289 = pneg %p134
        $region46: #{forward.1} parent=31 // pred_check_branch
          %291 = sbr.rel (%p289) target = $region48
        $region47: #{forward.1} parent=31 // pred_region
          %p292 = scmp.lt.s32.totalorder %s15, 3
          %s293 = scalar_select %p292, %s15, 3
          %s294 = smul.addr %s293, 3
          %s295 = smul.addr %s294, 8
          %s296 = scalar_lea.vmem %s4, %s295
        $region48: #{forward.1} parent=31 // pred_fallthru
          _
      $region32: #{forward.1} parent=5 // pred_fallthru
        _
      %p297 = scmp.le.s32.totalorder 1, %s15
      %p298 = scmp.lt.s32.totalorder %s15, 5
      %p299 = pnand %p297, %p298
      %p300 = pneg %p299
      // Predicated region
      $region49: #{forward.1} parent=5 // pred_check
        _
      $region50: #{forward.1} parent=5 // pred_check_branch
        %302 = sbr.rel (%p299) target = $region52
      $region51: #{forward.1} parent=5 // pred_region
        %s303 = ssub.s32 %s15, 1
        // Predicated region
        $region53: #{forward.1} parent=51 // pred_check
          %p304 = pneg %p182
        $region54: #{forward.1} parent=51 // pred_check_branch
          %306 = sbr.rel (%p304) target = $region56
        $region55: #{forward.1} parent=51 // pred_region
          %307 = dma.done [#allocation3], 512
        $region56: #{forward.1} parent=51 // pred_fallthru
          _
        %p308 = pneg %p36
        %p309 = pneg %p33
        %p310 = scmp.lt.s32.totalorder %s20, 3
        %s311 = scalar_select %p310, %s20, 3
        %s312 = smul.addr %s311, 4
        %s313 = smul.addr %s312, 8
        %s314 = scalar_lea.vmem %s1, %s313
        %p315 = pneg %p62
        %p316 = pneg %p59
        %p317 = scmp.lt.s32.totalorder %s20, 3
        %s318 = scalar_select %p317, %s20, 3
        %s319 = smul.addr %s318, 4
        %s320 = smul.addr %s319, 8
        %s321 = scalar_lea.vmem %s2, %s320
        %p322 = pneg %p88
        %p323 = pneg %p85
        %p324 = scmp.lt.s32.totalorder %s20, 3
        %s325 = scalar_select %p324, %s20, 3
        %s326 = smul.addr %s325, 3
        %s327 = smul.addr %s326, 8
        %s328 = scalar_lea.vmem %s3, %s327
        %p329 = pneg %p114
        %p330 = pneg %p111
        %p331 = scmp.lt.s32.totalorder %s20, 3
        %s332 = scalar_select %p331, %s20, 3
        %s333 = smul.addr %s332, 3
        %s334 = smul.addr %s333, 8
        %s335 = scalar_lea.vmem %s4, %s334
        %p336 = pneg %p140
        %p337 = pneg %p137
        %p338 = pneg %p161
        %p339 = pneg %p158
        %p340 = pneg %p182
        %p341 = pneg %p179
        %p342 = pneg %p203
        %p343 = pneg %p200
        %p344 = pneg %p224
        %p345 = pneg %p221
        %p346 = scmp.lt.s32.totalorder %s20, 3
        %s347 = scalar_select %p346, %s20, 3
        %s348 = smul.addr %s347, 4
        %s349 = smul.addr %s348, 8
        %s350 = scalar_lea.vmem %s1, %s349
        %p351 = scmp.lt.s32.totalorder %s20, 3
        %s352 = scalar_select %p351, %s20, 3
        %s353 = smul.addr %s352, 4
        %s354 = smul.addr %s353, 8
        %s355 = scalar_lea.vmem %s2, %s354
        %p356 = scmp.lt.s32.totalorder %s20, 3
        %s357 = scalar_select %p356, %s20, 3
        %s358 = smul.addr %s357, 3
        %s359 = smul.addr %s358, 8
        %s360 = scalar_lea.vmem %s3, %s359
        %p361 = scmp.lt.s32.totalorder %s20, 3
        %s362 = scalar_select %p361, %s20, 3
        %s363 = smul.addr %s362, 3
        %s364 = smul.addr %s363, 8
        %s365 = scalar_lea.vmem %s4, %s364
        %p366 = scmp.eq.s32.totalorder %s20, 0
        // Predicated region
        $region57: #{forward.1} parent=51 // pred_check
          %p367 = pneg %p366
        $region58: #{forward.1} parent=51 // pred_check_branch
          %369 = sbr.rel (%p367) target = $region60
        $region59: #{forward.1} parent=51 // pred_region
          %v370 = vld [vmem:[%s0] sm:$0xff]
          %v371 = vld [vmem:[%s0 + $0x8] sm:$0xff]
          %v372 = vld [vmem:[%s0 + $0x10] sm:$0xff]
          %vm373 = vcmask 261120
          %374 = vst.msk [vmem:[%s8] sm:$0xff] %vm373, %v370
          %375 = vst.msk [vmem:[%s8 + $0x8] sm:$0xff] %vm373, %v371
          %376 = vst.msk [vmem:[%s8 + $0x10] sm:$0xff] %vm373, %v372
        $region60: #{forward.1} parent=51 // pred_fallthru
          _
        %v377 = vld [vmem:[%s8] sm:$0xff]
        %v378 = vld [vmem:[%s8 + $0x8] sm:$0xff]
        %v379 = vld [vmem:[%s8 + $0x10] sm:$0xff]
        %v380 = vld [vmem:[%s350] sm:$0xff]
        %v381 = vld [vmem:[%s350 + $0x8] sm:$0xff]
        %v382 = vld [vmem:[%s350 + $0x10] sm:$0xff]
        %v383 = vld [vmem:[%s350 + $0x18] sm:$0xff]
        %vm384 = vcmask 195584
        %v386 = vsel %vm384, %v380, 0
        %v389 = vsel %vm384, %v381, 0
        %v392 = vsel %vm384, %v382, 0
        %v395 = vsel %vm384, %v383, 0
        %397 = vmatprep.subr.mxu0 0.0
        %v398 = vand.u32 %v377, 4294901760
        %399 = vmatpush1.msra.mxu0 %v398
        %400 = vmatprep.subr.mxu0 0.0
        %v401 = vand.u32 %v378, 4294901760
        %402 = vmatpush1.msra.mxu0 %v401
        %403 = vmatprep.subr.mxu0 0.0
        %v404 = vand.u32 %v379, 4294901760
        %405 = vmatpush1.msra.mxu0 %v404
        %406 = vmatprep.subr.mxu0 0.0
        %407 = vmatpush1.msra.mxu0 0.0
        %408 = vmatprep.subr.mxu0 0.0
        %409 = vmatpush1.msra.mxu0 0.0
        %410 = vmatprep.subr.mxu0 0.0
        %411 = vmatpush1.msra.mxu0 0.0
        %412 = vmatprep.subr.mxu0 0.0
        %413 = vmatpush1.msra.mxu0 0.0
        %414 = vmatprep.subr.mxu0 0.0
        %415 = vmatpush1.msra.mxu0 0.0
        %416 = vmatprep.subr.mxu0 0.0
        %417 = vmatpush1.msra.mxu0 0.0
        %418 = vmatprep.subr.mxu0 0.0
        %419 = vmatpush1.msra.mxu0 0.0
        %420 = vmatprep.subr.mxu0 0.0
        %421 = vmatpush1.msra.mxu0 0.0
        %422 = vmatprep.subr.mxu0 0.0
        %423 = vmatpush1.msra.mxu0 0.0
        %424 = vmatprep.subr.mxu0 0.0
        %425 = vmatpush1.msra.mxu0 0.0
        %426 = vmatprep.subr.mxu0 0.0
        %427 = vmatpush1.msra.mxu0 0.0
        %428 = vmatprep.subr.mxu0 0.0
        %429 = vmatpush1.msra.mxu0 0.0
        %430 = vmatprep.subr.mxu0 0.0
        %431 = vmatpush1.msra.mxu0 0.0
        %432 = vmatprep.subr.mxu0 0.0
        %433 = vmatpush1.msra.mxu0 0.0
        %434 = vmatprep.subr.mxu0 0.0
        %435 = vmatpush1.msra.mxu0 0.0
        %436 = vmatprep.subr.mxu0 0.0
        %437 = vmatpush1.msra.mxu0 0.0
        %438 = vmatprep.subr.mxu0 0.0
        %439 = vmatpush1.msra.mxu0 0.0
        %440 = vmatprep.subr.mxu0 0.0
        %441 = vmatpush1.msra.mxu0 0.0
        %442 = vmatprep.subr.mxu0 0.0
        %443 = vmatpush1.msra.mxu0 0.0
        %444 = vmatprep.subr.mxu0 0.0
        %445 = vmatpush1.msra.mxu0 0.0
        %446 = vmatprep.subr.mxu0 0.0
        %447 = vmatpush1.msra.mxu0 0.0
        %448 = vmatprep.subr.mxu0 0.0
        %449 = vmatpush1.msra.mxu0 0.0
        %450 = vmatprep.subr.mxu0 0.0
        %451 = vmatpush1.msra.mxu0 0.0
        %452 = vmatprep.subr.mxu0 0.0
        %453 = vmatpush1.msra.mxu0 0.0
        %454 = vmatprep.subr.mxu0 0.0
        %455 = vmatpush1.msra.mxu0 0.0
        %456 = vmatprep.subr.mxu0 0.0
        %457 = vmatpush1.msra.mxu0 0.0
        %458 = vmatprep.subr.mxu0 0.0
        %459 = vmatpush1.msra.mxu0 0.0
        %460 = vmatprep.subr.mxu0 0.0
        %461 = vmatpush1.msra.mxu0 0.0
        %462 = vmatprep.subr.mxu0 0.0
        %463 = vmatpush1.msra.mxu0 0.0
        %464 = vmatprep.mubr.f32.mxu0 0.0
        %v465 = vand.u32 %v386, 4294901760
        %v466 = vsub.f32 %v386, %v465
        %v467 = vand.u32 %v466, 4294901760
        %v468 = vsub.f32 %v466, %v467
        %v469 = vand.u32 %v468, 4294901760
        %470 = vmatmul.mubr.f32.gmra.mrb[0].mxu0 %v469
        %v471 = vpop.f32.mrb[0].mxu0
        %v472 = vadd.f32 0.0, %v471
        %v473 = vpop.f32.mrb[0].mxu0
        %474 = vmatprep.mubr.f32.mxu0 0.0
        %v475 = vand.u32 %v389, 4294901760
        %v476 = vsub.f32 %v389, %v475
        %v477 = vand.u32 %v476, 4294901760
        %v478 = vsub.f32 %v476, %v477
        %v479 = vand.u32 %v478, 4294901760
        %480 = vmatmul.mubr.f32.gmra.mrb[0].mxu0 %v479
        %v481 = vpop.f32.mrb[0].mxu0
        %v482 = vadd.f32 0.0, %v481
        %v483 = vpop.f32.mrb[0].mxu0
        %484 = vmatprep.mubr.f32.mxu0 0.0
        %v485 = vand.u32 %v392, 4294901760
        %v486 = vsub.f32 %v392, %v485
        %v487 = vand.u32 %v486, 4294901760
        %v488 = vsub.f32 %v486, %v487
        %v489 = vand.u32 %v488, 4294901760
        %490 = vmatmul.mubr.f32.gmra.mrb[0].mxu0 %v489
        %v491 = vpop.f32.mrb[0].mxu0
        %v492 = vadd.f32 0.0, %v491
        %v493 = vpop.f32.mrb[0].mxu0
        %494 = vmatprep.mubr.f32.mxu0 0.0
        %v495 = vand.u32 %v395, 4294901760
        %v496 = vsub.f32 %v395, %v495
        %v497 = vand.u32 %v496, 4294901760
        %v498 = vsub.f32 %v496, %v497
        %v499 = vand.u32 %v498, 4294901760
        %500 = vmatmul.mubr.f32.gmra.mrb[0].mxu0 %v499
        %v501 = vpop.f32.mrb[0].mxu0
        %v502 = vadd.f32 0.0, %v501
        %v503 = vpop.f32.mrb[0].mxu0
        %504 = vdwg.mxu0
        %505 = vmatprep.subr.mxu0 0.0
        %v506 = vand.u32 %v377, 4294901760
        %v507 = vsub.f32 %v377, %v506
        %v508 = vand.u32 %v507, 4294901760
        %v509 = vsub.f32 %v507, %v508
        %v510 = vand.u32 %v509, 4294901760
        %511 = vmatpush1.msra.mxu0 %v510
        %512 = vmatprep.subr.mxu0 0.0
        %v513 = vand.u32 %v378, 4294901760
        %v514 = vsub.f32 %v378, %v513
        %v515 = vand.u32 %v514, 4294901760
        %v516 = vsub.f32 %v514, %v515
        %v517 = vand.u32 %v516, 4294901760
        %518 = vmatpush1.msra.mxu0 %v517
        %519 = vmatprep.subr.mxu0 0.0
        %v520 = vand.u32 %v379, 4294901760
        %v521 = vsub.f32 %v379, %v520
        %v522 = vand.u32 %v521, 4294901760
        %v523 = vsub.f32 %v521, %v522
        %v524 = vand.u32 %v523, 4294901760
        %525 = vmatpush1.msra.mxu0 %v524
        %526 = vmatprep.subr.mxu0 0.0
        %527 = vmatpush1.msra.mxu0 0.0
        %528 = vmatprep.subr.mxu0 0.0
        %529 = vmatpush1.msra.mxu0 0.0
        %530 = vmatprep.subr.mxu0 0.0
        %531 = vmatpush1.msra.mxu0 0.0
        %532 = vmatprep.subr.mxu0 0.0
        %533 = vmatpush1.msra.mxu0 0.0
        %534 = vmatprep.subr.mxu0 0.0
        %535 = vmatpush1.msra.mxu0 0.0
        %536 = vmatprep.subr.mxu0 0.0
        %537 = vmatpush1.msra.mxu0 0.0
        %538 = vmatprep.subr.mxu0 0.0
        %539 = vmatpush1.msra.mxu0 0.0
        %540 = vmatprep.subr.mxu0 0.0
        %541 = vmatpush1.msra.mxu0 0.0
        %542 = vmatprep.subr.mxu0 0.0
        %543 = vmatpush1.msra.mxu0 0.0
        %544 = vmatprep.subr.mxu0 0.0
        %545 = vmatpush1.msra.mxu0 0.0
        %546 = vmatprep.subr.mxu0 0.0
        %547 = vmatpush1.msra.mxu0 0.0
        %548 = vmatprep.subr.mxu0 0.0
        %549 = vmatpush1.msra.mxu0 0.0
        %550 = vmatprep.subr.mxu0 0.0
        %551 = vmatpush1.msra.mxu0 0.0
        %552 = vmatprep.subr.mxu0 0.0
        %553 = vmatpush1.msra.mxu0 0.0
        %554 = vmatprep.subr.mxu0 0.0
        %555 = vmatpush1.msra.mxu0 0.0
        %556 = vmatprep.subr.mxu0 0.0
        %557 = vmatpush1.msra.mxu0 0.0
        %558 = vmatprep.subr.mxu0 0.0
        %559 = vmatpush1.msra.mxu0 0.0
        %560 = vmatprep.subr.mxu0 0.0
        %561 = vmatpush1.msra.mxu0 0.0
        %562 = vmatprep.subr.mxu0 0.0
        %563 = vmatpush1.msra.mxu0 0.0
        %564 = vmatprep.subr.mxu0 0.0
        %565 = vmatpush1.msra.mxu0 0.0
        %566 = vmatprep.subr.mxu0 0.0
        %567 = vmatpush1.msra.mxu0 0.0
        %568 = vmatprep.subr.mxu0 0.0
        %569 = vmatpush1.msra.mxu0 0.0
        %570 = vmatprep.subr.mxu0 0.0
        %571 = vmatpush1.msra.mxu0 0.0
        %572 = vmatprep.subr.mxu0 0.0
        %573 = vmatpush1.msra.mxu0 0.0
        %574 = vmatprep.subr.mxu0 0.0
        %575 = vmatpush1.msra.mxu0 0.0
        %576 = vmatprep.subr.mxu0 0.0
        %577 = vmatpush1.msra.mxu0 0.0
        %578 = vmatprep.subr.mxu0 0.0
        %579 = vmatpush1.msra.mxu0 0.0
        %580 = vmatprep.subr.mxu0 0.0
        %581 = vmatpush1.msra.mxu0 0.0
        %582 = vmatprep.subr.mxu0 0.0
        %583 = vmatpush1.msra.mxu0 0.0
        %584 = vmatprep.mubr.f32.mxu0 0.0
        %v585 = vand.u32 %v386, 4294901760
        %586 = vmatmul.mubr.f32.gmra.mrb[0].mxu0 %v585
        %v587 = vpop.f32.mrb[0].mxu0
        %v588 = vadd.f32 %v472, %v587
        %v589 = vpop.f32.mrb[0].mxu0
        %590 = vmatprep.mubr.f32.mxu0 0.0
        %v591 = vand.u32 %v389, 4294901760
        %592 = vmatmul.mubr.f32.gmra.mrb[0].mxu0 %v591
        %v593 = vpop.f32.mrb[0].mxu0
        %v594 = vadd.f32 %v482, %v593
        %v595 = vpop.f32.mrb[0].mxu0
        %596 = vmatprep.mubr.f32.mxu0 0.0
        %v597 = vand.u32 %v392, 4294901760
        %598 = vmatmul.mubr.f32.gmra.mrb[0].mxu0 %v597
        %v599 = vpop.f32.mrb[0].mxu0
        %v600 = vadd.f32 %v492, %v599
        %v601 = vpop.f32.mrb[0].mxu0
        %602 = vmatprep.mubr.f32.mxu0 0.0
        %v603 = vand.u32 %v395, 4294901760
        %604 = vmatmul.mubr.f32.gmra.mrb[0].mxu0 %v603
        %v605 = vpop.f32.mrb[0].mxu0
        %v606 = vadd.f32 %v502, %v605
        %v607 = vpop.f32.mrb[0].mxu0
        %608 = vdwg.mxu0
        %609 = vmatprep.subr.mxu0 0.0
        %v610 = vand.u32 %v377, 4294901760
        %v611 = vsub.f32 %v377, %v610
        %612 = vmatpush1.msra.mxu0 %v611
        %613 = vmatprep.subr.mxu0 0.0
        %v614 = vand.u32 %v378, 4294901760
        %v615 = vsub.f32 %v378, %v614
        %616 = vmatpush1.msra.mxu0 %v615
        %617 = vmatprep.subr.mxu0 0.0
        %v618 = vand.u32 %v379, 4294901760
        %v619 = vsub.f32 %v379, %v618
        %620 = vmatpush1.msra.mxu0 %v619
        %621 = vmatprep.subr.mxu0 0.0
        %622 = vmatpush1.msra.mxu0 0.0
        %623 = vmatprep.subr.mxu0 0.0
        %624 = vmatpush1.msra.mxu0 0.0
        %625 = vmatprep.subr.mxu0 0.0
        %626 = vmatpush1.msra.mxu0 0.0
        %627 = vmatprep.subr.mxu0 0.0
        %628 = vmatpush1.msra.mxu0 0.0
        %629 = vmatprep.subr.mxu0 0.0
        %630 = vmatpush1.msra.mxu0 0.0
        %631 = vmatprep.subr.mxu0 0.0
        %632 = vmatpush1.msra.mxu0 0.0
        %633 = vmatprep.subr.mxu0 0.0
        %634 = vmatpush1.msra.mxu0 0.0
        %635 = vmatprep.subr.mxu0 0.0
        %636 = vmatpush1.msra.mxu0 0.0
        %637 = vmatprep.subr.mxu0 0.0
        %638 = vmatpush1.msra.mxu0 0.0
        %639 = vmatprep.subr.mxu0 0.0
        %640 = vmatpush1.msra.mxu0 0.0
        %641 = vmatprep.subr.mxu0 0.0
        %642 = vmatpush1.msra.mxu0 0.0
        %643 = vmatprep.subr.mxu0 0.0
        %644 = vmatpush1.msra.mxu0 0.0
        %645 = vmatprep.subr.mxu0 0.0
        %646 = vmatpush1.msra.mxu0 0.0
        %647 = vmatprep.subr.mxu0 0.0
        %648 = vmatpush1.msra.mxu0 0.0
        %649 = vmatprep.subr.mxu0 0.0
        %650 = vmatpush1.msra.mxu0 0.0
        %651 = vmatprep.subr.mxu0 0.0
        %652 = vmatpush1.msra.mxu0 0.0
        %653 = vmatprep.subr.mxu0 0.0
        %654 = vmatpush1.msra.mxu0 0.0
        %655 = vmatprep.subr.mxu0 0.0
        %656 = vmatpush1.msra.mxu0 0.0
        %657 = vmatprep.subr.mxu0 0.0
        %658 = vmatpush1.msra.mxu0 0.0
        %659 = vmatprep.subr.mxu0 0.0
        %660 = vmatpush1.msra.mxu0 0.0
        %661 = vmatprep.subr.mxu0 0.0
        %662 = vmatpush1.msra.mxu0 0.0
        %663 = vmatprep.subr.mxu0 0.0
        %664 = vmatpush1.msra.mxu0 0.0
        %665 = vmatprep.subr.mxu0 0.0
        %666 = vmatpush1.msra.mxu0 0.0
        %667 = vmatprep.subr.mxu0 0.0
        %668 = vmatpush1.msra.mxu0 0.0
        %669 = vmatprep.subr.mxu0 0.0
        %670 = vmatpush1.msra.mxu0 0.0
        %671 = vmatprep.subr.mxu0 0.0
        %672 = vmatpush1.msra.mxu0 0.0
        %673 = vmatprep.subr.mxu0 0.0
        %674 = vmatpush1.msra.mxu0 0.0
        %675 = vmatprep.subr.mxu0 0.0
        %676 = vmatpush1.msra.mxu0 0.0
        %677 = vmatprep.subr.mxu0 0.0
        %678 = vmatpush1.msra.mxu0 0.0
        %679 = vmatprep.mubr.f32.mxu0 0.0
        %v680 = vand.u32 %v386, 4294901760
        %v681 = vsub.f32 %v386, %v680
        %682 = vmatmul.mubr.f32.gmra.mrb[0].mxu0 %v681
        %v683 = vpop.f32.mrb[0].mxu0
        %v684 = vadd.f32 %v588, %v683
        %v685 = vpop.f32.mrb[0].mxu0
        %686 = vmatprep.mubr.f32.mxu0 0.0
        %v687 = vand.u32 %v389, 4294901760
        %v688 = vsub.f32 %v389, %v687
        %689 = vmatmul.mubr.f32.gmra.mrb[0].mxu0 %v688
        %v690 = vpop.f32.mrb[0].mxu0
        %v691 = vadd.f32 %v594, %v690
        %v692 = vpop.f32.mrb[0].mxu0
        %693 = vmatprep.mubr.f32.mxu0 0.0
        %v694 = vand.u32 %v392, 4294901760
        %v695 = vsub.f32 %v392, %v694
        %696 = vmatmul.mubr.f32.gmra.mrb[0].mxu0 %v695
        %v697 = vpop.f32.mrb[0].mxu0
        %v698 = vadd.f32 %v600, %v697
        %v699 = vpop.f32.mrb[0].mxu0
        %700 = vmatprep.mubr.f32.mxu0 0.0
        %v701 = vand.u32 %v395, 4294901760
        %v702 = vsub.f32 %v395, %v701
        %703 = vmatmul.mubr.f32.gmra.mrb[0].mxu0 %v702
        %v704 = vpop.f32.mrb[0].mxu0
        %v705 = vadd.f32 %v606, %v704
        %v706 = vpop.f32.mrb[0].mxu0
        %707 = vdwg.mxu0
        %708 = vmatprep.subr.mxu0 0.0
        %v709 = vand.u32 %v377, 4294901760
        %710 = vmatpush1.msra.mxu0 %v709
        %711 = vmatprep.subr.mxu0 0.0
        %v712 = vand.u32 %v378, 4294901760
        %713 = vmatpush1.msra.mxu0 %v712
        %714 = vmatprep.subr.mxu0 0.0
        %v715 = vand.u32 %v379, 4294901760
        %716 = vmatpush1.msra.mxu0 %v715
        %717 = vmatprep.subr.mxu0 0.0
        %718 = vmatpush1.msra.mxu0 0.0
        %719 = vmatprep.subr.mxu0 0.0
        %720 = vmatpush1.msra.mxu0 0.0
        %721 = vmatprep.subr.mxu0 0.0
        %722 = vmatpush1.msra.mxu0 0.0
        %723 = vmatprep.subr.mxu0 0.0
        %724 = vmatpush1.msra.mxu0 0.0
        %725 = vmatprep.subr.mxu0 0.0
        %726 = vmatpush1.msra.mxu0 0.0
        %727 = vmatprep.subr.mxu0 0.0
        %728 = vmatpush1.msra.mxu0 0.0
        %729 = vmatprep.subr.mxu0 0.0
        %730 = vmatpush1.msra.mxu0 0.0
        %731 = vmatprep.subr.mxu0 0.0
        %732 = vmatpush1.msra.mxu0 0.0
        %733 = vmatprep.subr.mxu0 0.0
        %734 = vmatpush1.msra.mxu0 0.0
        %735 = vmatprep.subr.mxu0 0.0
        %736 = vmatpush1.msra.mxu0 0.0
        %737 = vmatprep.subr.mxu0 0.0
        %738 = vmatpush1.msra.mxu0 0.0
        %739 = vmatprep.subr.mxu0 0.0
        %740 = vmatpush1.msra.mxu0 0.0
        %741 = vmatprep.subr.mxu0 0.0
        %742 = vmatpush1.msra.mxu0 0.0
        %743 = vmatprep.subr.mxu0 0.0
        %744 = vmatpush1.msra.mxu0 0.0
        %745 = vmatprep.subr.mxu0 0.0
        %746 = vmatpush1.msra.mxu0 0.0
        %747 = vmatprep.subr.mxu0 0.0
        %748 = vmatpush1.msra.mxu0 0.0
        %749 = vmatprep.subr.mxu0 0.0
        %750 = vmatpush1.msra.mxu0 0.0
        %751 = vmatprep.subr.mxu0 0.0
        %752 = vmatpush1.msra.mxu0 0.0
        %753 = vmatprep.subr.mxu0 0.0
        %754 = vmatpush1.msra.mxu0 0.0
        %755 = vmatprep.subr.mxu0 0.0
        %756 = vmatpush1.msra.mxu0 0.0
        %757 = vmatprep.subr.mxu0 0.0
        %758 = vmatpush1.msra.mxu0 0.0
        %759 = vmatprep.subr.mxu0 0.0
        %760 = vmatpush1.msra.mxu0 0.0
        %761 = vmatprep.subr.mxu0 0.0
        %762 = vmatpush1.msra.mxu0 0.0
        %763 = vmatprep.subr.mxu0 0.0
        %764 = vmatpush1.msra.mxu0 0.0
        %765 = vmatprep.subr.mxu0 0.0
        %766 = vmatpush1.msra.mxu0 0.0
        %767 = vmatprep.subr.mxu0 0.0
        %768 = vmatpush1.msra.mxu0 0.0
        %769 = vmatprep.subr.mxu0 0.0
        %770 = vmatpush1.msra.mxu0 0.0
        %771 = vmatprep.subr.mxu0 0.0
        %772 = vmatpush1.msra.mxu0 0.0
        %773 = vmatprep.subr.mxu0 0.0
        %774 = vmatpush1.msra.mxu0 0.0
        %775 = vmatprep.mubr.f32.mxu0 0.0
        %v776 = vand.u32 %v386, 4294901760
        %v777 = vsub.f32 %v386, %v776
        %v778 = vand.u32 %v777, 4294901760
        %779 = vmatmul.mubr.f32.gmra.mrb[0].mxu0 %v778
        %v780 = vpop.f32.mrb[0].mxu0
        %v781 = vadd.f32 %v684, %v780
        %v782 = vpop.f32.mrb[0].mxu0
        %783 = vmatprep.mubr.f32.mxu0 0.0
        %v784 = vand.u32 %v389, 4294901760
        %v785 = vsub.f32 %v389, %v784
        %v786 = vand.u32 %v785, 4294901760
        %787 = vmatmul.mubr.f32.gmra.mrb[0].mxu0 %v786
        %v788 = vpop.f32.mrb[0].mxu0
        %v789 = vadd.f32 %v691, %v788
        %v790 = vpop.f32.mrb[0].mxu0
        %791 = vmatprep.mubr.f32.mxu0 0.0
        %v792 = vand.u32 %v392, 4294901760
        %v793 = vsub.f32 %v392, %v792
        %v794 = vand.u32 %v793, 4294901760
        %795 = vmatmul.mubr.f32.gmra.mrb[0].mxu0 %v794
        %v796 = vpop.f32.mrb[0].mxu0
        %v797 = vadd.f32 %v698, %v796
        %v798 = vpop.f32.mrb[0].mxu0
        %799 = vmatprep.mubr.f32.mxu0 0.0
        %v800 = vand.u32 %v395, 4294901760
        %v801 = vsub.f32 %v395, %v800
        %v802 = vand.u32 %v801, 4294901760
        %803 = vmatmul.mubr.f32.gmra.mrb[0].mxu0 %v802
        %v804 = vpop.f32.mrb[0].mxu0
        %v805 = vadd.f32 %v705, %v804
        %v806 = vpop.f32.mrb[0].mxu0
        %807 = vdwg.mxu0
        %808 = vmatprep.subr.mxu0 0.0
        %v809 = vand.u32 %v377, 4294901760
        %v810 = vsub.f32 %v377, %v809
        %v811 = vand.u32 %v810, 4294901760
        %812 = vmatpush1.msra.mxu0 %v811
        %813 = vmatprep.subr.mxu0 0.0
        %v814 = vand.u32 %v378, 4294901760
        %v815 = vsub.f32 %v378, %v814
        %v816 = vand.u32 %v815, 4294901760
        %817 = vmatpush1.msra.mxu0 %v816
        %818 = vmatprep.subr.mxu0 0.0
        %v819 = vand.u32 %v379, 4294901760
        %v820 = vsub.f32 %v379, %v819
        %v821 = vand.u32 %v820, 4294901760
        %822 = vmatpush1.msra.mxu0 %v821
        %823 = vmatprep.subr.mxu0 0.0
        %824 = vmatpush1.msra.mxu0 0.0
        %825 = vmatprep.subr.mxu0 0.0
        %826 = vmatpush1.msra.mxu0 0.0
        %827 = vmatprep.subr.mxu0 0.0
        %828 = vmatpush1.msra.mxu0 0.0
        %829 = vmatprep.subr.mxu0 0.0
        %830 = vmatpush1.msra.mxu0 0.0
        %831 = vmatprep.subr.mxu0 0.0
        %832 = vmatpush1.msra.mxu0 0.0
        %833 = vmatprep.subr.mxu0 0.0
        %834 = vmatpush1.msra.mxu0 0.0
        %835 = vmatprep.subr.mxu0 0.0
        %836 = vmatpush1.msra.mxu0 0.0
        %837 = vmatprep.subr.mxu0 0.0
        %838 = vmatpush1.msra.mxu0 0.0
        %839 = vmatprep.subr.mxu0 0.0
        %840 = vmatpush1.msra.mxu0 0.0
        %841 = vmatprep.subr.mxu0 0.0
        %842 = vmatpush1.msra.mxu0 0.0
        %843 = vmatprep.subr.mxu0 0.0
        %844 = vmatpush1.msra.mxu0 0.0
        %845 = vmatprep.subr.mxu0 0.0
        %846 = vmatpush1.msra.mxu0 0.0
        %847 = vmatprep.subr.mxu0 0.0
        %848 = vmatpush1.msra.mxu0 0.0
        %849 = vmatprep.subr.mxu0 0.0
        %850 = vmatpush1.msra.mxu0 0.0
        %851 = vmatprep.subr.mxu0 0.0
        %852 = vmatpush1.msra.mxu0 0.0
        %853 = vmatprep.subr.mxu0 0.0
        %854 = vmatpush1.msra.mxu0 0.0
        %855 = vmatprep.subr.mxu0 0.0
        %856 = vmatpush1.msra.mxu0 0.0
        %857 = vmatprep.subr.mxu0 0.0
        %858 = vmatpush1.msra.mxu0 0.0
        %859 = vmatprep.subr.mxu0 0.0
        %860 = vmatpush1.msra.mxu0 0.0
        %861 = vmatprep.subr.mxu0 0.0
        %862 = vmatpush1.msra.mxu0 0.0
        %863 = vmatprep.subr.mxu0 0.0
        %864 = vmatpush1.msra.mxu0 0.0
        %865 = vmatprep.subr.mxu0 0.0
        %866 = vmatpush1.msra.mxu0 0.0
        %867 = vmatprep.subr.mxu0 0.0
        %868 = vmatpush1.msra.mxu0 0.0
        %869 = vmatprep.subr.mxu0 0.0
        %870 = vmatpush1.msra.mxu0 0.0
        %871 = vmatprep.subr.mxu0 0.0
        %872 = vmatpush1.msra.mxu0 0.0
        %873 = vmatprep.subr.mxu0 0.0
        %874 = vmatpush1.msra.mxu0 0.0
        %875 = vmatprep.subr.mxu0 0.0
        %876 = vmatpush1.msra.mxu0 0.0
        %877 = vmatprep.subr.mxu0 0.0
        %878 = vmatpush1.msra.mxu0 0.0
        %879 = vmatprep.subr.mxu0 0.0
        %880 = vmatpush1.msra.mxu0 0.0
        %881 = vmatprep.mubr.f32.mxu0 0.0
        %v882 = vand.u32 %v386, 4294901760
        %883 = vmatmul.mubr.f32.gmra.mrb[0].mxu0 %v882
        %v884 = vpop.f32.mrb[0].mxu0
        %v885 = vadd.f32 %v781, %v884
        %v886 = vpop.f32.mrb[0].mxu0
        %887 = vmatprep.mubr.f32.mxu0 0.0
        %v888 = vand.u32 %v389, 4294901760
        %889 = vmatmul.mubr.f32.gmra.mrb[0].mxu0 %v888
        %v890 = vpop.f32.mrb[0].mxu0
        %v891 = vadd.f32 %v789, %v890
        %v892 = vpop.f32.mrb[0].mxu0
        %893 = vmatprep.mubr.f32.mxu0 0.0
        %v894 = vand.u32 %v392, 4294901760
        %895 = vmatmul.mubr.f32.gmra.mrb[0].mxu0 %v894
        %v896 = vpop.f32.mrb[0].mxu0
        %v897 = vadd.f32 %v797, %v896
        %v898 = vpop.f32.mrb[0].mxu0
        %899 = vmatprep.mubr.f32.mxu0 0.0
        %v900 = vand.u32 %v395, 4294901760
        %901 = vmatmul.mubr.f32.gmra.mrb[0].mxu0 %v900
        %v902 = vpop.f32.mrb[0].mxu0
        %v903 = vadd.f32 %v805, %v902
        %v904 = vpop.f32.mrb[0].mxu0
        %905 = vdwg.mxu0
        %906 = vmatprep.subr.mxu0 0.0
        %v907 = vand.u32 %v377, 4294901760
        %908 = vmatpush1.msra.mxu0 %v907
        %909 = vmatprep.subr.mxu0 0.0
        %v910 = vand.u32 %v378, 4294901760
        %911 = vmatpush1.msra.mxu0 %v910
        %912 = vmatprep.subr.mxu0 0.0
        %v913 = vand.u32 %v379, 4294901760
        %914 = vmatpush1.msra.mxu0 %v913
        %915 = vmatprep.subr.mxu0 0.0
        %916 = vmatpush1.msra.mxu0 0.0
        %917 = vmatprep.subr.mxu0 0.0
        %918 = vmatpush1.msra.mxu0 0.0
        %919 = vmatprep.subr.mxu0 0.0
        %920 = vmatpush1.msra.mxu0 0.0
        %921 = vmatprep.subr.mxu0 0.0
        %922 = vmatpush1.msra.mxu0 0.0
        %923 = vmatprep.subr.mxu0 0.0
        %924 = vmatpush1.msra.mxu0 0.0
        %925 = vmatprep.subr.mxu0 0.0
        %926 = vmatpush1.msra.mxu0 0.0
        %927 = vmatprep.subr.mxu0 0.0
        %928 = vmatpush1.msra.mxu0 0.0
        %929 = vmatprep.subr.mxu0 0.0
        %930 = vmatpush1.msra.mxu0 0.0
        %931 = vmatprep.subr.mxu0 0.0
        %932 = vmatpush1.msra.mxu0 0.0
        %933 = vmatprep.subr.mxu0 0.0
        %934 = vmatpush1.msra.mxu0 0.0
        %935 = vmatprep.subr.mxu0 0.0
        %936 = vmatpush1.msra.mxu0 0.0
        %937 = vmatprep.subr.mxu0 0.0
        %938 = vmatpush1.msra.mxu0 0.0
        %939 = vmatprep.subr.mxu0 0.0
        %940 = vmatpush1.msra.mxu0 0.0
        %941 = vmatprep.subr.mxu0 0.0
        %942 = vmatpush1.msra.mxu0 0.0
        %943 = vmatprep.subr.mxu0 0.0
        %944 = vmatpush1.msra.mxu0 0.0
        %945 = vmatprep.subr.mxu0 0.0
        %946 = vmatpush1.msra.mxu0 0.0
        %947 = vmatprep.subr.mxu0 0.0
        %948 = vmatpush1.msra.mxu0 0.0
        %949 = vmatprep.subr.mxu0 0.0
        %950 = vmatpush1.msra.mxu0 0.0
        %951 = vmatprep.subr.mxu0 0.0
        %952 = vmatpush1.msra.mxu0 0.0
        %953 = vmatprep.subr.mxu0 0.0
        %954 = vmatpush1.msra.mxu0 0.0
        %955 = vmatprep.subr.mxu0 0.0
        %956 = vmatpush1.msra.mxu0 0.0
        %957 = vmatprep.subr.mxu0 0.0
        %958 = vmatpush1.msra.mxu0 0.0
        %959 = vmatprep.subr.mxu0 0.0
        %960 = vmatpush1.msra.mxu0 0.0
        %961 = vmatprep.subr.mxu0 0.0
        %962 = vmatpush1.msra.mxu0 0.0
        %963 = vmatprep.subr.mxu0 0.0
        %964 = vmatpush1.msra.mxu0 0.0
        %965 = vmatprep.subr.mxu0 0.0
        %966 = vmatpush1.msra.mxu0 0.0
        %967 = vmatprep.subr.mxu0 0.0
        %968 = vmatpush1.msra.mxu0 0.0
        %969 = vmatprep.subr.mxu0 0.0
        %970 = vmatpush1.msra.mxu0 0.0
        %971 = vmatprep.subr.mxu0 0.0
        %972 = vmatpush1.msra.mxu0 0.0
        %973 = vmatprep.mubr.f32.mxu0 0.0
        %v974 = vand.u32 %v386, 4294901760
        %975 = vmatmul.mubr.f32.gmra.mrb[0].mxu0 %v974
        %v976 = vpop.f32.mrb[0].mxu0
        %v977 = vadd.f32 %v885, %v976
        %v978 = vpop.f32.mrb[0].mxu0
        %979 = vmatprep.mubr.f32.mxu0 0.0
        %v980 = vand.u32 %v389, 4294901760
        %981 = vmatmul.mubr.f32.gmra.mrb[0].mxu0 %v980
        %v982 = vpop.f32.mrb[0].mxu0
        %v983 = vadd.f32 %v891, %v982
        %v984 = vpop.f32.mrb[0].mxu0
        %985 = vmatprep.mubr.f32.mxu0 0.0
        %v986 = vand.u32 %v392, 4294901760
        %987 = vmatmul.mubr.f32.gmra.mrb[0].mxu0 %v986
        %v988 = vpop.f32.mrb[0].mxu0
        %v989 = vadd.f32 %v897, %v988
        %v990 = vpop.f32.mrb[0].mxu0
        %991 = vmatprep.mubr.f32.mxu0 0.0
        %v992 = vand.u32 %v395, 4294901760
        %993 = vmatmul.mubr.f32.gmra.mrb[0].mxu0 %v992
        %v994 = vpop.f32.mrb[0].mxu0
        %v995 = vadd.f32 %v903, %v994
        %v996 = vpop.f32.mrb[0].mxu0
        %997 = vdwg.mxu0
        %v998 = vld [vmem:[%s5] sm:$0xff]
        %v999 = vld [vmem:[%s5 + $0x8] sm:$0xff]
        %v1000 = vld [vmem:[%s5 + $0x10] sm:$0xff]
        %v1001 = vld [vmem:[%s5 + $0x18] sm:$0xff]
        %v1002 = vld [vmem:[%s7] sm:$0x1]
        %v1004 = vlaneseq
        %v1005 = vshrl.u32 %v1004, 7
        %v1006 = vsub.s32 0, %v1005
        %v1007 = vrot.slane %v1002, %v1006
        %vm1009 = vcmask 261120
        %v1011 = vsel %vm1009, %v977, 0
        %v1014 = vsel %vm1009, %v983, 0
        %v1017 = vsel %vm1009, %v989, 0
        %v1020 = vsel %vm1009, %v995, 0
        %1022 = vmatprep.subr.mxu0 0.0
        %v1023 = vand.u32 %v998, 4294901760
        %1024 = vmatpush1.msra.mxu0 %v1023
        %1025 = vmatprep.subr.mxu0 0.0
        %v1026 = vand.u32 %v999, 4294901760
        %1027 = vmatpush1.msra.mxu0 %v1026
        %1028 = vmatprep.subr.mxu0 0.0
        %v1029 = vand.u32 %v1000, 4294901760
        %1030 = vmatpush1.msra.mxu0 %v1029
        %1031 = vmatprep.subr.mxu0 0.0
        %v1032 = vand.u32 %v1001, 4294901760
        %1033 = vmatpush1.msra.mxu0 %v1032
        %1034 = vmatprep.subr.mxu0 0.0
        %1035 = vmatpush1.msra.mxu0 0.0
        %1036 = vmatprep.subr.mxu0 0.0
        %1037 = vmatpush1.msra.mxu0 0.0
        %1038 = vmatprep.subr.mxu0 0.0
        %1039 = vmatpush1.msra.mxu0 0.0
        %1040 = vmatprep.subr.mxu0 0.0
        %1041 = vmatpush1.msra.mxu0 0.0
        %1042 = vmatprep.subr.mxu0 0.0
        %1043 = vmatpush1.msra.mxu0 0.0
        %1044 = vmatprep.subr.mxu0 0.0
        %1045 = vmatpush1.msra.mxu0 0.0
        %1046 = vmatprep.subr.mxu0 0.0
        %1047 = vmatpush1.msra.mxu0 0.0
        %1048 = vmatprep.subr.mxu0 0.0
        %1049 = vmatpush1.msra.mxu0 0.0
        %1050 = vmatprep.subr.mxu0 0.0
        %1051 = vmatpush1.msra.mxu0 0.0
        %1052 = vmatprep.subr.mxu0 0.0
        %1053 = vmatpush1.msra.mxu0 0.0
        %1054 = vmatprep.subr.mxu0 0.0
        %1055 = vmatpush1.msra.mxu0 0.0
        %1056 = vmatprep.subr.mxu0 0.0
        %1057 = vmatpush1.msra.mxu0 0.0
        %1058 = vmatprep.subr.mxu0 0.0
        %1059 = vmatpush1.msra.mxu0 0.0
        %1060 = vmatprep.subr.mxu0 0.0
        %1061 = vmatpush1.msra.mxu0 0.0
        %1062 = vmatprep.subr.mxu0 0.0
        %1063 = vmatpush1.msra.mxu0 0.0
        %1064 = vmatprep.subr.mxu0 0.0
        %1065 = vmatpush1.msra.mxu0 0.0
        %1066 = vmatprep.subr.mxu0 0.0
        %1067 = vmatpush1.msra.mxu0 0.0
        %1068 = vmatprep.subr.mxu0 0.0
        %1069 = vmatpush1.msra.mxu0 0.0
        %1070 = vmatprep.subr.mxu0 0.0
        %1071 = vmatpush1.msra.mxu0 0.0
        %1072 = vmatprep.subr.mxu0 0.0
        %1073 = vmatpush1.msra.mxu0 0.0
        %1074 = vmatprep.subr.mxu0 0.0
        %1075 = vmatpush1.msra.mxu0 0.0
        %1076 = vmatprep.subr.mxu0 0.0
        %1077 = vmatpush1.msra.mxu0 0.0
        %1078 = vmatprep.subr.mxu0 0.0
        %1079 = vmatpush1.msra.mxu0 0.0
        %1080 = vmatprep.subr.mxu0 0.0
        %1081 = vmatpush1.msra.mxu0 0.0
        %1082 = vmatprep.subr.mxu0 0.0
        %1083 = vmatpush1.msra.mxu0 0.0
        %1084 = vmatprep.subr.mxu0 0.0
        %1085 = vmatpush1.msra.mxu0 0.0
        %1086 = vmatprep.subr.mxu0 0.0
        %1087 = vmatpush1.msra.mxu0 0.0
        %1088 = vmatprep.subr.mxu0 0.0
        %1089 = vmatpush1.msra.mxu0 0.0
        %1090 = vmatprep.mubr.f32.mxu0 0.0
        %v1091 = vand.u32 %v1011, 4294901760
        %v1092 = vsub.f32 %v1011, %v1091
        %v1093 = vand.u32 %v1092, 4294901760
        %v1094 = vsub.f32 %v1092, %v1093
        %v1095 = vand.u32 %v1094, 4294901760
        %1096 = vmatmul.mubr.f32.gmra.mrb[0].mxu0 %v1095
        %v1097 = vpop.f32.mrb[0].mxu0
        %v1098 = vadd.f32 %v1007, %v1097
        %v1099 = vpop.f32.mrb[0].mxu0
        %1100 = vmatprep.mubr.f32.mxu0 0.0
        %v1101 = vand.u32 %v1014, 4294901760
        %v1102 = vsub.f32 %v1014, %v1101
        %v1103 = vand.u32 %v1102, 4294901760
        %v1104 = vsub.f32 %v1102, %v1103
        %v1105 = vand.u32 %v1104, 4294901760
        %1106 = vmatmul.mubr.f32.gmra.mrb[0].mxu0 %v1105
        %v1107 = vpop.f32.mrb[0].mxu0
        %v1108 = vadd.f32 %v1007, %v1107
        %v1109 = vpop.f32.mrb[0].mxu0
        %1110 = vmatprep.mubr.f32.mxu0 0.0
        %v1111 = vand.u32 %v1017, 4294901760
        %v1112 = vsub.f32 %v1017, %v1111
        %v1113 = vand.u32 %v1112, 4294901760
        %v1114 = vsub.f32 %v1112, %v1113
        %v1115 = vand.u32 %v1114, 4294901760
        %1116 = vmatmul.mubr.f32.gmra.mrb[0].mxu0 %v1115
        %v1117 = vpop.f32.mrb[0].mxu0
        %v1118 = vadd.f32 %v1007, %v1117
        %v1119 = vpop.f32.mrb[0].mxu0
        %1120 = vmatprep.mubr.f32.mxu0 0.0
        %v1121 = vand.u32 %v1020, 4294901760
        %v1122 = vsub.f32 %v1020, %v1121
        %v1123 = vand.u32 %v1122, 4294901760
        %v1124 = vsub.f32 %v1122, %v1123
        %v1125 = vand.u32 %v1124, 4294901760
        %1126 = vmatmul.mubr.f32.gmra.mrb[0].mxu0 %v1125
        %v1127 = vpop.f32.mrb[0].mxu0
        %v1128 = vadd.f32 %v1007, %v1127
        %v1129 = vpop.f32.mrb[0].mxu0
        %1130 = vdwg.mxu0
        %1131 = vmatprep.subr.mxu0 0.0
        %v1132 = vand.u32 %v998, 4294901760
        %v1133 = vsub.f32 %v998, %v1132
        %v1134 = vand.u32 %v1133, 4294901760
        %v1135 = vsub.f32 %v1133, %v1134
        %v1136 = vand.u32 %v1135, 4294901760
        %1137 = vmatpush1.msra.mxu0 %v1136
        %1138 = vmatprep.subr.mxu0 0.0
        %v1139 = vand.u32 %v999, 4294901760
        %v1140 = vsub.f32 %v999, %v1139
        %v1141 = vand.u32 %v1140, 4294901760
        %v1142 = vsub.f32 %v1140, %v1141
        %v1143 = vand.u32 %v1142, 4294901760
        %1144 = vmatpush1.msra.mxu0 %v1143
        %1145 = vmatprep.subr.mxu0 0.0
        %v1146 = vand.u32 %v1000, 4294901760
        %v1147 = vsub.f32 %v1000, %v1146
        %v1148 = vand.u32 %v1147, 4294901760
        %v1149 = vsub.f32 %v1147, %v1148
        %v1150 = vand.u32 %v1149, 4294901760
        %1151 = vmatpush1.msra.mxu0 %v1150
        %1152 = vmatprep.subr.mxu0 0.0
        %v1153 = vand.u32 %v1001, 4294901760
        %v1154 = vsub.f32 %v1001, %v1153
        %v1155 = vand.u32 %v1154, 4294901760
        %v1156 = vsub.f32 %v1154, %v1155
        %v1157 = vand.u32 %v1156, 4294901760
        %1158 = vmatpush1.msra.mxu0 %v1157
        %1159 = vmatprep.subr.mxu0 0.0
        %1160 = vmatpush1.msra.mxu0 0.0
        %1161 = vmatprep.subr.mxu0 0.0
        %1162 = vmatpush1.msra.mxu0 0.0
        %1163 = vmatprep.subr.mxu0 0.0
        %1164 = vmatpush1.msra.mxu0 0.0
        %1165 = vmatprep.subr.mxu0 0.0
        %1166 = vmatpush1.msra.mxu0 0.0
        %1167 = vmatprep.subr.mxu0 0.0
        %1168 = vmatpush1.msra.mxu0 0.0
        %1169 = vmatprep.subr.mxu0 0.0
        %1170 = vmatpush1.msra.mxu0 0.0
        %1171 = vmatprep.subr.mxu0 0.0
        %1172 = vmatpush1.msra.mxu0 0.0
        %1173 = vmatprep.subr.mxu0 0.0
        %1174 = vmatpush1.msra.mxu0 0.0
        %1175 = vmatprep.subr.mxu0 0.0
        %1176 = vmatpush1.msra.mxu0 0.0
        %1177 = vmatprep.subr.mxu0 0.0
        %1178 = vmatpush1.msra.mxu0 0.0
        %1179 = vmatprep.subr.mxu0 0.0
        %1180 = vmatpush1.msra.mxu0 0.0
        %1181 = vmatprep.subr.mxu0 0.0
        %1182 = vmatpush1.msra.mxu0 0.0
        %1183 = vmatprep.subr.mxu0 0.0
        %1184 = vmatpush1.msra.mxu0 0.0
        %1185 = vmatprep.subr.mxu0 0.0
        %1186 = vmatpush1.msra.mxu0 0.0
        %1187 = vmatprep.subr.mxu0 0.0
        %1188 = vmatpush1.msra.mxu0 0.0
        %1189 = vmatprep.subr.mxu0 0.0
        %1190 = vmatpush1.msra.mxu0 0.0
        %1191 = vmatprep.subr.mxu0 0.0
        %1192 = vmatpush1.msra.mxu0 0.0
        %1193 = vmatprep.subr.mxu0 0.0
        %1194 = vmatpush1.msra.mxu0 0.0
        %1195 = vmatprep.subr.mxu0 0.0
        %1196 = vmatpush1.msra.mxu0 0.0
        %1197 = vmatprep.subr.mxu0 0.0
        %1198 = vmatpush1.msra.mxu0 0.0
        %1199 = vmatprep.subr.mxu0 0.0
        %1200 = vmatpush1.msra.mxu0 0.0
        %1201 = vmatprep.subr.mxu0 0.0
        %1202 = vmatpush1.msra.mxu0 0.0
        %1203 = vmatprep.subr.mxu0 0.0
        %1204 = vmatpush1.msra.mxu0 0.0
        %1205 = vmatprep.subr.mxu0 0.0
        %1206 = vmatpush1.msra.mxu0 0.0
        %1207 = vmatprep.subr.mxu0 0.0
        %1208 = vmatpush1.msra.mxu0 0.0
        %1209 = vmatprep.subr.mxu0 0.0
        %1210 = vmatpush1.msra.mxu0 0.0
        %1211 = vmatprep.subr.mxu0 0.0
        %1212 = vmatpush1.msra.mxu0 0.0
        %1213 = vmatprep.subr.mxu0 0.0
        %1214 = vmatpush1.msra.mxu0 0.0
        %1215 = vmatprep.mubr.f32.mxu0 0.0
        %v1216 = vand.u32 %v1011, 4294901760
        %1217 = vmatmul.mubr.f32.gmra.mrb[0].mxu0 %v1216
        %v1218 = vpop.f32.mrb[0].mxu0
        %v1219 = vadd.f32 %v1098, %v1218
        %v1220 = vpop.f32.mrb[0].mxu0
        %1221 = vmatprep.mubr.f32.mxu0 0.0
        %v1222 = vand.u32 %v1014, 4294901760
        %1223 = vmatmul.mubr.f32.gmra.mrb[0].mxu0 %v1222
        %v1224 = vpop.f32.mrb[0].mxu0
        %v1225 = vadd.f32 %v1108, %v1224
        %v1226 = vpop.f32.mrb[0].mxu0
        %1227 = vmatprep.mubr.f32.mxu0 0.0
        %v1228 = vand.u32 %v1017, 4294901760
        %1229 = vmatmul.mubr.f32.gmra.mrb[0].mxu0 %v1228
        %v1230 = vpop.f32.mrb[0].mxu0
        %v1231 = vadd.f32 %v1118, %v1230
        %v1232 = vpop.f32.mrb[0].mxu0
        %1233 = vmatprep.mubr.f32.mxu0 0.0
        %v1234 = vand.u32 %v1020, 4294901760
        %1235 = vmatmul.mubr.f32.gmra.mrb[0].mxu0 %v1234
        %v1236 = vpop.f32.mrb[0].mxu0
        %v1237 = vadd.f32 %v1128, %v1236
        %v1238 = vpop.f32.mrb[0].mxu0
        %1239 = vdwg.mxu0
        %1240 = vmatprep.subr.mxu0 0.0
        %v1241 = vand.u32 %v998, 4294901760
        %v1242 = vsub.f32 %v998, %v1241
        %1243 = vmatpush1.msra.mxu0 %v1242
        %1244 = vmatprep.subr.mxu0 0.0
        %v1245 = vand.u32 %v999, 4294901760
        %v1246 = vsub.f32 %v999, %v1245
        %1247 = vmatpush1.msra.mxu0 %v1246
        %1248 = vmatprep.subr.mxu0 0.0
        %v1249 = vand.u32 %v1000, 4294901760
        %v1250 = vsub.f32 %v1000, %v1249
        %1251 = vmatpush1.msra.mxu0 %v1250
        %1252 = vmatprep.subr.mxu0 0.0
        %v1253 = vand.u32 %v1001, 4294901760
        %v1254 = vsub.f32 %v1001, %v1253
        %1255 = vmatpush1.msra.mxu0 %v1254
        %1256 = vmatprep.subr.mxu0 0.0
        %1257 = vmatpush1.msra.mxu0 0.0
        %1258 = vmatprep.subr.mxu0 0.0
        %1259 = vmatpush1.msra.mxu0 0.0
        %1260 = vmatprep.subr.mxu0 0.0
        %1261 = vmatpush1.msra.mxu0 0.0
        %1262 = vmatprep.subr.mxu0 0.0
        %1263 = vmatpush1.msra.mxu0 0.0
        %1264 = vmatprep.subr.mxu0 0.0
        %1265 = vmatpush1.msra.mxu0 0.0
        %1266 = vmatprep.subr.mxu0 0.0
        %1267 = vmatpush1.msra.mxu0 0.0
        %1268 = vmatprep.subr.mxu0 0.0
        %1269 = vmatpush1.msra.mxu0 0.0
        %1270 = vmatprep.subr.mxu0 0.0
        %1271 = vmatpush1.msra.mxu0 0.0
        %1272 = vmatprep.subr.mxu0 0.0
        %1273 = vmatpush1.msra.mxu0 0.0
        %1274 = vmatprep.subr.mxu0 0.0
        %1275 = vmatpush1.msra.mxu0 0.0
        %1276 = vmatprep.subr.mxu0 0.0
        %1277 = vmatpush1.msra.mxu0 0.0
        %1278 = vmatprep.subr.mxu0 0.0
        %1279 = vmatpush1.msra.mxu0 0.0
        %1280 = vmatprep.subr.mxu0 0.0
        %1281 = vmatpush1.msra.mxu0 0.0
        %1282 = vmatprep.subr.mxu0 0.0
        %1283 = vmatpush1.msra.mxu0 0.0
        %1284 = vmatprep.subr.mxu0 0.0
        %1285 = vmatpush1.msra.mxu0 0.0
        %1286 = vmatprep.subr.mxu0 0.0
        %1287 = vmatpush1.msra.mxu0 0.0
        %1288 = vmatprep.subr.mxu0 0.0
        %1289 = vmatpush1.msra.mxu0 0.0
        %1290 = vmatprep.subr.mxu0 0.0
        %1291 = vmatpush1.msra.mxu0 0.0
        %1292 = vmatprep.subr.mxu0 0.0
        %1293 = vmatpush1.msra.mxu0 0.0
        %1294 = vmatprep.subr.mxu0 0.0
        %1295 = vmatpush1.msra.mxu0 0.0
        %1296 = vmatprep.subr.mxu0 0.0
        %1297 = vmatpush1.msra.mxu0 0.0
        %1298 = vmatprep.subr.mxu0 0.0
        %1299 = vmatpush1.msra.mxu0 0.0
        %1300 = vmatprep.subr.mxu0 0.0
        %1301 = vmatpush1.msra.mxu0 0.0
        %1302 = vmatprep.subr.mxu0 0.0
        %1303 = vmatpush1.msra.mxu0 0.0
        %1304 = vmatprep.subr.mxu0 0.0
        %1305 = vmatpush1.msra.mxu0 0.0
        %1306 = vmatprep.subr.mxu0 0.0
        %1307 = vmatpush1.msra.mxu0 0.0
        %1308 = vmatprep.subr.mxu0 0.0
        %1309 = vmatpush1.msra.mxu0 0.0
        %1310 = vmatprep.subr.mxu0 0.0
        %1311 = vmatpush1.msra.mxu0 0.0
        %1312 = vmatprep.mubr.f32.mxu0 0.0
        %v1313 = vand.u32 %v1011, 4294901760
        %v1314 = vsub.f32 %v1011, %v1313
        %1315 = vmatmul.mubr.f32.gmra.mrb[0].mxu0 %v1314
        %v1316 = vpop.f32.mrb[0].mxu0
        %v1317 = vadd.f32 %v1219, %v1316
        %v1318 = vpop.f32.mrb[0].mxu0
        %1319 = vmatprep.mubr.f32.mxu0 0.0
        %v1320 = vand.u32 %v1014, 4294901760
        %v1321 = vsub.f32 %v1014, %v1320
        %1322 = vmatmul.mubr.f32.gmra.mrb[0].mxu0 %v1321
        %v1323 = vpop.f32.mrb[0].mxu0
        %v1324 = vadd.f32 %v1225, %v1323
        %v1325 = vpop.f32.mrb[0].mxu0
        %1326 = vmatprep.mubr.f32.mxu0 0.0
        %v1327 = vand.u32 %v1017, 4294901760
        %v1328 = vsub.f32 %v1017, %v1327
        %1329 = vmatmul.mubr.f32.gmra.mrb[0].mxu0 %v1328
        %v1330 = vpop.f32.mrb[0].mxu0
        %v1331 = vadd.f32 %v1231, %v1330
        %v1332 = vpop.f32.mrb[0].mxu0
        %1333 = vmatprep.mubr.f32.mxu0 0.0
        %v1334 = vand.u32 %v1020, 4294901760
        %v1335 = vsub.f32 %v1020, %v1334
        %1336 = vmatmul.mubr.f32.gmra.mrb[0].mxu0 %v1335
        %v1337 = vpop.f32.mrb[0].mxu0
        %v1338 = vadd.f32 %v1237, %v1337
        %v1339 = vpop.f32.mrb[0].mxu0
        %1340 = vdwg.mxu0
        %1341 = vmatprep.subr.mxu0 0.0
        %v1342 = vand.u32 %v998, 4294901760
        %1343 = vmatpush1.msra.mxu0 %v1342
        %1344 = vmatprep.subr.mxu0 0.0
        %v1345 = vand.u32 %v999, 4294901760
        %1346 = vmatpush1.msra.mxu0 %v1345
        %1347 = vmatprep.subr.mxu0 0.0
        %v1348 = vand.u32 %v1000, 4294901760
        %1349 = vmatpush1.msra.mxu0 %v1348
        %1350 = vmatprep.subr.mxu0 0.0
        %v1351 = vand.u32 %v1001, 4294901760
        %1352 = vmatpush1.msra.mxu0 %v1351
        %1353 = vmatprep.subr.mxu0 0.0
        %1354 = vmatpush1.msra.mxu0 0.0
        %1355 = vmatprep.subr.mxu0 0.0
        %1356 = vmatpush1.msra.mxu0 0.0
        %1357 = vmatprep.subr.mxu0 0.0
        %1358 = vmatpush1.msra.mxu0 0.0
        %1359 = vmatprep.subr.mxu0 0.0
        %1360 = vmatpush1.msra.mxu0 0.0
        %1361 = vmatprep.subr.mxu0 0.0
        %1362 = vmatpush1.msra.mxu0 0.0
        %1363 = vmatprep.subr.mxu0 0.0
        %1364 = vmatpush1.msra.mxu0 0.0
        %1365 = vmatprep.subr.mxu0 0.0
        %1366 = vmatpush1.msra.mxu0 0.0
        %1367 = vmatprep.subr.mxu0 0.0
        %1368 = vmatpush1.msra.mxu0 0.0
        %1369 = vmatprep.subr.mxu0 0.0
        %1370 = vmatpush1.msra.mxu0 0.0
        %1371 = vmatprep.subr.mxu0 0.0
        %1372 = vmatpush1.msra.mxu0 0.0
        %1373 = vmatprep.subr.mxu0 0.0
        %1374 = vmatpush1.msra.mxu0 0.0
        %1375 = vmatprep.subr.mxu0 0.0
        %1376 = vmatpush1.msra.mxu0 0.0
        %1377 = vmatprep.subr.mxu0 0.0
        %1378 = vmatpush1.msra.mxu0 0.0
        %1379 = vmatprep.subr.mxu0 0.0
        %1380 = vmatpush1.msra.mxu0 0.0
        %1381 = vmatprep.subr.mxu0 0.0
        %1382 = vmatpush1.msra.mxu0 0.0
        %1383 = vmatprep.subr.mxu0 0.0
        %1384 = vmatpush1.msra.mxu0 0.0
        %1385 = vmatprep.subr.mxu0 0.0
        %1386 = vmatpush1.msra.mxu0 0.0
        %1387 = vmatprep.subr.mxu0 0.0
        %1388 = vmatpush1.msra.mxu0 0.0
        %1389 = vmatprep.subr.mxu0 0.0
        %1390 = vmatpush1.msra.mxu0 0.0
        %1391 = vmatprep.subr.mxu0 0.0
        %1392 = vmatpush1.msra.mxu0 0.0
        %1393 = vmatprep.subr.mxu0 0.0
        %1394 = vmatpush1.msra.mxu0 0.0
        %1395 = vmatprep.subr.mxu0 0.0
        %1396 = vmatpush1.msra.mxu0 0.0
        %1397 = vmatprep.subr.mxu0 0.0
        %1398 = vmatpush1.msra.mxu0 0.0
        %1399 = vmatprep.subr.mxu0 0.0
        %1400 = vmatpush1.msra.mxu0 0.0
        %1401 = vmatprep.subr.mxu0 0.0
        %1402 = vmatpush1.msra.mxu0 0.0
        %1403 = vmatprep.subr.mxu0 0.0
        %1404 = vmatpush1.msra.mxu0 0.0
        %1405 = vmatprep.subr.mxu0 0.0
        %1406 = vmatpush1.msra.mxu0 0.0
        %1407 = vmatprep.subr.mxu0 0.0
        %1408 = vmatpush1.msra.mxu0 0.0
        %1409 = vmatprep.mubr.f32.mxu0 0.0
        %v1410 = vand.u32 %v1011, 4294901760
        %v1411 = vsub.f32 %v1011, %v1410
        %v1412 = vand.u32 %v1411, 4294901760
        %1413 = vmatmul.mubr.f32.gmra.mrb[0].mxu0 %v1412
        %v1414 = vpop.f32.mrb[0].mxu0
        %v1415 = vadd.f32 %v1317, %v1414
        %v1416 = vpop.f32.mrb[0].mxu0
        %1417 = vmatprep.mubr.f32.mxu0 0.0
        %v1418 = vand.u32 %v1014, 4294901760
        %v1419 = vsub.f32 %v1014, %v1418
        %v1420 = vand.u32 %v1419, 4294901760
        %1421 = vmatmul.mubr.f32.gmra.mrb[0].mxu0 %v1420
        %v1422 = vpop.f32.mrb[0].mxu0
        %v1423 = vadd.f32 %v1324, %v1422
        %v1424 = vpop.f32.mrb[0].mxu0
        %1425 = vmatprep.mubr.f32.mxu0 0.0
        %v1426 = vand.u32 %v1017, 4294901760
        %v1427 = vsub.f32 %v1017, %v1426
        %v1428 = vand.u32 %v1427, 4294901760
        %1429 = vmatmul.mubr.f32.gmra.mrb[0].mxu0 %v1428
        %v1430 = vpop.f32.mrb[0].mxu0
        %v1431 = vadd.f32 %v1331, %v1430
        %v1432 = vpop.f32.mrb[0].mxu0
        %1433 = vmatprep.mubr.f32.mxu0 0.0
        %v1434 = vand.u32 %v1020, 4294901760
        %v1435 = vsub.f32 %v1020, %v1434
        %v1436 = vand.u32 %v1435, 4294901760
        %1437 = vmatmul.mubr.f32.gmra.mrb[0].mxu0 %v1436
        %v1438 = vpop.f32.mrb[0].mxu0
        %v1439 = vadd.f32 %v1338, %v1438
        %v1440 = vpop.f32.mrb[0].mxu0
        %1441 = vdwg.mxu0
        %1442 = vmatprep.subr.mxu0 0.0
        %v1443 = vand.u32 %v998, 4294901760
        %v1444 = vsub.f32 %v998, %v1443
        %v1445 = vand.u32 %v1444, 4294901760
        %1446 = vmatpush1.msra.mxu0 %v1445
        %1447 = vmatprep.subr.mxu0 0.0
        %v1448 = vand.u32 %v999, 4294901760
        %v1449 = vsub.f32 %v999, %v1448
        %v1450 = vand.u32 %v1449, 4294901760
        %1451 = vmatpush1.msra.mxu0 %v1450
        %1452 = vmatprep.subr.mxu0 0.0
        %v1453 = vand.u32 %v1000, 4294901760
        %v1454 = vsub.f32 %v1000, %v1453
        %v1455 = vand.u32 %v1454, 4294901760
        %1456 = vmatpush1.msra.mxu0 %v1455
        %1457 = vmatprep.subr.mxu0 0.0
        %v1458 = vand.u32 %v1001, 4294901760
        %v1459 = vsub.f32 %v1001, %v1458
        %v1460 = vand.u32 %v1459, 4294901760
        %1461 = vmatpush1.msra.mxu0 %v1460
        %1462 = vmatprep.subr.mxu0 0.0
        %1463 = vmatpush1.msra.mxu0 0.0
        %1464 = vmatprep.subr.mxu0 0.0
        %1465 = vmatpush1.msra.mxu0 0.0
        %1466 = vmatprep.subr.mxu0 0.0
        %1467 = vmatpush1.msra.mxu0 0.0
        %1468 = vmatprep.subr.mxu0 0.0
        %1469 = vmatpush1.msra.mxu0 0.0
        %1470 = vmatprep.subr.mxu0 0.0
        %1471 = vmatpush1.msra.mxu0 0.0
        %1472 = vmatprep.subr.mxu0 0.0
        %1473 = vmatpush1.msra.mxu0 0.0
        %1474 = vmatprep.subr.mxu0 0.0
        %1475 = vmatpush1.msra.mxu0 0.0
        %1476 = vmatprep.subr.mxu0 0.0
        %1477 = vmatpush1.msra.mxu0 0.0
        %1478 = vmatprep.subr.mxu0 0.0
        %1479 = vmatpush1.msra.mxu0 0.0
        %1480 = vmatprep.subr.mxu0 0.0
        %1481 = vmatpush1.msra.mxu0 0.0
        %1482 = vmatprep.subr.mxu0 0.0
        %1483 = vmatpush1.msra.mxu0 0.0
        %1484 = vmatprep.subr.mxu0 0.0
        %1485 = vmatpush1.msra.mxu0 0.0
        %1486 = vmatprep.subr.mxu0 0.0
        %1487 = vmatpush1.msra.mxu0 0.0
        %1488 = vmatprep.subr.mxu0 0.0
        %1489 = vmatpush1.msra.mxu0 0.0
        %1490 = vmatprep.subr.mxu0 0.0
        %1491 = vmatpush1.msra.mxu0 0.0
        %1492 = vmatprep.subr.mxu0 0.0
        %1493 = vmatpush1.msra.mxu0 0.0
        %1494 = vmatprep.subr.mxu0 0.0
        %1495 = vmatpush1.msra.mxu0 0.0
        %1496 = vmatprep.subr.mxu0 0.0
        %1497 = vmatpush1.msra.mxu0 0.0
        %1498 = vmatprep.subr.mxu0 0.0
        %1499 = vmatpush1.msra.mxu0 0.0
        %1500 = vmatprep.subr.mxu0 0.0
        %1501 = vmatpush1.msra.mxu0 0.0
        %1502 = vmatprep.subr.mxu0 0.0
        %1503 = vmatpush1.msra.mxu0 0.0
        %1504 = vmatprep.subr.mxu0 0.0
        %1505 = vmatpush1.msra.mxu0 0.0
        %1506 = vmatprep.subr.mxu0 0.0
        %1507 = vmatpush1.msra.mxu0 0.0
        %1508 = vmatprep.subr.mxu0 0.0
        %1509 = vmatpush1.msra.mxu0 0.0
        %1510 = vmatprep.subr.mxu0 0.0
        %1511 = vmatpush1.msra.mxu0 0.0
        %1512 = vmatprep.subr.mxu0 0.0
        %1513 = vmatpush1.msra.mxu0 0.0
        %1514 = vmatprep.subr.mxu0 0.0
        %1515 = vmatpush1.msra.mxu0 0.0
        %1516 = vmatprep.subr.mxu0 0.0
        %1517 = vmatpush1.msra.mxu0 0.0
        %1518 = vmatprep.mubr.f32.mxu0 0.0
        %v1519 = vand.u32 %v1011, 4294901760
        %1520 = vmatmul.mubr.f32.gmra.mrb[0].mxu0 %v1519
        %v1521 = vpop.f32.mrb[0].mxu0
        %v1522 = vadd.f32 %v1415, %v1521
        %v1523 = vpop.f32.mrb[0].mxu0
        %1524 = vmatprep.mubr.f32.mxu0 0.0
        %v1525 = vand.u32 %v1014, 4294901760
        %1526 = vmatmul.mubr.f32.gmra.mrb[0].mxu0 %v1525
        %v1527 = vpop.f32.mrb[0].mxu0
        %v1528 = vadd.f32 %v1423, %v1527
        %v1529 = vpop.f32.mrb[0].mxu0
        %1530 = vmatprep.mubr.f32.mxu0 0.0
        %v1531 = vand.u32 %v1017, 4294901760
        %1532 = vmatmul.mubr.f32.gmra.mrb[0].mxu0 %v1531
        %v1533 = vpop.f32.mrb[0].mxu0
        %v1534 = vadd.f32 %v1431, %v1533
        %v1535 = vpop.f32.mrb[0].mxu0
        %1536 = vmatprep.mubr.f32.mxu0 0.0
        %v1537 = vand.u32 %v1020, 4294901760
        %1538 = vmatmul.mubr.f32.gmra.mrb[0].mxu0 %v1537
        %v1539 = vpop.f32.mrb[0].mxu0
        %v1540 = vadd.f32 %v1439, %v1539
        %v1541 = vpop.f32.mrb[0].mxu0
        %1542 = vdwg.mxu0
        %1543 = vmatprep.subr.mxu0 0.0
        %v1544 = vand.u32 %v998, 4294901760
        %1545 = vmatpush1.msra.mxu0 %v1544
        %1546 = vmatprep.subr.mxu0 0.0
        %v1547 = vand.u32 %v999, 4294901760
        %1548 = vmatpush1.msra.mxu0 %v1547
        %1549 = vmatprep.subr.mxu0 0.0
        %v1550 = vand.u32 %v1000, 4294901760
        %1551 = vmatpush1.msra.mxu0 %v1550
        %1552 = vmatprep.subr.mxu0 0.0
        %v1553 = vand.u32 %v1001, 4294901760
        %1554 = vmatpush1.msra.mxu0 %v1553
        %1555 = vmatprep.subr.mxu0 0.0
        %1556 = vmatpush1.msra.mxu0 0.0
        %1557 = vmatprep.subr.mxu0 0.0
        %1558 = vmatpush1.msra.mxu0 0.0
        %1559 = vmatprep.subr.mxu0 0.0
        %1560 = vmatpush1.msra.mxu0 0.0
        %1561 = vmatprep.subr.mxu0 0.0
        %1562 = vmatpush1.msra.mxu0 0.0
        %1563 = vmatprep.subr.mxu0 0.0
        %1564 = vmatpush1.msra.mxu0 0.0
        %1565 = vmatprep.subr.mxu0 0.0
        %1566 = vmatpush1.msra.mxu0 0.0
        %1567 = vmatprep.subr.mxu0 0.0
        %1568 = vmatpush1.msra.mxu0 0.0
        %1569 = vmatprep.subr.mxu0 0.0
        %1570 = vmatpush1.msra.mxu0 0.0
        %1571 = vmatprep.subr.mxu0 0.0
        %1572 = vmatpush1.msra.mxu0 0.0
        %1573 = vmatprep.subr.mxu0 0.0
        %1574 = vmatpush1.msra.mxu0 0.0
        %1575 = vmatprep.subr.mxu0 0.0
        %1576 = vmatpush1.msra.mxu0 0.0
        %1577 = vmatprep.subr.mxu0 0.0
        %1578 = vmatpush1.msra.mxu0 0.0
        %1579 = vmatprep.subr.mxu0 0.0
        %1580 = vmatpush1.msra.mxu0 0.0
        %1581 = vmatprep.subr.mxu0 0.0
        %1582 = vmatpush1.msra.mxu0 0.0
        %1583 = vmatprep.subr.mxu0 0.0
        %1584 = vmatpush1.msra.mxu0 0.0
        %1585 = vmatprep.subr.mxu0 0.0
        %1586 = vmatpush1.msra.mxu0 0.0
        %1587 = vmatprep.subr.mxu0 0.0
        %1588 = vmatpush1.msra.mxu0 0.0
        %1589 = vmatprep.subr.mxu0 0.0
        %1590 = vmatpush1.msra.mxu0 0.0
        %1591 = vmatprep.subr.mxu0 0.0
        %1592 = vmatpush1.msra.mxu0 0.0
        %1593 = vmatprep.subr.mxu0 0.0
        %1594 = vmatpush1.msra.mxu0 0.0
        %1595 = vmatprep.subr.mxu0 0.0
        %1596 = vmatpush1.msra.mxu0 0.0
        %1597 = vmatprep.subr.mxu0 0.0
        %1598 = vmatpush1.msra.mxu0 0.0
        %1599 = vmatprep.subr.mxu0 0.0
        %1600 = vmatpush1.msra.mxu0 0.0
        %1601 = vmatprep.subr.mxu0 0.0
        %1602 = vmatpush1.msra.mxu0 0.0
        %1603 = vmatprep.subr.mxu0 0.0
        %1604 = vmatpush1.msra.mxu0 0.0
        %1605 = vmatprep.subr.mxu0 0.0
        %1606 = vmatpush1.msra.mxu0 0.0
        %1607 = vmatprep.subr.mxu0 0.0
        %1608 = vmatpush1.msra.mxu0 0.0
        %1609 = vmatprep.subr.mxu0 0.0
        %1610 = vmatpush1.msra.mxu0 0.0
        %1611 = vmatprep.mubr.f32.mxu0 0.0
        %v1612 = vand.u32 %v1011, 4294901760
        %1613 = vmatmul.mubr.f32.gmra.mrb[0].mxu0 %v1612
        %v1614 = vpop.f32.mrb[0].mxu0
        %v1615 = vadd.f32 %v1522, %v1614
        %v1616 = vpop.f32.mrb[0].mxu0
        %1617 = vmatprep.mubr.f32.mxu0 0.0
        %v1618 = vand.u32 %v1014, 4294901760
        %1619 = vmatmul.mubr.f32.gmra.mrb[0].mxu0 %v1618
        %v1620 = vpop.f32.mrb[0].mxu0
        %v1621 = vadd.f32 %v1528, %v1620
        %v1622 = vpop.f32.mrb[0].mxu0
        %1623 = vmatprep.mubr.f32.mxu0 0.0
        %v1624 = vand.u32 %v1017, 4294901760
        %1625 = vmatmul.mubr.f32.gmra.mrb[0].mxu0 %v1624
        %v1626 = vpop.f32.mrb[0].mxu0
        %v1627 = vadd.f32 %v1534, %v1626
        %v1628 = vpop.f32.mrb[0].mxu0
        %1629 = vmatprep.mubr.f32.mxu0 0.0
        %v1630 = vand.u32 %v1020, 4294901760
        %1631 = vmatmul.mubr.f32.gmra.mrb[0].mxu0 %v1630
        %v1632 = vpop.f32.mrb[0].mxu0
        %v1633 = vadd.f32 %v1540, %v1632
        %v1634 = vpop.f32.mrb[0].mxu0
        %1635 = vdwg.mxu0
        %v1636 = vld [vmem:[%s355] sm:$0xff]
        %v1637 = vld [vmem:[%s355 + $0x8] sm:$0xff]
        %v1638 = vld [vmem:[%s355 + $0x10] sm:$0xff]
        %v1639 = vld [vmem:[%s355 + $0x18] sm:$0xff]
        %v1640 = vld [vmem:[#allocation2] sm:$0xff]
        %v1641 = vld [vmem:[#allocation2 + $0x8] sm:$0xff]
        %v1642 = vld [vmem:[#allocation2 + $0x10] sm:$0xff]
        %v1643 = vld [vmem:[#allocation2 + $0x18] sm:$0xff]
        %v1645 = vsel %vm1009, 0.0, 0
        %1647 = vmatprep.subr.mxu0 0.0
        %v1648 = vand.u32 %v1640, 4294901760
        %1649 = vmatpush1.msra.mxu0 %v1648
        %1650 = vmatprep.subr.mxu0 0.0
        %v1651 = vand.u32 %v1641, 4294901760
        %1652 = vmatpush1.msra.mxu0 %v1651
        %1653 = vmatprep.subr.mxu0 0.0
        %v1654 = vand.u32 %v1642, 4294901760
        %1655 = vmatpush1.msra.mxu0 %v1654
        %1656 = vmatprep.subr.mxu0 0.0
        %v1657 = vand.u32 %v1643, 4294901760
        %1658 = vmatpush1.msra.mxu0 %v1657
        %1659 = vmatprep.subr.mxu0 0.0
        %1660 = vmatpush1.msra.mxu0 0.0
        %1661 = vmatprep.subr.mxu0 0.0
        %1662 = vmatpush1.msra.mxu0 0.0
        %1663 = vmatprep.subr.mxu0 0.0
        %1664 = vmatpush1.msra.mxu0 0.0
        %1665 = vmatprep.subr.mxu0 0.0
        %1666 = vmatpush1.msra.mxu0 0.0
        %1667 = vmatprep.subr.mxu0 0.0
        %1668 = vmatpush1.msra.mxu0 0.0
        %1669 = vmatprep.subr.mxu0 0.0
        %1670 = vmatpush1.msra.mxu0 0.0
        %1671 = vmatprep.subr.mxu0 0.0
        %1672 = vmatpush1.msra.mxu0 0.0
        %1673 = vmatprep.subr.mxu0 0.0
        %1674 = vmatpush1.msra.mxu0 0.0
        %1675 = vmatprep.subr.mxu0 0.0
        %1676 = vmatpush1.msra.mxu0 0.0
        %1677 = vmatprep.subr.mxu0 0.0
        %1678 = vmatpush1.msra.mxu0 0.0
        %1679 = vmatprep.subr.mxu0 0.0
        %1680 = vmatpush1.msra.mxu0 0.0
        %1681 = vmatprep.subr.mxu0 0.0
        %1682 = vmatpush1.msra.mxu0 0.0
        %1683 = vmatprep.subr.mxu0 0.0
        %1684 = vmatpush1.msra.mxu0 0.0
        %1685 = vmatprep.subr.mxu0 0.0
        %1686 = vmatpush1.msra.mxu0 0.0
        %1687 = vmatprep.subr.mxu0 0.0
        %1688 = vmatpush1.msra.mxu0 0.0
        %1689 = vmatprep.subr.mxu0 0.0
        %1690 = vmatpush1.msra.mxu0 0.0
        %1691 = vmatprep.subr.mxu0 0.0
        %1692 = vmatpush1.msra.mxu0 0.0
        %1693 = vmatprep.subr.mxu0 0.0
        %1694 = vmatpush1.msra.mxu0 0.0
        %1695 = vmatprep.subr.mxu0 0.0
        %1696 = vmatpush1.msra.mxu0 0.0
        %1697 = vmatprep.subr.mxu0 0.0
        %1698 = vmatpush1.msra.mxu0 0.0
        %1699 = vmatprep.subr.mxu0 0.0
        %1700 = vmatpush1.msra.mxu0 0.0
        %1701 = vmatprep.subr.mxu0 0.0
        %1702 = vmatpush1.msra.mxu0 0.0
        %1703 = vmatprep.subr.mxu0 0.0
        %1704 = vmatpush1.msra.mxu0 0.0
        %1705 = vmatprep.subr.mxu0 0.0
        %1706 = vmatpush1.msra.mxu0 0.0
        %1707 = vmatprep.subr.mxu0 0.0
        %1708 = vmatpush1.msra.mxu0 0.0
        %1709 = vmatprep.subr.mxu0 0.0
        %1710 = vmatpush1.msra.mxu0 0.0
        %1711 = vmatprep.subr.mxu0 0.0
        %1712 = vmatpush1.msra.mxu0 0.0
        %1713 = vmatprep.subr.mxu0 0.0
        %1714 = vmatpush1.msra.mxu0 0.0
        %1715 = vmatprep.mubr.f32.mxu0 0.0
        %v1716 = vand.u32 %v1645, 4294901760
        %v1717 = vsub.f32 %v1645, %v1716
        %v1718 = vand.u32 %v1717, 4294901760
        %v1719 = vsub.f32 %v1717, %v1718
        %v1720 = vand.u32 %v1719, 4294901760
        %1721 = vmatmul.mubr.f32.gmra.mrb[0].mxu0 %v1720
        %v1722 = vpop.f32.mrb[0].mxu0
        %v1723 = vadd.f32 0.0, %v1722
        %v1724 = vpop.f32.mrb[0].mxu0
        %1725 = vdwg.mxu0
        %1726 = vmatprep.subr.mxu0 0.0
        %v1727 = vand.u32 %v1640, 4294901760
        %v1728 = vsub.f32 %v1640, %v1727
        %v1729 = vand.u32 %v1728, 4294901760
        %v1730 = vsub.f32 %v1728, %v1729
        %v1731 = vand.u32 %v1730, 4294901760
        %1732 = vmatpush1.msra.mxu0 %v1731
        %1733 = vmatprep.subr.mxu0 0.0
        %v1734 = vand.u32 %v1641, 4294901760
        %v1735 = vsub.f32 %v1641, %v1734
        %v1736 = vand.u32 %v1735, 4294901760
        %v1737 = vsub.f32 %v1735, %v1736
        %v1738 = vand.u32 %v1737, 4294901760
        %1739 = vmatpush1.msra.mxu0 %v1738
        %1740 = vmatprep.subr.mxu0 0.0
        %v1741 = vand.u32 %v1642, 4294901760
        %v1742 = vsub.f32 %v1642, %v1741
        %v1743 = vand.u32 %v1742, 4294901760
        %v1744 = vsub.f32 %v1742, %v1743
        %v1745 = vand.u32 %v1744, 4294901760
        %1746 = vmatpush1.msra.mxu0 %v1745
        %1747 = vmatprep.subr.mxu0 0.0
        %v1748 = vand.u32 %v1643, 4294901760
        %v1749 = vsub.f32 %v1643, %v1748
        %v1750 = vand.u32 %v1749, 4294901760
        %v1751 = vsub.f32 %v1749, %v1750
        %v1752 = vand.u32 %v1751, 4294901760
        %1753 = vmatpush1.msra.mxu0 %v1752
        %1754 = vmatprep.subr.mxu0 0.0
        %1755 = vmatpush1.msra.mxu0 0.0
        %1756 = vmatprep.subr.mxu0 0.0
        %1757 = vmatpush1.msra.mxu0 0.0
        %1758 = vmatprep.subr.mxu0 0.0
        %1759 = vmatpush1.msra.mxu0 0.0
        %1760 = vmatprep.subr.mxu0 0.0
        %1761 = vmatpush1.msra.mxu0 0.0
        %1762 = vmatprep.subr.mxu0 0.0
        %1763 = vmatpush1.msra.mxu0 0.0
        %1764 = vmatprep.subr.mxu0 0.0
        %1765 = vmatpush1.msra.mxu0 0.0
        %1766 = vmatprep.subr.mxu0 0.0
        %1767 = vmatpush1.msra.mxu0 0.0
        %1768 = vmatprep.subr.mxu0 0.0
        %1769 = vmatpush1.msra.mxu0 0.0
        %1770 = vmatprep.subr.mxu0 0.0
        %1771 = vmatpush1.msra.mxu0 0.0
        %1772 = vmatprep.subr.mxu0 0.0
        %1773 = vmatpush1.msra.mxu0 0.0
        %1774 = vmatprep.subr.mxu0 0.0
        %1775 = vmatpush1.msra.mxu0 0.0
        %1776 = vmatprep.subr.mxu0 0.0
        %1777 = vmatpush1.msra.mxu0 0.0
        %1778 = vmatprep.subr.mxu0 0.0
        %1779 = vmatpush1.msra.mxu0 0.0
        %1780 = vmatprep.subr.mxu0 0.0
        %1781 = vmatpush1.msra.mxu0 0.0
        %1782 = vmatprep.subr.mxu0 0.0
        %1783 = vmatpush1.msra.mxu0 0.0
        %1784 = vmatprep.subr.mxu0 0.0
        %1785 = vmatpush1.msra.mxu0 0.0
        %1786 = vmatprep.subr.mxu0 0.0
        %1787 = vmatpush1.msra.mxu0 0.0
        %1788 = vmatprep.subr.mxu0 0.0
        %1789 = vmatpush1.msra.mxu0 0.0
        %1790 = vmatprep.subr.mxu0 0.0
        %1791 = vmatpush1.msra.mxu0 0.0
        %1792 = vmatprep.subr.mxu0 0.0
        %1793 = vmatpush1.msra.mxu0 0.0
        %1794 = vmatprep.subr.mxu0 0.0
        %1795 = vmatpush1.msra.mxu0 0.0
        %1796 = vmatprep.subr.mxu0 0.0
        %1797 = vmatpush1.msra.mxu0 0.0
        %1798 = vmatprep.subr.mxu0 0.0
        %1799 = vmatpush1.msra.mxu0 0.0
        %1800 = vmatprep.subr.mxu0 0.0
        %1801 = vmatpush1.msra.mxu0 0.0
        %1802 = vmatprep.subr.mxu0 0.0
        %1803 = vmatpush1.msra.mxu0 0.0
        %1804 = vmatprep.subr.mxu0 0.0
        %1805 = vmatpush1.msra.mxu0 0.0
        %1806 = vmatprep.subr.mxu0 0.0
        %1807 = vmatpush1.msra.mxu0 0.0
        %1808 = vmatprep.subr.mxu0 0.0
        %1809 = vmatpush1.msra.mxu0 0.0
        %1810 = vmatprep.mubr.f32.mxu0 0.0
        %v1811 = vand.u32 %v1645, 4294901760
        %1812 = vmatmul.mubr.f32.gmra.mrb[0].mxu0 %v1811
        %v1813 = vpop.f32.mrb[0].mxu0
        %v1814 = vadd.f32 %v1723, %v1813
        %v1815 = vpop.f32.mrb[0].mxu0
        %1816 = vdwg.mxu0
        %1817 = vmatprep.subr.mxu0 0.0
        %v1818 = vand.u32 %v1640, 4294901760
        %v1819 = vsub.f32 %v1640, %v1818
        %1820 = vmatpush1.msra.mxu0 %v1819
        %1821 = vmatprep.subr.mxu0 0.0
        %v1822 = vand.u32 %v1641, 4294901760
        %v1823 = vsub.f32 %v1641, %v1822
        %1824 = vmatpush1.msra.mxu0 %v1823
        %1825 = vmatprep.subr.mxu0 0.0
        %v1826 = vand.u32 %v1642, 4294901760
        %v1827 = vsub.f32 %v1642, %v1826
        %1828 = vmatpush1.msra.mxu0 %v1827
        %1829 = vmatprep.subr.mxu0 0.0
        %v1830 = vand.u32 %v1643, 4294901760
        %v1831 = vsub.f32 %v1643, %v1830
        %1832 = vmatpush1.msra.mxu0 %v1831
        %1833 = vmatprep.subr.mxu0 0.0
        %1834 = vmatpush1.msra.mxu0 0.0
        %1835 = vmatprep.subr.mxu0 0.0
        %1836 = vmatpush1.msra.mxu0 0.0
        %1837 = vmatprep.subr.mxu0 0.0
        %1838 = vmatpush1.msra.mxu0 0.0
        %1839 = vmatprep.subr.mxu0 0.0
        %1840 = vmatpush1.msra.mxu0 0.0
        %1841 = vmatprep.subr.mxu0 0.0
        %1842 = vmatpush1.msra.mxu0 0.0
        %1843 = vmatprep.subr.mxu0 0.0
        %1844 = vmatpush1.msra.mxu0 0.0
        %1845 = vmatprep.subr.mxu0 0.0
        %1846 = vmatpush1.msra.mxu0 0.0
        %1847 = vmatprep.subr.mxu0 0.0
        %1848 = vmatpush1.msra.mxu0 0.0
        %1849 = vmatprep.subr.mxu0 0.0
        %1850 = vmatpush1.msra.mxu0 0.0
        %1851 = vmatprep.subr.mxu0 0.0
        %1852 = vmatpush1.msra.mxu0 0.0
        %1853 = vmatprep.subr.mxu0 0.0
        %1854 = vmatpush1.msra.mxu0 0.0
        %1855 = vmatprep.subr.mxu0 0.0
        %1856 = vmatpush1.msra.mxu0 0.0
        %1857 = vmatprep.subr.mxu0 0.0
        %1858 = vmatpush1.msra.mxu0 0.0
        %1859 = vmatprep.subr.mxu0 0.0
        %1860 = vmatpush1.msra.mxu0 0.0
        %1861 = vmatprep.subr.mxu0 0.0
        %1862 = vmatpush1.msra.mxu0 0.0
        %1863 = vmatprep.subr.mxu0 0.0
        %1864 = vmatpush1.msra.mxu0 0.0
        %1865 = vmatprep.subr.mxu0 0.0
        %1866 = vmatpush1.msra.mxu0 0.0
        %1867 = vmatprep.subr.mxu0 0.0
        %1868 = vmatpush1.msra.mxu0 0.0
        %1869 = vmatprep.subr.mxu0 0.0
        %1870 = vmatpush1.msra.mxu0 0.0
        %1871 = vmatprep.subr.mxu0 0.0
        %1872 = vmatpush1.msra.mxu0 0.0
        %1873 = vmatprep.subr.mxu0 0.0
        %1874 = vmatpush1.msra.mxu0 0.0
        %1875 = vmatprep.subr.mxu0 0.0
        %1876 = vmatpush1.msra.mxu0 0.0
        %1877 = vmatprep.subr.mxu0 0.0
        %1878 = vmatpush1.msra.mxu0 0.0
        %1879 = vmatprep.subr.mxu0 0.0
        %1880 = vmatpush1.msra.mxu0 0.0
        %1881 = vmatprep.subr.mxu0 0.0
        %1882 = vmatpush1.msra.mxu0 0.0
        %1883 = vmatprep.subr.mxu0 0.0
        %1884 = vmatpush1.msra.mxu0 0.0
        %1885 = vmatprep.subr.mxu0 0.0
        %1886 = vmatpush1.msra.mxu0 0.0
        %1887 = vmatprep.subr.mxu0 0.0
        %1888 = vmatpush1.msra.mxu0 0.0
        %1889 = vmatprep.mubr.f32.mxu0 0.0
        %v1890 = vand.u32 %v1645, 4294901760
        %v1891 = vsub.f32 %v1645, %v1890
        %1892 = vmatmul.mubr.f32.gmra.mrb[0].mxu0 %v1891
        %v1893 = vpop.f32.mrb[0].mxu0
        %v1894 = vadd.f32 %v1814, %v1893
        %v1895 = vpop.f32.mrb[0].mxu0
        %1896 = vdwg.mxu0
        %1897 = vmatprep.subr.mxu0 0.0
        %v1898 = vand.u32 %v1640, 4294901760
        %1899 = vmatpush1.msra.mxu0 %v1898
        %1900 = vmatprep.subr.mxu0 0.0
        %v1901 = vand.u32 %v1641, 4294901760
        %1902 = vmatpush1.msra.mxu0 %v1901
        %1903 = vmatprep.subr.mxu0 0.0
        %v1904 = vand.u32 %v1642, 4294901760
        %1905 = vmatpush1.msra.mxu0 %v1904
        %1906 = vmatprep.subr.mxu0 0.0
        %v1907 = vand.u32 %v1643, 4294901760
        %1908 = vmatpush1.msra.mxu0 %v1907
        %1909 = vmatprep.subr.mxu0 0.0
        %1910 = vmatpush1.msra.mxu0 0.0
        %1911 = vmatprep.subr.mxu0 0.0
        %1912 = vmatpush1.msra.mxu0 0.0
        %1913 = vmatprep.subr.mxu0 0.0
        %1914 = vmatpush1.msra.mxu0 0.0
        %1915 = vmatprep.subr.mxu0 0.0
        %1916 = vmatpush1.msra.mxu0 0.0
        %1917 = vmatprep.subr.mxu0 0.0
        %1918 = vmatpush1.msra.mxu0 0.0
        %1919 = vmatprep.subr.mxu0 0.0
        %1920 = vmatpush1.msra.mxu0 0.0
        %1921 = vmatprep.subr.mxu0 0.0
        %1922 = vmatpush1.msra.mxu0 0.0
        %1923 = vmatprep.subr.mxu0 0.0
        %1924 = vmatpush1.msra.mxu0 0.0
        %1925 = vmatprep.subr.mxu0 0.0
        %1926 = vmatpush1.msra.mxu0 0.0
        %1927 = vmatprep.subr.mxu0 0.0
        %1928 = vmatpush1.msra.mxu0 0.0
        %1929 = vmatprep.subr.mxu0 0.0
        %1930 = vmatpush1.msra.mxu0 0.0
        %1931 = vmatprep.subr.mxu0 0.0
        %1932 = vmatpush1.msra.mxu0 0.0
        %1933 = vmatprep.subr.mxu0 0.0
        %1934 = vmatpush1.msra.mxu0 0.0
        %1935 = vmatprep.subr.mxu0 0.0
        %1936 = vmatpush1.msra.mxu0 0.0
        %1937 = vmatprep.subr.mxu0 0.0
        %1938 = vmatpush1.msra.mxu0 0.0
        %1939 = vmatprep.subr.mxu0 0.0
        %1940 = vmatpush1.msra.mxu0 0.0
        %1941 = vmatprep.subr.mxu0 0.0
        %1942 = vmatpush1.msra.mxu0 0.0
        %1943 = vmatprep.subr.mxu0 0.0
        %1944 = vmatpush1.msra.mxu0 0.0
        %1945 = vmatprep.subr.mxu0 0.0
        %1946 = vmatpush1.msra.mxu0 0.0
        %1947 = vmatprep.subr.mxu0 0.0
        %1948 = vmatpush1.msra.mxu0 0.0
        %1949 = vmatprep.subr.mxu0 0.0
        %1950 = vmatpush1.msra.mxu0 0.0
        %1951 = vmatprep.subr.mxu0 0.0
        %1952 = vmatpush1.msra.mxu0 0.0
        %1953 = vmatprep.subr.mxu0 0.0
        %1954 = vmatpush1.msra.mxu0 0.0
        %1955 = vmatprep.subr.mxu0 0.0
        %1956 = vmatpush1.msra.mxu0 0.0
        %1957 = vmatprep.subr.mxu0 0.0
        %1958 = vmatpush1.msra.mxu0 0.0
        %1959 = vmatprep.subr.mxu0 0.0
        %1960 = vmatpush1.msra.mxu0 0.0
        %1961 = vmatprep.subr.mxu0 0.0
        %1962 = vmatpush1.msra.mxu0 0.0
        %1963 = vmatprep.subr.mxu0 0.0
        %1964 = vmatpush1.msra.mxu0 0.0
        %1965 = vmatprep.mubr.f32.mxu0 0.0
        %v1966 = vand.u32 %v1645, 4294901760
        %v1967 = vsub.f32 %v1645, %v1966
        %v1968 = vand.u32 %v1967, 4294901760
        %1969 = vmatmul.mubr.f32.gmra.mrb[0].mxu0 %v1968
        %v1970 = vpop.f32.mrb[0].mxu0
        %v1971 = vadd.f32 %v1894, %v1970
        %v1972 = vpop.f32.mrb[0].mxu0
        %1973 = vdwg.mxu0
        %1974 = vmatprep.subr.mxu0 0.0
        %v1975 = vand.u32 %v1640, 4294901760
        %v1976 = vsub.f32 %v1640, %v1975
        %v1977 = vand.u32 %v1976, 4294901760
        %1978 = vmatpush1.msra.mxu0 %v1977
        %1979 = vmatprep.subr.mxu0 0.0
        %v1980 = vand.u32 %v1641, 4294901760
        %v1981 = vsub.f32 %v1641, %v1980
        %v1982 = vand.u32 %v1981, 4294901760
        %1983 = vmatpush1.msra.mxu0 %v1982
        %1984 = vmatprep.subr.mxu0 0.0
        %v1985 = vand.u32 %v1642, 4294901760
        %v1986 = vsub.f32 %v1642, %v1985
        %v1987 = vand.u32 %v1986, 4294901760
        %1988 = vmatpush1.msra.mxu0 %v1987
        %1989 = vmatprep.subr.mxu0 0.0
        %v1990 = vand.u32 %v1643, 4294901760
        %v1991 = vsub.f32 %v1643, %v1990
        %v1992 = vand.u32 %v1991, 4294901760
        %1993 = vmatpush1.msra.mxu0 %v1992
        %1994 = vmatprep.subr.mxu0 0.0
        %1995 = vmatpush1.msra.mxu0 0.0
        %1996 = vmatprep.subr.mxu0 0.0
        %1997 = vmatpush1.msra.mxu0 0.0
        %1998 = vmatprep.subr.mxu0 0.0
        %1999 = vmatpush1.msra.mxu0 0.0
        %2000 = vmatprep.subr.mxu0 0.0
        %2001 = vmatpush1.msra.mxu0 0.0
        %2002 = vmatprep.subr.mxu0 0.0
        %2003 = vmatpush1.msra.mxu0 0.0
        %2004 = vmatprep.subr.mxu0 0.0
        %2005 = vmatpush1.msra.mxu0 0.0
        %2006 = vmatprep.subr.mxu0 0.0
        %2007 = vmatpush1.msra.mxu0 0.0
        %2008 = vmatprep.subr.mxu0 0.0
        %2009 = vmatpush1.msra.mxu0 0.0
        %2010 = vmatprep.subr.mxu0 0.0
        %2011 = vmatpush1.msra.mxu0 0.0
        %2012 = vmatprep.subr.mxu0 0.0
        %2013 = vmatpush1.msra.mxu0 0.0
        %2014 = vmatprep.subr.mxu0 0.0
        %2015 = vmatpush1.msra.mxu0 0.0
        %2016 = vmatprep.subr.mxu0 0.0
        %2017 = vmatpush1.msra.mxu0 0.0
        %2018 = vmatprep.subr.mxu0 0.0
        %2019 = vmatpush1.msra.mxu0 0.0
        %2020 = vmatprep.subr.mxu0 0.0
        %2021 = vmatpush1.msra.mxu0 0.0
        %2022 = vmatprep.subr.mxu0 0.0
        %2023 = vmatpush1.msra.mxu0 0.0
        %2024 = vmatprep.subr.mxu0 0.0
        %2025 = vmatpush1.msra.mxu0 0.0
        %2026 = vmatprep.subr.mxu0 0.0
        %2027 = vmatpush1.msra.mxu0 0.0
        %2028 = vmatprep.subr.mxu0 0.0
        %2029 = vmatpush1.msra.mxu0 0.0
        %2030 = vmatprep.subr.mxu0 0.0
        %2031 = vmatpush1.msra.mxu0 0.0
        %2032 = vmatprep.subr.mxu0 0.0
        %2033 = vmatpush1.msra.mxu0 0.0
        %2034 = vmatprep.subr.mxu0 0.0
        %2035 = vmatpush1.msra.mxu0 0.0
        %2036 = vmatprep.subr.mxu0 0.0
        %2037 = vmatpush1.msra.mxu0 0.0
        %2038 = vmatprep.subr.mxu0 0.0
        %2039 = vmatpush1.msra.mxu0 0.0
        %2040 = vmatprep.subr.mxu0 0.0
        %2041 = vmatpush1.msra.mxu0 0.0
        %2042 = vmatprep.subr.mxu0 0.0
        %2043 = vmatpush1.msra.mxu0 0.0
        %2044 = vmatprep.subr.mxu0 0.0
        %2045 = vmatpush1.msra.mxu0 0.0
        %2046 = vmatprep.subr.mxu0 0.0
        %2047 = vmatpush1.msra.mxu0 0.0
        %2048 = vmatprep.subr.mxu0 0.0
        %2049 = vmatpush1.msra.mxu0 0.0
        %2050 = vmatprep.mubr.f32.mxu0 0.0
        %v2051 = vand.u32 %v1645, 4294901760
        %2052 = vmatmul.mubr.f32.gmra.mrb[0].mxu0 %v2051
        %v2053 = vpop.f32.mrb[0].mxu0
        %v2054 = vadd.f32 %v1971, %v2053
        %v2055 = vpop.f32.mrb[0].mxu0
        %2056 = vdwg.mxu0
        %2057 = vmatprep.subr.mxu0 0.0
        %v2058 = vand.u32 %v1640, 4294901760
        %2059 = vmatpush1.msra.mxu0 %v2058
        %2060 = vmatprep.subr.mxu0 0.0
        %v2061 = vand.u32 %v1641, 4294901760
        %2062 = vmatpush1.msra.mxu0 %v2061
        %2063 = vmatprep.subr.mxu0 0.0
        %v2064 = vand.u32 %v1642, 4294901760
        %2065 = vmatpush1.msra.mxu0 %v2064
        %2066 = vmatprep.subr.mxu0 0.0
        %v2067 = vand.u32 %v1643, 4294901760
        %2068 = vmatpush1.msra.mxu0 %v2067
        %2069 = vmatprep.subr.mxu0 0.0
        %2070 = vmatpush1.msra.mxu0 0.0
        %2071 = vmatprep.subr.mxu0 0.0
        %2072 = vmatpush1.msra.mxu0 0.0
        %2073 = vmatprep.subr.mxu0 0.0
        %2074 = vmatpush1.msra.mxu0 0.0
        %2075 = vmatprep.subr.mxu0 0.0
        %2076 = vmatpush1.msra.mxu0 0.0
        %2077 = vmatprep.subr.mxu0 0.0
        %2078 = vmatpush1.msra.mxu0 0.0
        %2079 = vmatprep.subr.mxu0 0.0
        %2080 = vmatpush1.msra.mxu0 0.0
        %2081 = vmatprep.subr.mxu0 0.0
        %2082 = vmatpush1.msra.mxu0 0.0
        %2083 = vmatprep.subr.mxu0 0.0
        %2084 = vmatpush1.msra.mxu0 0.0
        %2085 = vmatprep.subr.mxu0 0.0
        %2086 = vmatpush1.msra.mxu0 0.0
        %2087 = vmatprep.subr.mxu0 0.0
        %2088 = vmatpush1.msra.mxu0 0.0
        %2089 = vmatprep.subr.mxu0 0.0
        %2090 = vmatpush1.msra.mxu0 0.0
        %2091 = vmatprep.subr.mxu0 0.0
        %2092 = vmatpush1.msra.mxu0 0.0
        %2093 = vmatprep.subr.mxu0 0.0
        %2094 = vmatpush1.msra.mxu0 0.0
        %2095 = vmatprep.subr.mxu0 0.0
        %2096 = vmatpush1.msra.mxu0 0.0
        %2097 = vmatprep.subr.mxu0 0.0
        %2098 = vmatpush1.msra.mxu0 0.0
        %2099 = vmatprep.subr.mxu0 0.0
        %2100 = vmatpush1.msra.mxu0 0.0
        %2101 = vmatprep.subr.mxu0 0.0
        %2102 = vmatpush1.msra.mxu0 0.0
        %2103 = vmatprep.subr.mxu0 0.0
        %2104 = vmatpush1.msra.mxu0 0.0
        %2105 = vmatprep.subr.mxu0 0.0
        %2106 = vmatpush1.msra.mxu0 0.0
        %2107 = vmatprep.subr.mxu0 0.0
        %2108 = vmatpush1.msra.mxu0 0.0
        %2109 = vmatprep.subr.mxu0 0.0
        %2110 = vmatpush1.msra.mxu0 0.0
        %2111 = vmatprep.subr.mxu0 0.0
        %2112 = vmatpush1.msra.mxu0 0.0
        %2113 = vmatprep.subr.mxu0 0.0
        %2114 = vmatpush1.msra.mxu0 0.0
        %2115 = vmatprep.subr.mxu0 0.0
        %2116 = vmatpush1.msra.mxu0 0.0
        %2117 = vmatprep.subr.mxu0 0.0
        %2118 = vmatpush1.msra.mxu0 0.0
        %2119 = vmatprep.subr.mxu0 0.0
        %2120 = vmatpush1.msra.mxu0 0.0
        %2121 = vmatprep.subr.mxu0 0.0
        %2122 = vmatpush1.msra.mxu0 0.0
        %2123 = vmatprep.subr.mxu0 0.0
        %2124 = vmatpush1.msra.mxu0 0.0
        %2125 = vmatprep.mubr.f32.mxu0 0.0
        %v2126 = vand.u32 %v1645, 4294901760
        %2127 = vmatmul.mubr.f32.gmra.mrb[0].mxu0 %v2126
        %v2128 = vpop.f32.mrb[0].mxu0
        %v2129 = vadd.f32 %v2054, %v2128
        %v2130 = vpop.f32.mrb[0].mxu0
        %2131 = vdwg.mxu0
        %v2132 = vadd.f32 %v1615, %v2129
        %v2133 = vxor.u32 %v2132, 2147483648
        %v2134 = vmul.f32 %v2133, 1.442695
        %v2135 = vpow.pop %v2134
        %v2136 = vadd.f32 %v2135, 1.0
        %v2137 = vrcp.pop %v2136
        %v2138 = vmul.f32 1.0, %v2137
        %v2139 = vtanh.pop %v2132
        %v2140 = vmul.f32 %v2138, 0.0
        %2142 = vrot.lane.b32.xlu0 %v2139, 64
        %v2143 = vpop.permute.xlu0 %2142
        %v2145 = vmul.f32 %v2138, %v2143
        %2147 = vrot.lane.b32.xlu0 %v2145, 32
        %v2148 = vpop.permute.xlu0 %2147
        %v2150 = vadd.f32 %v2140, %v2148
        %v2151 = vtanh.pop %v2150
        %2153 = vrot.lane.b32.xlu0 %v2151, 64
        %v2154 = vpop.permute.xlu0 %2153
        %v2156 = vmul.f32 %v2138, %v2154
        %2158 = vset.pattern.permute.xlu0 0
        %2159 = vperm.xlu0 %2158, %v1636
        %v2160 = vpop.permute.xlu0 %2159
        %v2162 = vmul.f32 %v2160, %v2150
        %v2163 = vadd.f32 %v2162, 0.0
        %v2164 = vmul.f32 %v2160, %v2156
        %v2165 = vadd.f32 %v2164, 0.0
        %2167 = vrot.lane.b32.xlu0 %v2165, 32
        %v2168 = vpop.permute.xlu0 %2167
        %v2169 = vsel %vm1009, %v2168, 0
        %2171 = vmatprep.subr.mxu0 0.0
        %v2172 = vand.u32 %v1640, 4294901760
        %2173 = vmatpush1.msra.mxu0 %v2172
        %2174 = vmatprep.subr.mxu0 0.0
        %v2175 = vand.u32 %v1641, 4294901760
        %2176 = vmatpush1.msra.mxu0 %v2175
        %2177 = vmatprep.subr.mxu0 0.0
        %v2178 = vand.u32 %v1642, 4294901760
        %2179 = vmatpush1.msra.mxu0 %v2178
        %2180 = vmatprep.subr.mxu0 0.0
        %v2181 = vand.u32 %v1643, 4294901760
        %2182 = vmatpush1.msra.mxu0 %v2181
        %2183 = vmatprep.subr.mxu0 0.0
        %2184 = vmatpush1.msra.mxu0 0.0
        %2185 = vmatprep.subr.mxu0 0.0
        %2186 = vmatpush1.msra.mxu0 0.0
        %2187 = vmatprep.subr.mxu0 0.0
        %2188 = vmatpush1.msra.mxu0 0.0
        %2189 = vmatprep.subr.mxu0 0.0
        %2190 = vmatpush1.msra.mxu0 0.0
        %2191 = vmatprep.subr.mxu0 0.0
        %2192 = vmatpush1.msra.mxu0 0.0
        %2193 = vmatprep.subr.mxu0 0.0
        %2194 = vmatpush1.msra.mxu0 0.0
        %2195 = vmatprep.subr.mxu0 0.0
        %2196 = vmatpush1.msra.mxu0 0.0
        %2197 = vmatprep.subr.mxu0 0.0
        %2198 = vmatpush1.msra.mxu0 0.0
        %2199 = vmatprep.subr.mxu0 0.0
        %2200 = vmatpush1.msra.mxu0 0.0
        %2201 = vmatprep.subr.mxu0 0.0
        %2202 = vmatpush1.msra.mxu0 0.0
        %2203 = vmatprep.subr.mxu0 0.0
        %2204 = vmatpush1.msra.mxu0 0.0
        %2205 = vmatprep.subr.mxu0 0.0
        %2206 = vmatpush1.msra.mxu0 0.0
        %2207 = vmatprep.subr.mxu0 0.0
        %2208 = vmatpush1.msra.mxu0 0.0
        %2209 = vmatprep.subr.mxu0 0.0
        %2210 = vmatpush1.msra.mxu0 0.0
        %2211 = vmatprep.subr.mxu0 0.0
        %2212 = vmatpush1.msra.mxu0 0.0
        %2213 = vmatprep.subr.mxu0 0.0
        %2214 = vmatpush1.msra.mxu0 0.0
        %2215 = vmatprep.subr.mxu0 0.0
        %2216 = vmatpush1.msra.mxu0 0.0
        %2217 = vmatprep.subr.mxu0 0.0
        %2218 = vmatpush1.msra.mxu0 0.0
        %2219 = vmatprep.subr.mxu0 0.0
        %2220 = vmatpush1.msra.mxu0 0.0
        %2221 = vmatprep.subr.mxu0 0.0
        %2222 = vmatpush1.msra.mxu0 0.0
        %2223 = vmatprep.subr.mxu0 0.0
        %2224 = vmatpush1.msra.mxu0 0.0
        %2225 = vmatprep.subr.mxu0 0.0
        %2226 = vmatpush1.msra.mxu0 0.0
        %2227 = vmatprep.subr.mxu0 0.0
        %2228 = vmatpush1.msra.mxu0 0.0
        %2229 = vmatprep.subr.mxu0 0.0
        %2230 = vmatpush1.msra.mxu0 0.0
        %2231 = vmatprep.subr.mxu0 0.0
        %2232 = vmatpush1.msra.mxu0 0.0
        %2233 = vmatprep.subr.mxu0 0.0
        %2234 = vmatpush1.msra.mxu0 0.0
        %2235 = vmatprep.subr.mxu0 0.0
        %2236 = vmatpush1.msra.mxu0 0.0
        %2237 = vmatprep.subr.mxu0 0.0
        %2238 = vmatpush1.msra.mxu0 0.0
        %2239 = vmatprep.mubr.f32.mxu0 0.0
        %v2240 = vand.u32 %v2169, 4294901760
        %v2241 = vsub.f32 %v2169, %v2240
        %v2242 = vand.u32 %v2241, 4294901760
        %v2243 = vsub.f32 %v2241, %v2242
        %v2244 = vand.u32 %v2243, 4294901760
        %2245 = vmatmul.mubr.f32.gmra.mrb[0].mxu0 %v2244
        %v2246 = vpop.f32.mrb[0].mxu0
        %v2247 = vadd.f32 0.0, %v2246
        %v2248 = vpop.f32.mrb[0].mxu0
        %2249 = vdwg.mxu0
        %2250 = vmatprep.subr.mxu0 0.0
        %v2251 = vand.u32 %v1640, 4294901760
        %v2252 = vsub.f32 %v1640, %v2251
        %v2253 = vand.u32 %v2252, 4294901760
        %v2254 = vsub.f32 %v2252, %v2253
        %v2255 = vand.u32 %v2254, 4294901760
        %2256 = vmatpush1.msra.mxu0 %v2255
        %2257 = vmatprep.subr.mxu0 0.0
        %v2258 = vand.u32 %v1641, 4294901760
        %v2259 = vsub.f32 %v1641, %v2258
        %v2260 = vand.u32 %v2259, 4294901760
        %v2261 = vsub.f32 %v2259, %v2260
        %v2262 = vand.u32 %v2261, 4294901760
        %2263 = vmatpush1.msra.mxu0 %v2262
        %2264 = vmatprep.subr.mxu0 0.0
        %v2265 = vand.u32 %v1642, 4294901760
        %v2266 = vsub.f32 %v1642, %v2265
        %v2267 = vand.u32 %v2266, 4294901760
        %v2268 = vsub.f32 %v2266, %v2267
        %v2269 = vand.u32 %v2268, 4294901760
        %2270 = vmatpush1.msra.mxu0 %v2269
        %2271 = vmatprep.subr.mxu0 0.0
        %v2272 = vand.u32 %v1643, 4294901760
        %v2273 = vsub.f32 %v1643, %v2272
        %v2274 = vand.u32 %v2273, 4294901760
        %v2275 = vsub.f32 %v2273, %v2274
        %v2276 = vand.u32 %v2275, 4294901760
        %2277 = vmatpush1.msra.mxu0 %v2276
        %2278 = vmatprep.subr.mxu0 0.0
        %2279 = vmatpush1.msra.mxu0 0.0
        %2280 = vmatprep.subr.mxu0 0.0
        %2281 = vmatpush1.msra.mxu0 0.0
        %2282 = vmatprep.subr.mxu0 0.0
        %2283 = vmatpush1.msra.mxu0 0.0
        %2284 = vmatprep.subr.mxu0 0.0
        %2285 = vmatpush1.msra.mxu0 0.0
        %2286 = vmatprep.subr.mxu0 0.0
        %2287 = vmatpush1.msra.mxu0 0.0
        %2288 = vmatprep.subr.mxu0 0.0
        %2289 = vmatpush1.msra.mxu0 0.0
        %2290 = vmatprep.subr.mxu0 0.0
        %2291 = vmatpush1.msra.mxu0 0.0
        %2292 = vmatprep.subr.mxu0 0.0
        %2293 = vmatpush1.msra.mxu0 0.0
        %2294 = vmatprep.subr.mxu0 0.0
        %2295 = vmatpush1.msra.mxu0 0.0
        %2296 = vmatprep.subr.mxu0 0.0
        %2297 = vmatpush1.msra.mxu0 0.0
        %2298 = vmatprep.subr.mxu0 0.0
        %2299 = vmatpush1.msra.mxu0 0.0
        %2300 = vmatprep.subr.mxu0 0.0
        %2301 = vmatpush1.msra.mxu0 0.0
        %2302 = vmatprep.subr.mxu0 0.0
        %2303 = vmatpush1.msra.mxu0 0.0
        %2304 = vmatprep.subr.mxu0 0.0
        %2305 = vmatpush1.msra.mxu0 0.0
        %2306 = vmatprep.subr.mxu0 0.0
        %2307 = vmatpush1.msra.mxu0 0.0
        %2308 = vmatprep.subr.mxu0 0.0
        %2309 = vmatpush1.msra.mxu0 0.0
        %2310 = vmatprep.subr.mxu0 0.0
        %2311 = vmatpush1.msra.mxu0 0.0
        %2312 = vmatprep.subr.mxu0 0.0
        %2313 = vmatpush1.msra.mxu0 0.0
        %2314 = vmatprep.subr.mxu0 0.0
        %2315 = vmatpush1.msra.mxu0 0.0
        %2316 = vmatprep.subr.mxu0 0.0
        %2317 = vmatpush1.msra.mxu0 0.0
        %2318 = vmatprep.subr.mxu0 0.0
        %2319 = vmatpush1.msra.mxu0 0.0
        %2320 = vmatprep.subr.mxu0 0.0
        %2321 = vmatpush1.msra.mxu0 0.0
        %2322 = vmatprep.subr.mxu0 0.0
        %2323 = vmatpush1.msra.mxu0 0.0
        %2324 = vmatprep.subr.mxu0 0.0
        %2325 = vmatpush1.msra.mxu0 0.0
        %2326 = vmatprep.subr.mxu0 0.0
        %2327 = vmatpush1.msra.mxu0 0.0
        %2328 = vmatprep.subr.mxu0 0.0
        %2329 = vmatpush1.msra.mxu0 0.0
        %2330 = vmatprep.subr.mxu0 0.0
        %2331 = vmatpush1.msra.mxu0 0.0
        %2332 = vmatprep.subr.mxu0 0.0
        %2333 = vmatpush1.msra.mxu0 0.0
        %2334 = vmatprep.mubr.f32.mxu0 0.0
        %v2335 = vand.u32 %v2169, 4294901760
        %2336 = vmatmul.mubr.f32.gmra.mrb[0].mxu0 %v2335
        %v2337 = vpop.f32.mrb[0].mxu0
        %v2338 = vadd.f32 %v2247, %v2337
        %v2339 = vpop.f32.mrb[0].mxu0
        %2340 = vdwg.mxu0
        %2341 = vmatprep.subr.mxu0 0.0
        %v2342 = vand.u32 %v1640, 4294901760
        %v2343 = vsub.f32 %v1640, %v2342
        %2344 = vmatpush1.msra.mxu0 %v2343
        %2345 = vmatprep.subr.mxu0 0.0
        %v2346 = vand.u32 %v1641, 4294901760
        %v2347 = vsub.f32 %v1641, %v2346
        %2348 = vmatpush1.msra.mxu0 %v2347
        %2349 = vmatprep.subr.mxu0 0.0
        %v2350 = vand.u32 %v1642, 4294901760
        %v2351 = vsub.f32 %v1642, %v2350
        %2352 = vmatpush1.msra.mxu0 %v2351
        %2353 = vmatprep.subr.mxu0 0.0
        %v2354 = vand.u32 %v1643, 4294901760
        %v2355 = vsub.f32 %v1643, %v2354
        %2356 = vmatpush1.msra.mxu0 %v2355
        %2357 = vmatprep.subr.mxu0 0.0
        %2358 = vmatpush1.msra.mxu0 0.0
        %2359 = vmatprep.subr.mxu0 0.0
        %2360 = vmatpush1.msra.mxu0 0.0
        %2361 = vmatprep.subr.mxu0 0.0
        %2362 = vmatpush1.msra.mxu0 0.0
        %2363 = vmatprep.subr.mxu0 0.0
        %2364 = vmatpush1.msra.mxu0 0.0
        %2365 = vmatprep.subr.mxu0 0.0
        %2366 = vmatpush1.msra.mxu0 0.0
        %2367 = vmatprep.subr.mxu0 0.0
        %2368 = vmatpush1.msra.mxu0 0.0
        %2369 = vmatprep.subr.mxu0 0.0
        %2370 = vmatpush1.msra.mxu0 0.0
        %2371 = vmatprep.subr.mxu0 0.0
        %2372 = vmatpush1.msra.mxu0 0.0
        %2373 = vmatprep.subr.mxu0 0.0
        %2374 = vmatpush1.msra.mxu0 0.0
        %2375 = vmatprep.subr.mxu0 0.0
        %2376 = vmatpush1.msra.mxu0 0.0
        %2377 = vmatprep.subr.mxu0 0.0
        %2378 = vmatpush1.msra.mxu0 0.0
        %2379 = vmatprep.subr.mxu0 0.0
        %2380 = vmatpush1.msra.mxu0 0.0
        %2381 = vmatprep.subr.mxu0 0.0
        %2382 = vmatpush1.msra.mxu0 0.0
        %2383 = vmatprep.subr.mxu0 0.0
        %2384 = vmatpush1.msra.mxu0 0.0
        %2385 = vmatprep.subr.mxu0 0.0
        %2386 = vmatpush1.msra.mxu0 0.0
        %2387 = vmatprep.subr.mxu0 0.0
        %2388 = vmatpush1.msra.mxu0 0.0
        %2389 = vmatprep.subr.mxu0 0.0
        %2390 = vmatpush1.msra.mxu0 0.0
        %2391 = vmatprep.subr.mxu0 0.0
        %2392 = vmatpush1.msra.mxu0 0.0
        %2393 = vmatprep.subr.mxu0 0.0
        %2394 = vmatpush1.msra.mxu0 0.0
        %2395 = vmatprep.subr.mxu0 0.0
        %2396 = vmatpush1.msra.mxu0 0.0
        %2397 = vmatprep.subr.mxu0 0.0
        %2398 = vmatpush1.msra.mxu0 0.0
        %2399 = vmatprep.subr.mxu0 0.0
        %2400 = vmatpush1.msra.mxu0 0.0
        %2401 = vmatprep.subr.mxu0 0.0
        %2402 = vmatpush1.msra.mxu0 0.0
        %2403 = vmatprep.subr.mxu0 0.0
        %2404 = vmatpush1.msra.mxu0 0.0
        %2405 = vmatprep.subr.mxu0 0.0
        %2406 = vmatpush1.msra.mxu0 0.0
        %2407 = vmatprep.subr.mxu0 0.0
        %2408 = vmatpush1.msra.mxu0 0.0
        %2409 = vmatprep.subr.mxu0 0.0
        %2410 = vmatpush1.msra.mxu0 0.0
        %2411 = vmatprep.subr.mxu0 0.0
        %2412 = vmatpush1.msra.mxu0 0.0
        %2413 = vmatprep.mubr.f32.mxu0 0.0
        %v2414 = vand.u32 %v2169, 4294901760
        %v2415 = vsub.f32 %v2169, %v2414
        %2416 = vmatmul.mubr.f32.gmra.mrb[0].mxu0 %v2415
        %v2417 = vpop.f32.mrb[0].mxu0
        %v2418 = vadd.f32 %v2338, %v2417
        %v2419 = vpop.f32.mrb[0].mxu0
        %2420 = vdwg.mxu0
        %2421 = vmatprep.subr.mxu0 0.0
        %v2422 = vand.u32 %v1640, 4294901760
        %2423 = vmatpush1.msra.mxu0 %v2422
        %2424 = vmatprep.subr.mxu0 0.0
        %v2425 = vand.u32 %v1641, 4294901760
        %2426 = vmatpush1.msra.mxu0 %v2425
        %2427 = vmatprep.subr.mxu0 0.0
        %v2428 = vand.u32 %v1642, 4294901760
        %2429 = vmatpush1.msra.mxu0 %v2428
        %2430 = vmatprep.subr.mxu0 0.0
        %v2431 = vand.u32 %v1643, 4294901760
        %2432 = vmatpush1.msra.mxu0 %v2431
        %2433 = vmatprep.subr.mxu0 0.0
        %2434 = vmatpush1.msra.mxu0 0.0
        %2435 = vmatprep.subr.mxu0 0.0
        %2436 = vmatpush1.msra.mxu0 0.0
        %2437 = vmatprep.subr.mxu0 0.0
        %2438 = vmatpush1.msra.mxu0 0.0
        %2439 = vmatprep.subr.mxu0 0.0
        %2440 = vmatpush1.msra.mxu0 0.0
        %2441 = vmatprep.subr.mxu0 0.0
        %2442 = vmatpush1.msra.mxu0 0.0
        %2443 = vmatprep.subr.mxu0 0.0
        %2444 = vmatpush1.msra.mxu0 0.0
        %2445 = vmatprep.subr.mxu0 0.0
        %2446 = vmatpush1.msra.mxu0 0.0
        %2447 = vmatprep.subr.mxu0 0.0
        %2448 = vmatpush1.msra.mxu0 0.0
        %2449 = vmatprep.subr.mxu0 0.0
        %2450 = vmatpush1.msra.mxu0 0.0
        %2451 = vmatprep.subr.mxu0 0.0
        %2452 = vmatpush1.msra.mxu0 0.0
        %2453 = vmatprep.subr.mxu0 0.0
        %2454 = vmatpush1.msra.mxu0 0.0
        %2455 = vmatprep.subr.mxu0 0.0
        %2456 = vmatpush1.msra.mxu0 0.0
        %2457 = vmatprep.subr.mxu0 0.0
        %2458 = vmatpush1.msra.mxu0 0.0
        %2459 = vmatprep.subr.mxu0 0.0
        %2460 = vmatpush1.msra.mxu0 0.0
        %2461 = vmatprep.subr.mxu0 0.0
        %2462 = vmatpush1.msra.mxu0 0.0
        %2463 = vmatprep.subr.mxu0 0.0
        %2464 = vmatpush1.msra.mxu0 0.0
        %2465 = vmatprep.subr.mxu0 0.0
        %2466 = vmatpush1.msra.mxu0 0.0
        %2467 = vmatprep.subr.mxu0 0.0
        %2468 = vmatpush1.msra.mxu0 0.0
        %2469 = vmatprep.subr.mxu0 0.0
        %2470 = vmatpush1.msra.mxu0 0.0
        %2471 = vmatprep.subr.mxu0 0.0
        %2472 = vmatpush1.msra.mxu0 0.0
        %2473 = vmatprep.subr.mxu0 0.0
        %2474 = vmatpush1.msra.mxu0 0.0
        %2475 = vmatprep.subr.mxu0 0.0
        %2476 = vmatpush1.msra.mxu0 0.0
        %2477 = vmatprep.subr.mxu0 0.0
        %2478 = vmatpush1.msra.mxu0 0.0
        %2479 = vmatprep.subr.mxu0 0.0
        %2480 = vmatpush1.msra.mxu0 0.0
        %2481 = vmatprep.subr.mxu0 0.0
        %2482 = vmatpush1.msra.mxu0 0.0
        %2483 = vmatprep.subr.mxu0 0.0
        %2484 = vmatpush1.msra.mxu0 0.0
        %2485 = vmatprep.subr.mxu0 0.0
        %2486 = vmatpush1.msra.mxu0 0.0
        %2487 = vmatprep.subr.mxu0 0.0
        %2488 = vmatpush1.msra.mxu0 0.0
        %2489 = vmatprep.mubr.f32.mxu0 0.0
        %v2490 = vand.u32 %v2169, 4294901760
        %v2491 = vsub.f32 %v2169, %v2490
        %v2492 = vand.u32 %v2491, 4294901760
        %2493 = vmatmul.mubr.f32.gmra.mrb[0].mxu0 %v2492
        %v2494 = vpop.f32.mrb[0].mxu0
        %v2495 = vadd.f32 %v2418, %v2494
        %v2496 = vpop.f32.mrb[0].mxu0
        %2497 = vdwg.mxu0
        %2498 = vmatprep.subr.mxu0 0.0
        %v2499 = vand.u32 %v1640, 4294901760
        %v2500 = vsub.f32 %v1640, %v2499
        %v2501 = vand.u32 %v2500, 4294901760
        %2502 = vmatpush1.msra.mxu0 %v2501
        %2503 = vmatprep.subr.mxu0 0.0
        %v2504 = vand.u32 %v1641, 4294901760
        %v2505 = vsub.f32 %v1641, %v2504
        %v2506 = vand.u32 %v2505, 4294901760
        %2507 = vmatpush1.msra.mxu0 %v2506
        %2508 = vmatprep.subr.mxu0 0.0
        %v2509 = vand.u32 %v1642, 4294901760
        %v2510 = vsub.f32 %v1642, %v2509
        %v2511 = vand.u32 %v2510, 4294901760
        %2512 = vmatpush1.msra.mxu0 %v2511
        %2513 = vmatprep.subr.mxu0 0.0
        %v2514 = vand.u32 %v1643, 4294901760
        %v2515 = vsub.f32 %v1643, %v2514
        %v2516 = vand.u32 %v2515, 4294901760
        %2517 = vmatpush1.msra.mxu0 %v2516
        %2518 = vmatprep.subr.mxu0 0.0
        %2519 = vmatpush1.msra.mxu0 0.0
        %2520 = vmatprep.subr.mxu0 0.0
        %2521 = vmatpush1.msra.mxu0 0.0
        %2522 = vmatprep.subr.mxu0 0.0
        %2523 = vmatpush1.msra.mxu0 0.0
        %2524 = vmatprep.subr.mxu0 0.0
        %2525 = vmatpush1.msra.mxu0 0.0
        %2526 = vmatprep.subr.mxu0 0.0
        %2527 = vmatpush1.msra.mxu0 0.0
        %2528 = vmatprep.subr.mxu0 0.0
        %2529 = vmatpush1.msra.mxu0 0.0
        %2530 = vmatprep.subr.mxu0 0.0
        %2531 = vmatpush1.msra.mxu0 0.0
        %2532 = vmatprep.subr.mxu0 0.0
        %2533 = vmatpush1.msra.mxu0 0.0
        %2534 = vmatprep.subr.mxu0 0.0
        %2535 = vmatpush1.msra.mxu0 0.0
        %2536 = vmatprep.subr.mxu0 0.0
        %2537 = vmatpush1.msra.mxu0 0.0
        %2538 = vmatprep.subr.mxu0 0.0
        %2539 = vmatpush1.msra.mxu0 0.0
        %2540 = vmatprep.subr.mxu0 0.0
        %2541 = vmatpush1.msra.mxu0 0.0
        %2542 = vmatprep.subr.mxu0 0.0
        %2543 = vmatpush1.msra.mxu0 0.0
        %2544 = vmatprep.subr.mxu0 0.0
        %2545 = vmatpush1.msra.mxu0 0.0
        %2546 = vmatprep.subr.mxu0 0.0
        %2547 = vmatpush1.msra.mxu0 0.0
        %2548 = vmatprep.subr.mxu0 0.0
        %2549 = vmatpush1.msra.mxu0 0.0
        %2550 = vmatprep.subr.mxu0 0.0
        %2551 = vmatpush1.msra.mxu0 0.0
        %2552 = vmatprep.subr.mxu0 0.0
        %2553 = vmatpush1.msra.mxu0 0.0
        %2554 = vmatprep.subr.mxu0 0.0
        %2555 = vmatpush1.msra.mxu0 0.0
        %2556 = vmatprep.subr.mxu0 0.0
        %2557 = vmatpush1.msra.mxu0 0.0
        %2558 = vmatprep.subr.mxu0 0.0
        %2559 = vmatpush1.msra.mxu0 0.0
        %2560 = vmatprep.subr.mxu0 0.0
        %2561 = vmatpush1.msra.mxu0 0.0
        %2562 = vmatprep.subr.mxu0 0.0
        %2563 = vmatpush1.msra.mxu0 0.0
        %2564 = vmatprep.subr.mxu0 0.0
        %2565 = vmatpush1.msra.mxu0 0.0
        %2566 = vmatprep.subr.mxu0 0.0
        %2567 = vmatpush1.msra.mxu0 0.0
        %2568 = vmatprep.subr.mxu0 0.0
        %2569 = vmatpush1.msra.mxu0 0.0
        %2570 = vmatprep.subr.mxu0 0.0
        %2571 = vmatpush1.msra.mxu0 0.0
        %2572 = vmatprep.subr.mxu0 0.0
        %2573 = vmatpush1.msra.mxu0 0.0
        %2574 = vmatprep.mubr.f32.mxu0 0.0
        %v2575 = vand.u32 %v2169, 4294901760
        %2576 = vmatmul.mubr.f32.gmra.mrb[0].mxu0 %v2575
        %v2577 = vpop.f32.mrb[0].mxu0
        %v2578 = vadd.f32 %v2495, %v2577
        %v2579 = vpop.f32.mrb[0].mxu0
        %2580 = vdwg.mxu0
        %2581 = vmatprep.subr.mxu0 0.0
        %v2582 = vand.u32 %v1640, 4294901760
        %2583 = vmatpush1.msra.mxu0 %v2582
        %2584 = vmatprep.subr.mxu0 0.0
        %v2585 = vand.u32 %v1641, 4294901760
        %2586 = vmatpush1.msra.mxu0 %v2585
        %2587 = vmatprep.subr.mxu0 0.0
        %v2588 = vand.u32 %v1642, 4294901760
        %2589 = vmatpush1.msra.mxu0 %v2588
        %2590 = vmatprep.subr.mxu0 0.0
        %v2591 = vand.u32 %v1643, 4294901760
        %2592 = vmatpush1.msra.mxu0 %v2591
        %2593 = vmatprep.subr.mxu0 0.0
        %2594 = vmatpush1.msra.mxu0 0.0
        %2595 = vmatprep.subr.mxu0 0.0
        %2596 = vmatpush1.msra.mxu0 0.0
        %2597 = vmatprep.subr.mxu0 0.0
        %2598 = vmatpush1.msra.mxu0 0.0
        %2599 = vmatprep.subr.mxu0 0.0
        %2600 = vmatpush1.msra.mxu0 0.0
        %2601 = vmatprep.subr.mxu0 0.0
        %2602 = vmatpush1.msra.mxu0 0.0
        %2603 = vmatprep.subr.mxu0 0.0
        %2604 = vmatpush1.msra.mxu0 0.0
        %2605 = vmatprep.subr.mxu0 0.0
        %2606 = vmatpush1.msra.mxu0 0.0
        %2607 = vmatprep.subr.mxu0 0.0
        %2608 = vmatpush1.msra.mxu0 0.0
        %2609 = vmatprep.subr.mxu0 0.0
        %2610 = vmatpush1.msra.mxu0 0.0
        %2611 = vmatprep.subr.mxu0 0.0
        %2612 = vmatpush1.msra.mxu0 0.0
        %2613 = vmatprep.subr.mxu0 0.0
        %2614 = vmatpush1.msra.mxu0 0.0
        %2615 = vmatprep.subr.mxu0 0.0
        %2616 = vmatpush1.msra.mxu0 0.0
        %2617 = vmatprep.subr.mxu0 0.0
        %2618 = vmatpush1.msra.mxu0 0.0
        %2619 = vmatprep.subr.mxu0 0.0
        %2620 = vmatpush1.msra.mxu0 0.0
        %2621 = vmatprep.subr.mxu0 0.0
        %2622 = vmatpush1.msra.mxu0 0.0
        %2623 = vmatprep.subr.mxu0 0.0
        %2624 = vmatpush1.msra.mxu0 0.0
        %2625 = vmatprep.subr.mxu0 0.0
        %2626 = vmatpush1.msra.mxu0 0.0
        %2627 = vmatprep.subr.mxu0 0.0
        %2628 = vmatpush1.msra.mxu0 0.0
        %2629 = vmatprep.subr.mxu0 0.0
        %2630 = vmatpush1.msra.mxu0 0.0
        %2631 = vmatprep.subr.mxu0 0.0
        %2632 = vmatpush1.msra.mxu0 0.0
        %2633 = vmatprep.subr.mxu0 0.0
        %2634 = vmatpush1.msra.mxu0 0.0
        %2635 = vmatprep.subr.mxu0 0.0
        %2636 = vmatpush1.msra.mxu0 0.0
        %2637 = vmatprep.subr.mxu0 0.0
        %2638 = vmatpush1.msra.mxu0 0.0
        %2639 = vmatprep.subr.mxu0 0.0
        %2640 = vmatpush1.msra.mxu0 0.0
        %2641 = vmatprep.subr.mxu0 0.0
        %2642 = vmatpush1.msra.mxu0 0.0
        %2643 = vmatprep.subr.mxu0 0.0
        %2644 = vmatpush1.msra.mxu0 0.0
        %2645 = vmatprep.subr.mxu0 0.0
        %2646 = vmatpush1.msra.mxu0 0.0
        %2647 = vmatprep.subr.mxu0 0.0
        %2648 = vmatpush1.msra.mxu0 0.0
        %2649 = vmatprep.mubr.f32.mxu0 0.0
        %v2650 = vand.u32 %v2169, 4294901760
        %2651 = vmatmul.mubr.f32.gmra.mrb[0].mxu0 %v2650
        %v2652 = vpop.f32.mrb[0].mxu0
        %v2653 = vadd.f32 %v2578, %v2652
        %v2654 = vpop.f32.mrb[0].mxu0
        %2655 = vdwg.mxu0
        %v2656 = vadd.f32 %v1621, %v2653
        %v2657 = vxor.u32 %v2656, 2147483648
        %v2658 = vmul.f32 %v2657, 1.442695
        %v2659 = vpow.pop %v2658
        %v2660 = vadd.f32 %v2659, 1.0
        %v2661 = vrcp.pop %v2660
        %v2662 = vmul.f32 1.0, %v2661
        %v2663 = vtanh.pop %v2656
        %v2664 = vmul.f32 %v2662, %v2163
        %2666 = vrot.lane.b32.xlu0 %v2663, 64
        %v2667 = vpop.permute.xlu0 %2666
        %v2669 = vmul.f32 %v2662, %v2667
        %2671 = vrot.lane.b32.xlu0 %v2669, 32
        %v2672 = vpop.permute.xlu0 %2671
        %v2674 = vadd.f32 %v2664, %v2672
        %v2675 = vtanh.pop %v2674
        %2677 = vrot.lane.b32.xlu0 %v2675, 64
        %v2678 = vpop.permute.xlu0 %2677
        %v2680 = vmul.f32 %v2662, %v2678
        %v2681 = vsub.f32 %v2674, %v2163
        %2683 = vset.pattern.permute.xlu0 0
        %2684 = vperm.xlu0 %2683, %v1637
        %v2685 = vpop.permute.xlu0 %2684
        %v2687 = vmul.f32 %v2685, %v2681
        %v2688 = vadd.f32 %v2163, %v2687
        %v2689 = vsub.f32 %v2680, %v2165
        %v2690 = vmul.f32 %v2685, %v2689
        %v2691 = vadd.f32 %v2165, %v2690
        %2693 = vrot.lane.b32.xlu0 %v2691, 32
        %v2694 = vpop.permute.xlu0 %2693
        %v2695 = vsel %vm1009, %v2694, 0
        %2697 = vmatprep.subr.mxu0 0.0
        %v2698 = vand.u32 %v1640, 4294901760
        %2699 = vmatpush1.msra.mxu0 %v2698
        %2700 = vmatprep.subr.mxu0 0.0
        %v2701 = vand.u32 %v1641, 4294901760
        %2702 = vmatpush1.msra.mxu0 %v2701
        %2703 = vmatprep.subr.mxu0 0.0
        %v2704 = vand.u32 %v1642, 4294901760
        %2705 = vmatpush1.msra.mxu0 %v2704
        %2706 = vmatprep.subr.mxu0 0.0
        %v2707 = vand.u32 %v1643, 4294901760
        %2708 = vmatpush1.msra.mxu0 %v2707
        %2709 = vmatprep.subr.mxu0 0.0
        %2710 = vmatpush1.msra.mxu0 0.0
        %2711 = vmatprep.subr.mxu0 0.0
        %2712 = vmatpush1.msra.mxu0 0.0
        %2713 = vmatprep.subr.mxu0 0.0
        %2714 = vmatpush1.msra.mxu0 0.0
        %2715 = vmatprep.subr.mxu0 0.0
        %2716 = vmatpush1.msra.mxu0 0.0
        %2717 = vmatprep.subr.mxu0 0.0
        %2718 = vmatpush1.msra.mxu0 0.0
        %2719 = vmatprep.subr.mxu0 0.0
        %2720 = vmatpush1.msra.mxu0 0.0
        %2721 = vmatprep.subr.mxu0 0.0
        %2722 = vmatpush1.msra.mxu0 0.0
        %2723 = vmatprep.subr.mxu0 0.0
        %2724 = vmatpush1.msra.mxu0 0.0
        %2725 = vmatprep.subr.mxu0 0.0
        %2726 = vmatpush1.msra.mxu0 0.0
        %2727 = vmatprep.subr.mxu0 0.0
        %2728 = vmatpush1.msra.mxu0 0.0
        %2729 = vmatprep.subr.mxu0 0.0
        %2730 = vmatpush1.msra.mxu0 0.0
        %2731 = vmatprep.subr.mxu0 0.0
        %2732 = vmatpush1.msra.mxu0 0.0
        %2733 = vmatprep.subr.mxu0 0.0
        %2734 = vmatpush1.msra.mxu0 0.0
        %2735 = vmatprep.subr.mxu0 0.0
        %2736 = vmatpush1.msra.mxu0 0.0
        %2737 = vmatprep.subr.mxu0 0.0
        %2738 = vmatpush1.msra.mxu0 0.0
        %2739 = vmatprep.subr.mxu0 0.0
        %2740 = vmatpush1.msra.mxu0 0.0
        %2741 = vmatprep.subr.mxu0 0.0
        %2742 = vmatpush1.msra.mxu0 0.0
        %2743 = vmatprep.subr.mxu0 0.0
        %2744 = vmatpush1.msra.mxu0 0.0
        %2745 = vmatprep.subr.mxu0 0.0
        %2746 = vmatpush1.msra.mxu0 0.0
        %2747 = vmatprep.subr.mxu0 0.0
        %2748 = vmatpush1.msra.mxu0 0.0
        %2749 = vmatprep.subr.mxu0 0.0
        %2750 = vmatpush1.msra.mxu0 0.0
        %2751 = vmatprep.subr.mxu0 0.0
        %2752 = vmatpush1.msra.mxu0 0.0
        %2753 = vmatprep.subr.mxu0 0.0
        %2754 = vmatpush1.msra.mxu0 0.0
        %2755 = vmatprep.subr.mxu0 0.0
        %2756 = vmatpush1.msra.mxu0 0.0
        %2757 = vmatprep.subr.mxu0 0.0
        %2758 = vmatpush1.msra.mxu0 0.0
        %2759 = vmatprep.subr.mxu0 0.0
        %2760 = vmatpush1.msra.mxu0 0.0
        %2761 = vmatprep.subr.mxu0 0.0
        %2762 = vmatpush1.msra.mxu0 0.0
        %2763 = vmatprep.subr.mxu0 0.0
        %2764 = vmatpush1.msra.mxu0 0.0
        %2765 = vmatprep.mubr.f32.mxu0 0.0
        %v2766 = vand.u32 %v2695, 4294901760
        %v2767 = vsub.f32 %v2695, %v2766
        %v2768 = vand.u32 %v2767, 4294901760
        %v2769 = vsub.f32 %v2767, %v2768
        %v2770 = vand.u32 %v2769, 4294901760
        %2771 = vmatmul.mubr.f32.gmra.mrb[0].mxu0 %v2770
        %v2772 = vpop.f32.mrb[0].mxu0
        %v2773 = vadd.f32 0.0, %v2772
        %v2774 = vpop.f32.mrb[0].mxu0
        %2775 = vdwg.mxu0
        %2776 = vmatprep.subr.mxu0 0.0
        %v2777 = vand.u32 %v1640, 4294901760
        %v2778 = vsub.f32 %v1640, %v2777
        %v2779 = vand.u32 %v2778, 4294901760
        %v2780 = vsub.f32 %v2778, %v2779
        %v2781 = vand.u32 %v2780, 4294901760
        %2782 = vmatpush1.msra.mxu0 %v2781
        %2783 = vmatprep.subr.mxu0 0.0
        %v2784 = vand.u32 %v1641, 4294901760
        %v2785 = vsub.f32 %v1641, %v2784
        %v2786 = vand.u32 %v2785, 4294901760
        %v2787 = vsub.f32 %v2785, %v2786
        %v2788 = vand.u32 %v2787, 4294901760
        %2789 = vmatpush1.msra.mxu0 %v2788
        %2790 = vmatprep.subr.mxu0 0.0
        %v2791 = vand.u32 %v1642, 4294901760
        %v2792 = vsub.f32 %v1642, %v2791
        %v2793 = vand.u32 %v2792, 4294901760
        %v2794 = vsub.f32 %v2792, %v2793
        %v2795 = vand.u32 %v2794, 4294901760
        %2796 = vmatpush1.msra.mxu0 %v2795
        %2797 = vmatprep.subr.mxu0 0.0
        %v2798 = vand.u32 %v1643, 4294901760
        %v2799 = vsub.f32 %v1643, %v2798
        %v2800 = vand.u32 %v2799, 4294901760
        %v2801 = vsub.f32 %v2799, %v2800
        %v2802 = vand.u32 %v2801, 4294901760
        %2803 = vmatpush1.msra.mxu0 %v2802
        %2804 = vmatprep.subr.mxu0 0.0
        %2805 = vmatpush1.msra.mxu0 0.0
        %2806 = vmatprep.subr.mxu0 0.0
        %2807 = vmatpush1.msra.mxu0 0.0
        %2808 = vmatprep.subr.mxu0 0.0
        %2809 = vmatpush1.msra.mxu0 0.0
        %2810 = vmatprep.subr.mxu0 0.0
        %2811 = vmatpush1.msra.mxu0 0.0
        %2812 = vmatprep.subr.mxu0 0.0
        %2813 = vmatpush1.msra.mxu0 0.0
        %2814 = vmatprep.subr.mxu0 0.0
        %2815 = vmatpush1.msra.mxu0 0.0
        %2816 = vmatprep.subr.mxu0 0.0
        %2817 = vmatpush1.msra.mxu0 0.0
        %2818 = vmatprep.subr.mxu0 0.0
        %2819 = vmatpush1.msra.mxu0 0.0
        %2820 = vmatprep.subr.mxu0 0.0
        %2821 = vmatpush1.msra.mxu0 0.0
        %2822 = vmatprep.subr.mxu0 0.0
        %2823 = vmatpush1.msra.mxu0 0.0
        %2824 = vmatprep.subr.mxu0 0.0
        %2825 = vmatpush1.msra.mxu0 0.0
        %2826 = vmatprep.subr.mxu0 0.0
        %2827 = vmatpush1.msra.mxu0 0.0
        %2828 = vmatprep.subr.mxu0 0.0
        %2829 = vmatpush1.msra.mxu0 0.0
        %2830 = vmatprep.subr.mxu0 0.0
        %2831 = vmatpush1.msra.mxu0 0.0
        %2832 = vmatprep.subr.mxu0 0.0
        %2833 = vmatpush1.msra.mxu0 0.0
        %2834 = vmatprep.subr.mxu0 0.0
        %2835 = vmatpush1.msra.mxu0 0.0
        %2836 = vmatprep.subr.mxu0 0.0
        %2837 = vmatpush1.msra.mxu0 0.0
        %2838 = vmatprep.subr.mxu0 0.0
        %2839 = vmatpush1.msra.mxu0 0.0
        %2840 = vmatprep.subr.mxu0 0.0
        %2841 = vmatpush1.msra.mxu0 0.0
        %2842 = vmatprep.subr.mxu0 0.0
        %2843 = vmatpush1.msra.mxu0 0.0
        %2844 = vmatprep.subr.mxu0 0.0
        %2845 = vmatpush1.msra.mxu0 0.0
        %2846 = vmatprep.subr.mxu0 0.0
        %2847 = vmatpush1.msra.mxu0 0.0
        %2848 = vmatprep.subr.mxu0 0.0
        %2849 = vmatpush1.msra.mxu0 0.0
        %2850 = vmatprep.subr.mxu0 0.0
        %2851 = vmatpush1.msra.mxu0 0.0
        %2852 = vmatprep.subr.mxu0 0.0
        %2853 = vmatpush1.msra.mxu0 0.0
        %2854 = vmatprep.subr.mxu0 0.0
        %2855 = vmatpush1.msra.mxu0 0.0
        %2856 = vmatprep.subr.mxu0 0.0
        %2857 = vmatpush1.msra.mxu0 0.0
        %2858 = vmatprep.subr.mxu0 0.0
        %2859 = vmatpush1.msra.mxu0 0.0
        %2860 = vmatprep.mubr.f32.mxu0 0.0
        %v2861 = vand.u32 %v2695, 4294901760
        %2862 = vmatmul.mubr.f32.gmra.mrb[0].mxu0 %v2861
        %v2863 = vpop.f32.mrb[0].mxu0
        %v2864 = vadd.f32 %v2773, %v2863
        %v2865 = vpop.f32.mrb[0].mxu0
        %2866 = vdwg.mxu0
        %2867 = vmatprep.subr.mxu0 0.0
        %v2868 = vand.u32 %v1640, 4294901760
        %v2869 = vsub.f32 %v1640, %v2868
        %2870 = vmatpush1.msra.mxu0 %v2869
        %2871 = vmatprep.subr.mxu0 0.0
        %v2872 = vand.u32 %v1641, 4294901760
        %v2873 = vsub.f32 %v1641, %v2872
        %2874 = vmatpush1.msra.mxu0 %v2873
        %2875 = vmatprep.subr.mxu0 0.0
        %v2876 = vand.u32 %v1642, 4294901760
        %v2877 = vsub.f32 %v1642, %v2876
        %2878 = vmatpush1.msra.mxu0 %v2877
        %2879 = vmatprep.subr.mxu0 0.0
        %v2880 = vand.u32 %v1643, 4294901760
        %v2881 = vsub.f32 %v1643, %v2880
        %2882 = vmatpush1.msra.mxu0 %v2881
        %2883 = vmatprep.subr.mxu0 0.0
        %2884 = vmatpush1.msra.mxu0 0.0
        %2885 = vmatprep.subr.mxu0 0.0
        %2886 = vmatpush1.msra.mxu0 0.0
        %2887 = vmatprep.subr.mxu0 0.0
        %2888 = vmatpush1.msra.mxu0 0.0
        %2889 = vmatprep.subr.mxu0 0.0
        %2890 = vmatpush1.msra.mxu0 0.0
        %2891 = vmatprep.subr.mxu0 0.0
        %2892 = vmatpush1.msra.mxu0 0.0
        %2893 = vmatprep.subr.mxu0 0.0
        %2894 = vmatpush1.msra.mxu0 0.0
        %2895 = vmatprep.subr.mxu0 0.0
        %2896 = vmatpush1.msra.mxu0 0.0
        %2897 = vmatprep.subr.mxu0 0.0
        %2898 = vmatpush1.msra.mxu0 0.0
        %2899 = vmatprep.subr.mxu0 0.0
        %2900 = vmatpush1.msra.mxu0 0.0
        %2901 = vmatprep.subr.mxu0 0.0
        %2902 = vmatpush1.msra.mxu0 0.0
        %2903 = vmatprep.subr.mxu0 0.0
        %2904 = vmatpush1.msra.mxu0 0.0
        %2905 = vmatprep.subr.mxu0 0.0
        %2906 = vmatpush1.msra.mxu0 0.0
        %2907 = vmatprep.subr.mxu0 0.0
        %2908 = vmatpush1.msra.mxu0 0.0
        %2909 = vmatprep.subr.mxu0 0.0
        %2910 = vmatpush1.msra.mxu0 0.0
        %2911 = vmatprep.subr.mxu0 0.0
        %2912 = vmatpush1.msra.mxu0 0.0
        %2913 = vmatprep.subr.mxu0 0.0
        %2914 = vmatpush1.msra.mxu0 0.0
        %2915 = vmatprep.subr.mxu0 0.0
        %2916 = vmatpush1.msra.mxu0 0.0
        %2917 = vmatprep.subr.mxu0 0.0
        %2918 = vmatpush1.msra.mxu0 0.0
        %2919 = vmatprep.subr.mxu0 0.0
        %2920 = vmatpush1.msra.mxu0 0.0
        %2921 = vmatprep.subr.mxu0 0.0
        %2922 = vmatpush1.msra.mxu0 0.0
        %2923 = vmatprep.subr.mxu0 0.0
        %2924 = vmatpush1.msra.mxu0 0.0
        %2925 = vmatprep.subr.mxu0 0.0
        %2926 = vmatpush1.msra.mxu0 0.0
        %2927 = vmatprep.subr.mxu0 0.0
        %2928 = vmatpush1.msra.mxu0 0.0
        %2929 = vmatprep.subr.mxu0 0.0
        %2930 = vmatpush1.msra.mxu0 0.0
        %2931 = vmatprep.subr.mxu0 0.0
        %2932 = vmatpush1.msra.mxu0 0.0
        %2933 = vmatprep.subr.mxu0 0.0
        %2934 = vmatpush1.msra.mxu0 0.0
        %2935 = vmatprep.subr.mxu0 0.0
        %2936 = vmatpush1.msra.mxu0 0.0
        %2937 = vmatprep.subr.mxu0 0.0
        %2938 = vmatpush1.msra.mxu0 0.0
        %2939 = vmatprep.mubr.f32.mxu0 0.0
        %v2940 = vand.u32 %v2695, 4294901760
        %v2941 = vsub.f32 %v2695, %v2940
        %2942 = vmatmul.mubr.f32.gmra.mrb[0].mxu0 %v2941
        %v2943 = vpop.f32.mrb[0].mxu0
        %v2944 = vadd.f32 %v2864, %v2943
        %v2945 = vpop.f32.mrb[0].mxu0
        %2946 = vdwg.mxu0
        %2947 = vmatprep.subr.mxu0 0.0
        %v2948 = vand.u32 %v1640, 4294901760
        %2949 = vmatpush1.msra.mxu0 %v2948
        %2950 = vmatprep.subr.mxu0 0.0
        %v2951 = vand.u32 %v1641, 4294901760
        %2952 = vmatpush1.msra.mxu0 %v2951
        %2953 = vmatprep.subr.mxu0 0.0
        %v2954 = vand.u32 %v1642, 4294901760
        %2955 = vmatpush1.msra.mxu0 %v2954
        %2956 = vmatprep.subr.mxu0 0.0
        %v2957 = vand.u32 %v1643, 4294901760
        %2958 = vmatpush1.msra.mxu0 %v2957
        %2959 = vmatprep.subr.mxu0 0.0
        %2960 = vmatpush1.msra.mxu0 0.0
        %2961 = vmatprep.subr.mxu0 0.0
        %2962 = vmatpush1.msra.mxu0 0.0
        %2963 = vmatprep.subr.mxu0 0.0
        %2964 = vmatpush1.msra.mxu0 0.0
        %2965 = vmatprep.subr.mxu0 0.0
        %2966 = vmatpush1.msra.mxu0 0.0
        %2967 = vmatprep.subr.mxu0 0.0
        %2968 = vmatpush1.msra.mxu0 0.0
        %2969 = vmatprep.subr.mxu0 0.0
        %2970 = vmatpush1.msra.mxu0 0.0
        %2971 = vmatprep.subr.mxu0 0.0
        %2972 = vmatpush1.msra.mxu0 0.0
        %2973 = vmatprep.subr.mxu0 0.0
        %2974 = vmatpush1.msra.mxu0 0.0
        %2975 = vmatprep.subr.mxu0 0.0
        %2976 = vmatpush1.msra.mxu0 0.0
        %2977 = vmatprep.subr.mxu0 0.0
        %2978 = vmatpush1.msra.mxu0 0.0
        %2979 = vmatprep.subr.mxu0 0.0
        %2980 = vmatpush1.msra.mxu0 0.0
        %2981 = vmatprep.subr.mxu0 0.0
        %2982 = vmatpush1.msra.mxu0 0.0
        %2983 = vmatprep.subr.mxu0 0.0
        %2984 = vmatpush1.msra.mxu0 0.0
        %2985 = vmatprep.subr.mxu0 0.0
        %2986 = vmatpush1.msra.mxu0 0.0
        %2987 = vmatprep.subr.mxu0 0.0
        %2988 = vmatpush1.msra.mxu0 0.0
        %2989 = vmatprep.subr.mxu0 0.0
        %2990 = vmatpush1.msra.mxu0 0.0
        %2991 = vmatprep.subr.mxu0 0.0
        %2992 = vmatpush1.msra.mxu0 0.0
        %2993 = vmatprep.subr.mxu0 0.0
        %2994 = vmatpush1.msra.mxu0 0.0
        %2995 = vmatprep.subr.mxu0 0.0
        %2996 = vmatpush1.msra.mxu0 0.0
        %2997 = vmatprep.subr.mxu0 0.0
        %2998 = vmatpush1.msra.mxu0 0.0
        %2999 = vmatprep.subr.mxu0 0.0
        %3000 = vmatpush1.msra.mxu0 0.0
        %3001 = vmatprep.subr.mxu0 0.0
        %3002 = vmatpush1.msra.mxu0 0.0
        %3003 = vmatprep.subr.mxu0 0.0
        %3004 = vmatpush1.msra.mxu0 0.0
        %3005 = vmatprep.subr.mxu0 0.0
        %3006 = vmatpush1.msra.mxu0 0.0
        %3007 = vmatprep.subr.mxu0 0.0
        %3008 = vmatpush1.msra.mxu0 0.0
        %3009 = vmatprep.subr.mxu0 0.0
        %3010 = vmatpush1.msra.mxu0 0.0
        %3011 = vmatprep.subr.mxu0 0.0
        %3012 = vmatpush1.msra.mxu0 0.0
        %3013 = vmatprep.subr.mxu0 0.0
        %3014 = vmatpush1.msra.mxu0 0.0
        %3015 = vmatprep.mubr.f32.mxu0 0.0
        %v3016 = vand.u32 %v2695, 4294901760
        %v3017 = vsub.f32 %v2695, %v3016
        %v3018 = vand.u32 %v3017, 4294901760
        %3019 = vmatmul.mubr.f32.gmra.mrb[0].mxu0 %v3018
        %v3020 = vpop.f32.mrb[0].mxu0
        %v3021 = vadd.f32 %v2944, %v3020
        %v3022 = vpop.f32.mrb[0].mxu0
        %3023 = vdwg.mxu0
        %3024 = vmatprep.subr.mxu0 0.0
        %v3025 = vand.u32 %v1640, 4294901760
        %v3026 = vsub.f32 %v1640, %v3025
        %v3027 = vand.u32 %v3026, 4294901760
        %3028 = vmatpush1.msra.mxu0 %v3027
        %3029 = vmatprep.subr.mxu0 0.0
        %v3030 = vand.u32 %v1641, 4294901760
        %v3031 = vsub.f32 %v1641, %v3030
        %v3032 = vand.u32 %v3031, 4294901760
        %3033 = vmatpush1.msra.mxu0 %v3032
        %3034 = vmatprep.subr.mxu0 0.0
        %v3035 = vand.u32 %v1642, 4294901760
        %v3036 = vsub.f32 %v1642, %v3035
        %v3037 = vand.u32 %v3036, 4294901760
        %3038 = vmatpush1.msra.mxu0 %v3037
        %3039 = vmatprep.subr.mxu0 0.0
        %v3040 = vand.u32 %v1643, 4294901760
        %v3041 = vsub.f32 %v1643, %v3040
        %v3042 = vand.u32 %v3041, 4294901760
        %3043 = vmatpush1.msra.mxu0 %v3042
        %3044 = vmatprep.subr.mxu0 0.0
        %3045 = vmatpush1.msra.mxu0 0.0
        %3046 = vmatprep.subr.mxu0 0.0
        %3047 = vmatpush1.msra.mxu0 0.0
        %3048 = vmatprep.subr.mxu0 0.0
        %3049 = vmatpush1.msra.mxu0 0.0
        %3050 = vmatprep.subr.mxu0 0.0
        %3051 = vmatpush1.msra.mxu0 0.0
        %3052 = vmatprep.subr.mxu0 0.0
        %3053 = vmatpush1.msra.mxu0 0.0
        %3054 = vmatprep.subr.mxu0 0.0
        %3055 = vmatpush1.msra.mxu0 0.0
        %3056 = vmatprep.subr.mxu0 0.0
        %3057 = vmatpush1.msra.mxu0 0.0
        %3058 = vmatprep.subr.mxu0 0.0
        %3059 = vmatpush1.msra.mxu0 0.0
        %3060 = vmatprep.subr.mxu0 0.0
        %3061 = vmatpush1.msra.mxu0 0.0
        %3062 = vmatprep.subr.mxu0 0.0
        %3063 = vmatpush1.msra.mxu0 0.0
        %3064 = vmatprep.subr.mxu0 0.0
        %3065 = vmatpush1.msra.mxu0 0.0
        %3066 = vmatprep.subr.mxu0 0.0
        %3067 = vmatpush1.msra.mxu0 0.0
        %3068 = vmatprep.subr.mxu0 0.0
        %3069 = vmatpush1.msra.mxu0 0.0
        %3070 = vmatprep.subr.mxu0 0.0
        %3071 = vmatpush1.msra.mxu0 0.0
        %3072 = vmatprep.subr.mxu0 0.0
        %3073 = vmatpush1.msra.mxu0 0.0
        %3074 = vmatprep.subr.mxu0 0.0
        %3075 = vmatpush1.msra.mxu0 0.0
        %3076 = vmatprep.subr.mxu0 0.0
        %3077 = vmatpush1.msra.mxu0 0.0
        %3078 = vmatprep.subr.mxu0 0.0
        %3079 = vmatpush1.msra.mxu0 0.0
        %3080 = vmatprep.subr.mxu0 0.0
        %3081 = vmatpush1.msra.mxu0 0.0
        %3082 = vmatprep.subr.mxu0 0.0
        %3083 = vmatpush1.msra.mxu0 0.0
        %3084 = vmatprep.subr.mxu0 0.0
        %3085 = vmatpush1.msra.mxu0 0.0
        %3086 = vmatprep.subr.mxu0 0.0
        %3087 = vmatpush1.msra.mxu0 0.0
        %3088 = vmatprep.subr.mxu0 0.0
        %3089 = vmatpush1.msra.mxu0 0.0
        %3090 = vmatprep.subr.mxu0 0.0
        %3091 = vmatpush1.msra.mxu0 0.0
        %3092 = vmatprep.subr.mxu0 0.0
        %3093 = vmatpush1.msra.mxu0 0.0
        %3094 = vmatprep.subr.mxu0 0.0
        %3095 = vmatpush1.msra.mxu0 0.0
        %3096 = vmatprep.subr.mxu0 0.0
        %3097 = vmatpush1.msra.mxu0 0.0
        %3098 = vmatprep.subr.mxu0 0.0
        %3099 = vmatpush1.msra.mxu0 0.0
        %3100 = vmatprep.mubr.f32.mxu0 0.0
        %v3101 = vand.u32 %v2695, 4294901760
        %3102 = vmatmul.mubr.f32.gmra.mrb[0].mxu0 %v3101
        %v3103 = vpop.f32.mrb[0].mxu0
        %v3104 = vadd.f32 %v3021, %v3103
        %v3105 = vpop.f32.mrb[0].mxu0
        %3106 = vdwg.mxu0
        %3107 = vmatprep.subr.mxu0 0.0
        %v3108 = vand.u32 %v1640, 4294901760
        %3109 = vmatpush1.msra.mxu0 %v3108
        %3110 = vmatprep.subr.mxu0 0.0
        %v3111 = vand.u32 %v1641, 4294901760
        %3112 = vmatpush1.msra.mxu0 %v3111
        %3113 = vmatprep.subr.mxu0 0.0
        %v3114 = vand.u32 %v1642, 4294901760
        %3115 = vmatpush1.msra.mxu0 %v3114
        %3116 = vmatprep.subr.mxu0 0.0
        %v3117 = vand.u32 %v1643, 4294901760
        %3118 = vmatpush1.msra.mxu0 %v3117
        %3119 = vmatprep.subr.mxu0 0.0
        %3120 = vmatpush1.msra.mxu0 0.0
        %3121 = vmatprep.subr.mxu0 0.0
        %3122 = vmatpush1.msra.mxu0 0.0
        %3123 = vmatprep.subr.mxu0 0.0
        %3124 = vmatpush1.msra.mxu0 0.0
        %3125 = vmatprep.subr.mxu0 0.0
        %3126 = vmatpush1.msra.mxu0 0.0
        %3127 = vmatprep.subr.mxu0 0.0
        %3128 = vmatpush1.msra.mxu0 0.0
        %3129 = vmatprep.subr.mxu0 0.0
        %3130 = vmatpush1.msra.mxu0 0.0
        %3131 = vmatprep.subr.mxu0 0.0
        %3132 = vmatpush1.msra.mxu0 0.0
        %3133 = vmatprep.subr.mxu0 0.0
        %3134 = vmatpush1.msra.mxu0 0.0
        %3135 = vmatprep.subr.mxu0 0.0
        %3136 = vmatpush1.msra.mxu0 0.0
        %3137 = vmatprep.subr.mxu0 0.0
        %3138 = vmatpush1.msra.mxu0 0.0
        %3139 = vmatprep.subr.mxu0 0.0
        %3140 = vmatpush1.msra.mxu0 0.0
        %3141 = vmatprep.subr.mxu0 0.0
        %3142 = vmatpush1.msra.mxu0 0.0
        %3143 = vmatprep.subr.mxu0 0.0
        %3144 = vmatpush1.msra.mxu0 0.0
        %3145 = vmatprep.subr.mxu0 0.0
        %3146 = vmatpush1.msra.mxu0 0.0
        %3147 = vmatprep.subr.mxu0 0.0
        %3148 = vmatpush1.msra.mxu0 0.0
        %3149 = vmatprep.subr.mxu0 0.0
        %3150 = vmatpush1.msra.mxu0 0.0
        %3151 = vmatprep.subr.mxu0 0.0
        %3152 = vmatpush1.msra.mxu0 0.0
        %3153 = vmatprep.subr.mxu0 0.0
        %3154 = vmatpush1.msra.mxu0 0.0
        %3155 = vmatprep.subr.mxu0 0.0
        %3156 = vmatpush1.msra.mxu0 0.0
        %3157 = vmatprep.subr.mxu0 0.0
        %3158 = vmatpush1.msra.mxu0 0.0
        %3159 = vmatprep.subr.mxu0 0.0
        %3160 = vmatpush1.msra.mxu0 0.0
        %3161 = vmatprep.subr.mxu0 0.0
        %3162 = vmatpush1.msra.mxu0 0.0
        %3163 = vmatprep.subr.mxu0 0.0
        %3164 = vmatpush1.msra.mxu0 0.0
        %3165 = vmatprep.subr.mxu0 0.0
        %3166 = vmatpush1.msra.mxu0 0.0
        %3167 = vmatprep.subr.mxu0 0.0
        %3168 = vmatpush1.msra.mxu0 0.0
        %3169 = vmatprep.subr.mxu0 0.0
        %3170 = vmatpush1.msra.mxu0 0.0
        %3171 = vmatprep.subr.mxu0 0.0
        %3172 = vmatpush1.msra.mxu0 0.0
        %3173 = vmatprep.subr.mxu0 0.0
        %3174 = vmatpush1.msra.mxu0 0.0
        %3175 = vmatprep.mubr.f32.mxu0 0.0
        %v3176 = vand.u32 %v2695, 4294901760
        %3177 = vmatmul.mubr.f32.gmra.mrb[0].mxu0 %v3176
        %v3178 = vpop.f32.mrb[0].mxu0
        %v3179 = vadd.f32 %v3104, %v3178
        %v3180 = vpop.f32.mrb[0].mxu0
        %3181 = vdwg.mxu0
        %v3182 = vadd.f32 %v1627, %v3179
        %v3183 = vxor.u32 %v3182, 2147483648
        %v3184 = vmul.f32 %v3183, 1.442695
        %v3185 = vpow.pop %v3184
        %v3186 = vadd.f32 %v3185, 1.0
        %v3187 = vrcp.pop %v3186
        %v3188 = vmul.f32 1.0, %v3187
        %v3189 = vtanh.pop %v3182
        %v3190 = vmul.f32 %v3188, %v2688
        %3192 = vrot.lane.b32.xlu0 %v3189, 64
        %v3193 = vpop.permute.xlu0 %3192
        %v3195 = vmul.f32 %v3188, %v3193
        %3197 = vrot.lane.b32.xlu0 %v3195, 32
        %v3198 = vpop.permute.xlu0 %3197
        %v3200 = vadd.f32 %v3190, %v3198
        %v3201 = vtanh.pop %v3200
        %3203 = vrot.lane.b32.xlu0 %v3201, 64
        %v3204 = vpop.permute.xlu0 %3203
        %v3206 = vmul.f32 %v3188, %v3204
        %v3207 = vsub.f32 %v3200, %v2688
        %3209 = vset.pattern.permute.xlu0 0
        %3210 = vperm.xlu0 %3209, %v1638
        %v3211 = vpop.permute.xlu0 %3210
        %v3213 = vmul.f32 %v3211, %v3207
        %v3214 = vadd.f32 %v2688, %v3213
        %v3215 = vsub.f32 %v3206, %v2691
        %v3216 = vmul.f32 %v3211, %v3215
        %v3217 = vadd.f32 %v2691, %v3216
        %3219 = vrot.lane.b32.xlu0 %v3217, 32
        %v3220 = vpop.permute.xlu0 %3219
        %v3221 = vsel %vm1009, %v3220, 0
        %3223 = vmatprep.subr.mxu0 0.0
        %v3224 = vand.u32 %v1640, 4294901760
        %3225 = vmatpush1.msra.mxu0 %v3224
        %3226 = vmatprep.subr.mxu0 0.0
        %v3227 = vand.u32 %v1641, 4294901760
        %3228 = vmatpush1.msra.mxu0 %v3227
        %3229 = vmatprep.subr.mxu0 0.0
        %v3230 = vand.u32 %v1642, 4294901760
        %3231 = vmatpush1.msra.mxu0 %v3230
        %3232 = vmatprep.subr.mxu0 0.0
        %v3233 = vand.u32 %v1643, 4294901760
        %3234 = vmatpush1.msra.mxu0 %v3233
        %3235 = vmatprep.subr.mxu0 0.0
        %3236 = vmatpush1.msra.mxu0 0.0
        %3237 = vmatprep.subr.mxu0 0.0
        %3238 = vmatpush1.msra.mxu0 0.0
        %3239 = vmatprep.subr.mxu0 0.0
        %3240 = vmatpush1.msra.mxu0 0.0
        %3241 = vmatprep.subr.mxu0 0.0
        %3242 = vmatpush1.msra.mxu0 0.0
        %3243 = vmatprep.subr.mxu0 0.0
        %3244 = vmatpush1.msra.mxu0 0.0
        %3245 = vmatprep.subr.mxu0 0.0
        %3246 = vmatpush1.msra.mxu0 0.0
        %3247 = vmatprep.subr.mxu0 0.0
        %3248 = vmatpush1.msra.mxu0 0.0
        %3249 = vmatprep.subr.mxu0 0.0
        %3250 = vmatpush1.msra.mxu0 0.0
        %3251 = vmatprep.subr.mxu0 0.0
        %3252 = vmatpush1.msra.mxu0 0.0
        %3253 = vmatprep.subr.mxu0 0.0
        %3254 = vmatpush1.msra.mxu0 0.0
        %3255 = vmatprep.subr.mxu0 0.0
        %3256 = vmatpush1.msra.mxu0 0.0
        %3257 = vmatprep.subr.mxu0 0.0
        %3258 = vmatpush1.msra.mxu0 0.0
        %3259 = vmatprep.subr.mxu0 0.0
        %3260 = vmatpush1.msra.mxu0 0.0
        %3261 = vmatprep.subr.mxu0 0.0
        %3262 = vmatpush1.msra.mxu0 0.0
        %3263 = vmatprep.subr.mxu0 0.0
        %3264 = vmatpush1.msra.mxu0 0.0
        %3265 = vmatprep.subr.mxu0 0.0
        %3266 = vmatpush1.msra.mxu0 0.0
        %3267 = vmatprep.subr.mxu0 0.0
        %3268 = vmatpush1.msra.mxu0 0.0
        %3269 = vmatprep.subr.mxu0 0.0
        %3270 = vmatpush1.msra.mxu0 0.0
        %3271 = vmatprep.subr.mxu0 0.0
        %3272 = vmatpush1.msra.mxu0 0.0
        %3273 = vmatprep.subr.mxu0 0.0
        %3274 = vmatpush1.msra.mxu0 0.0
        %3275 = vmatprep.subr.mxu0 0.0
        %3276 = vmatpush1.msra.mxu0 0.0
        %3277 = vmatprep.subr.mxu0 0.0
        %3278 = vmatpush1.msra.mxu0 0.0
        %3279 = vmatprep.subr.mxu0 0.0
        %3280 = vmatpush1.msra.mxu0 0.0
        %3281 = vmatprep.subr.mxu0 0.0
        %3282 = vmatpush1.msra.mxu0 0.0
        %3283 = vmatprep.subr.mxu0 0.0
        %3284 = vmatpush1.msra.mxu0 0.0
        %3285 = vmatprep.subr.mxu0 0.0
        %3286 = vmatpush1.msra.mxu0 0.0
        %3287 = vmatprep.subr.mxu0 0.0
        %3288 = vmatpush1.msra.mxu0 0.0
        %3289 = vmatprep.subr.mxu0 0.0
        %3290 = vmatpush1.msra.mxu0 0.0
        %3291 = vmatprep.mubr.f32.mxu0 0.0
        %v3292 = vand.u32 %v3221, 4294901760
        %v3293 = vsub.f32 %v3221, %v3292
        %v3294 = vand.u32 %v3293, 4294901760
        %v3295 = vsub.f32 %v3293, %v3294
        %v3296 = vand.u32 %v3295, 4294901760
        %3297 = vmatmul.mubr.f32.gmra.mrb[0].mxu0 %v3296
        %v3298 = vpop.f32.mrb[0].mxu0
        %v3299 = vadd.f32 0.0, %v3298
        %v3300 = vpop.f32.mrb[0].mxu0
        %3301 = vdwg.mxu0
        %3302 = vmatprep.subr.mxu0 0.0
        %v3303 = vand.u32 %v1640, 4294901760
        %v3304 = vsub.f32 %v1640, %v3303
        %v3305 = vand.u32 %v3304, 4294901760
        %v3306 = vsub.f32 %v3304, %v3305
        %v3307 = vand.u32 %v3306, 4294901760
        %3308 = vmatpush1.msra.mxu0 %v3307
        %3309 = vmatprep.subr.mxu0 0.0
        %v3310 = vand.u32 %v1641, 4294901760
        %v3311 = vsub.f32 %v1641, %v3310
        %v3312 = vand.u32 %v3311, 4294901760
        %v3313 = vsub.f32 %v3311, %v3312
        %v3314 = vand.u32 %v3313, 4294901760
        %3315 = vmatpush1.msra.mxu0 %v3314
        %3316 = vmatprep.subr.mxu0 0.0
        %v3317 = vand.u32 %v1642, 4294901760
        %v3318 = vsub.f32 %v1642, %v3317
        %v3319 = vand.u32 %v3318, 4294901760
        %v3320 = vsub.f32 %v3318, %v3319
        %v3321 = vand.u32 %v3320, 4294901760
        %3322 = vmatpush1.msra.mxu0 %v3321
        %3323 = vmatprep.subr.mxu0 0.0
        %v3324 = vand.u32 %v1643, 4294901760
        %v3325 = vsub.f32 %v1643, %v3324
        %v3326 = vand.u32 %v3325, 4294901760
        %v3327 = vsub.f32 %v3325, %v3326
        %v3328 = vand.u32 %v3327, 4294901760
        %3329 = vmatpush1.msra.mxu0 %v3328
        %3330 = vmatprep.subr.mxu0 0.0
        %3331 = vmatpush1.msra.mxu0 0.0
        %3332 = vmatprep.subr.mxu0 0.0
        %3333 = vmatpush1.msra.mxu0 0.0
        %3334 = vmatprep.subr.mxu0 0.0
        %3335 = vmatpush1.msra.mxu0 0.0
        %3336 = vmatprep.subr.mxu0 0.0
        %3337 = vmatpush1.msra.mxu0 0.0
        %3338 = vmatprep.subr.mxu0 0.0
        %3339 = vmatpush1.msra.mxu0 0.0
        %3340 = vmatprep.subr.mxu0 0.0
        %3341 = vmatpush1.msra.mxu0 0.0
        %3342 = vmatprep.subr.mxu0 0.0
        %3343 = vmatpush1.msra.mxu0 0.0
        %3344 = vmatprep.subr.mxu0 0.0
        %3345 = vmatpush1.msra.mxu0 0.0
        %3346 = vmatprep.subr.mxu0 0.0
        %3347 = vmatpush1.msra.mxu0 0.0
        %3348 = vmatprep.subr.mxu0 0.0
        %3349 = vmatpush1.msra.mxu0 0.0
        %3350 = vmatprep.subr.mxu0 0.0
        %3351 = vmatpush1.msra.mxu0 0.0
        %3352 = vmatprep.subr.mxu0 0.0
        %3353 = vmatpush1.msra.mxu0 0.0
        %3354 = vmatprep.subr.mxu0 0.0
        %3355 = vmatpush1.msra.mxu0 0.0
        %3356 = vmatprep.subr.mxu0 0.0
        %3357 = vmatpush1.msra.mxu0 0.0
        %3358 = vmatprep.subr.mxu0 0.0
        %3359 = vmatpush1.msra.mxu0 0.0
        %3360 = vmatprep.subr.mxu0 0.0
        %3361 = vmatpush1.msra.mxu0 0.0
        %3362 = vmatprep.subr.mxu0 0.0
        %3363 = vmatpush1.msra.mxu0 0.0
        %3364 = vmatprep.subr.mxu0 0.0
        %3365 = vmatpush1.msra.mxu0 0.0
        %3366 = vmatprep.subr.mxu0 0.0
        %3367 = vmatpush1.msra.mxu0 0.0
        %3368 = vmatprep.subr.mxu0 0.0
        %3369 = vmatpush1.msra.mxu0 0.0
        %3370 = vmatprep.subr.mxu0 0.0
        %3371 = vmatpush1.msra.mxu0 0.0
        %3372 = vmatprep.subr.mxu0 0.0
        %3373 = vmatpush1.msra.mxu0 0.0
        %3374 = vmatprep.subr.mxu0 0.0
        %3375 = vmatpush1.msra.mxu0 0.0
        %3376 = vmatprep.subr.mxu0 0.0
        %3377 = vmatpush1.msra.mxu0 0.0
        %3378 = vmatprep.subr.mxu0 0.0
        %3379 = vmatpush1.msra.mxu0 0.0
        %3380 = vmatprep.subr.mxu0 0.0
        %3381 = vmatpush1.msra.mxu0 0.0
        %3382 = vmatprep.subr.mxu0 0.0
        %3383 = vmatpush1.msra.mxu0 0.0
        %3384 = vmatprep.subr.mxu0 0.0
        %3385 = vmatpush1.msra.mxu0 0.0
        %3386 = vmatprep.mubr.f32.mxu0 0.0
        %v3387 = vand.u32 %v3221, 4294901760
        %3388 = vmatmul.mubr.f32.gmra.mrb[0].mxu0 %v3387
        %v3389 = vpop.f32.mrb[0].mxu0
        %v3390 = vadd.f32 %v3299, %v3389
        %v3391 = vpop.f32.mrb[0].mxu0
        %3392 = vdwg.mxu0
        %3393 = vmatprep.subr.mxu0 0.0
        %v3394 = vand.u32 %v1640, 4294901760
        %v3395 = vsub.f32 %v1640, %v3394
        %3396 = vmatpush1.msra.mxu0 %v3395
        %3397 = vmatprep.subr.mxu0 0.0
        %v3398 = vand.u32 %v1641, 4294901760
        %v3399 = vsub.f32 %v1641, %v3398
        %3400 = vmatpush1.msra.mxu0 %v3399
        %3401 = vmatprep.subr.mxu0 0.0
        %v3402 = vand.u32 %v1642, 4294901760
        %v3403 = vsub.f32 %v1642, %v3402
        %3404 = vmatpush1.msra.mxu0 %v3403
        %3405 = vmatprep.subr.mxu0 0.0
        %v3406 = vand.u32 %v1643, 4294901760
        %v3407 = vsub.f32 %v1643, %v3406
        %3408 = vmatpush1.msra.mxu0 %v3407
        %3409 = vmatprep.subr.mxu0 0.0
        %3410 = vmatpush1.msra.mxu0 0.0
        %3411 = vmatprep.subr.mxu0 0.0
        %3412 = vmatpush1.msra.mxu0 0.0
        %3413 = vmatprep.subr.mxu0 0.0
        %3414 = vmatpush1.msra.mxu0 0.0
        %3415 = vmatprep.subr.mxu0 0.0
        %3416 = vmatpush1.msra.mxu0 0.0
        %3417 = vmatprep.subr.mxu0 0.0
        %3418 = vmatpush1.msra.mxu0 0.0
        %3419 = vmatprep.subr.mxu0 0.0
        %3420 = vmatpush1.msra.mxu0 0.0
        %3421 = vmatprep.subr.mxu0 0.0
        %3422 = vmatpush1.msra.mxu0 0.0
        %3423 = vmatprep.subr.mxu0 0.0
        %3424 = vmatpush1.msra.mxu0 0.0
        %3425 = vmatprep.subr.mxu0 0.0
        %3426 = vmatpush1.msra.mxu0 0.0
        %3427 = vmatprep.subr.mxu0 0.0
        %3428 = vmatpush1.msra.mxu0 0.0
        %3429 = vmatprep.subr.mxu0 0.0
        %3430 = vmatpush1.msra.mxu0 0.0
        %3431 = vmatprep.subr.mxu0 0.0
        %3432 = vmatpush1.msra.mxu0 0.0
        %3433 = vmatprep.subr.mxu0 0.0
        %3434 = vmatpush1.msra.mxu0 0.0
        %3435 = vmatprep.subr.mxu0 0.0
        %3436 = vmatpush1.msra.mxu0 0.0
        %3437 = vmatprep.subr.mxu0 0.0
        %3438 = vmatpush1.msra.mxu0 0.0
        %3439 = vmatprep.subr.mxu0 0.0
        %3440 = vmatpush1.msra.mxu0 0.0
        %3441 = vmatprep.subr.mxu0 0.0
        %3442 = vmatpush1.msra.mxu0 0.0
        %3443 = vmatprep.subr.mxu0 0.0
        %3444 = vmatpush1.msra.mxu0 0.0
        %3445 = vmatprep.subr.mxu0 0.0
        %3446 = vmatpush1.msra.mxu0 0.0
        %3447 = vmatprep.subr.mxu0 0.0
        %3448 = vmatpush1.msra.mxu0 0.0
        %3449 = vmatprep.subr.mxu0 0.0
        %3450 = vmatpush1.msra.mxu0 0.0
        %3451 = vmatprep.subr.mxu0 0.0
        %3452 = vmatpush1.msra.mxu0 0.0
        %3453 = vmatprep.subr.mxu0 0.0
        %3454 = vmatpush1.msra.mxu0 0.0
        %3455 = vmatprep.subr.mxu0 0.0
        %3456 = vmatpush1.msra.mxu0 0.0
        %3457 = vmatprep.subr.mxu0 0.0
        %3458 = vmatpush1.msra.mxu0 0.0
        %3459 = vmatprep.subr.mxu0 0.0
        %3460 = vmatpush1.msra.mxu0 0.0
        %3461 = vmatprep.subr.mxu0 0.0
        %3462 = vmatpush1.msra.mxu0 0.0
        %3463 = vmatprep.subr.mxu0 0.0
        %3464 = vmatpush1.msra.mxu0 0.0
        %3465 = vmatprep.mubr.f32.mxu0 0.0
        %v3466 = vand.u32 %v3221, 4294901760
        %v3467 = vsub.f32 %v3221, %v3466
        %3468 = vmatmul.mubr.f32.gmra.mrb[0].mxu0 %v3467
        %v3469 = vpop.f32.mrb[0].mxu0
        %v3470 = vadd.f32 %v3390, %v3469
        %v3471 = vpop.f32.mrb[0].mxu0
        %3472 = vdwg.mxu0
        %3473 = vmatprep.subr.mxu0 0.0
        %v3474 = vand.u32 %v1640, 4294901760
        %3475 = vmatpush1.msra.mxu0 %v3474
        %3476 = vmatprep.subr.mxu0 0.0
        %v3477 = vand.u32 %v1641, 4294901760
        %3478 = vmatpush1.msra.mxu0 %v3477
        %3479 = vmatprep.subr.mxu0 0.0
        %v3480 = vand.u32 %v1642, 4294901760
        %3481 = vmatpush1.msra.mxu0 %v3480
        %3482 = vmatprep.subr.mxu0 0.0
        %v3483 = vand.u32 %v1643, 4294901760
        %3484 = vmatpush1.msra.mxu0 %v3483
        %3485 = vmatprep.subr.mxu0 0.0
        %3486 = vmatpush1.msra.mxu0 0.0
        %3487 = vmatprep.subr.mxu0 0.0
        %3488 = vmatpush1.msra.mxu0 0.0
        %3489 = vmatprep.subr.mxu0 0.0
        %3490 = vmatpush1.msra.mxu0 0.0
        %3491 = vmatprep.subr.mxu0 0.0
        %3492 = vmatpush1.msra.mxu0 0.0
        %3493 = vmatprep.subr.mxu0 0.0
        %3494 = vmatpush1.msra.mxu0 0.0
        %3495 = vmatprep.subr.mxu0 0.0
        %3496 = vmatpush1.msra.mxu0 0.0
        %3497 = vmatprep.subr.mxu0 0.0
        %3498 = vmatpush1.msra.mxu0 0.0
        %3499 = vmatprep.subr.mxu0 0.0
        %3500 = vmatpush1.msra.mxu0 0.0
        %3501 = vmatprep.subr.mxu0 0.0
        %3502 = vmatpush1.msra.mxu0 0.0
        %3503 = vmatprep.subr.mxu0 0.0
        %3504 = vmatpush1.msra.mxu0 0.0
        %3505 = vmatprep.subr.mxu0 0.0
        %3506 = vmatpush1.msra.mxu0 0.0
        %3507 = vmatprep.subr.mxu0 0.0
        %3508 = vmatpush1.msra.mxu0 0.0
        %3509 = vmatprep.subr.mxu0 0.0
        %3510 = vmatpush1.msra.mxu0 0.0
        %3511 = vmatprep.subr.mxu0 0.0
        %3512 = vmatpush1.msra.mxu0 0.0
        %3513 = vmatprep.subr.mxu0 0.0
        %3514 = vmatpush1.msra.mxu0 0.0
        %3515 = vmatprep.subr.mxu0 0.0
        %3516 = vmatpush1.msra.mxu0 0.0
        %3517 = vmatprep.subr.mxu0 0.0
        %3518 = vmatpush1.msra.mxu0 0.0
        %3519 = vmatprep.subr.mxu0 0.0
        %3520 = vmatpush1.msra.mxu0 0.0
        %3521 = vmatprep.subr.mxu0 0.0
        %3522 = vmatpush1.msra.mxu0 0.0
        %3523 = vmatprep.subr.mxu0 0.0
        %3524 = vmatpush1.msra.mxu0 0.0
        %3525 = vmatprep.subr.mxu0 0.0
        %3526 = vmatpush1.msra.mxu0 0.0
        %3527 = vmatprep.subr.mxu0 0.0
        %3528 = vmatpush1.msra.mxu0 0.0
        %3529 = vmatprep.subr.mxu0 0.0
        %3530 = vmatpush1.msra.mxu0 0.0
        %3531 = vmatprep.subr.mxu0 0.0
        %3532 = vmatpush1.msra.mxu0 0.0
        %3533 = vmatprep.subr.mxu0 0.0
        %3534 = vmatpush1.msra.mxu0 0.0
        %3535 = vmatprep.subr.mxu0 0.0
        %3536 = vmatpush1.msra.mxu0 0.0
        %3537 = vmatprep.subr.mxu0 0.0
        %3538 = vmatpush1.msra.mxu0 0.0
        %3539 = vmatprep.subr.mxu0 0.0
        %3540 = vmatpush1.msra.mxu0 0.0
        %3541 = vmatprep.mubr.f32.mxu0 0.0
        %v3542 = vand.u32 %v3221, 4294901760
        %v3543 = vsub.f32 %v3221, %v3542
        %v3544 = vand.u32 %v3543, 4294901760
        %3545 = vmatmul.mubr.f32.gmra.mrb[0].mxu0 %v3544
        %v3546 = vpop.f32.mrb[0].mxu0
        %v3547 = vadd.f32 %v3470, %v3546
        %v3548 = vpop.f32.mrb[0].mxu0
        %3549 = vdwg.mxu0
        %3550 = vmatprep.subr.mxu0 0.0
        %v3551 = vand.u32 %v1640, 4294901760
        %v3552 = vsub.f32 %v1640, %v3551
        %v3553 = vand.u32 %v3552, 4294901760
        %3554 = vmatpush1.msra.mxu0 %v3553
        %3555 = vmatprep.subr.mxu0 0.0
        %v3556 = vand.u32 %v1641, 4294901760
        %v3557 = vsub.f32 %v1641, %v3556
        %v3558 = vand.u32 %v3557, 4294901760
        %3559 = vmatpush1.msra.mxu0 %v3558
        %3560 = vmatprep.subr.mxu0 0.0
        %v3561 = vand.u32 %v1642, 4294901760
        %v3562 = vsub.f32 %v1642, %v3561
        %v3563 = vand.u32 %v3562, 4294901760
        %3564 = vmatpush1.msra.mxu0 %v3563
        %3565 = vmatprep.subr.mxu0 0.0
        %v3566 = vand.u32 %v1643, 4294901760
        %v3567 = vsub.f32 %v1643, %v3566
        %v3568 = vand.u32 %v3567, 4294901760
        %3569 = vmatpush1.msra.mxu0 %v3568
        %3570 = vmatprep.subr.mxu0 0.0
        %3571 = vmatpush1.msra.mxu0 0.0
        %3572 = vmatprep.subr.mxu0 0.0
        %3573 = vmatpush1.msra.mxu0 0.0
        %3574 = vmatprep.subr.mxu0 0.0
        %3575 = vmatpush1.msra.mxu0 0.0
        %3576 = vmatprep.subr.mxu0 0.0
        %3577 = vmatpush1.msra.mxu0 0.0
        %3578 = vmatprep.subr.mxu0 0.0
        %3579 = vmatpush1.msra.mxu0 0.0
        %3580 = vmatprep.subr.mxu0 0.0
        %3581 = vmatpush1.msra.mxu0 0.0
        %3582 = vmatprep.subr.mxu0 0.0
        %3583 = vmatpush1.msra.mxu0 0.0
        %3584 = vmatprep.subr.mxu0 0.0
        %3585 = vmatpush1.msra.mxu0 0.0
        %3586 = vmatprep.subr.mxu0 0.0
        %3587 = vmatpush1.msra.mxu0 0.0
        %3588 = vmatprep.subr.mxu0 0.0
        %3589 = vmatpush1.msra.mxu0 0.0
        %3590 = vmatprep.subr.mxu0 0.0
        %3591 = vmatpush1.msra.mxu0 0.0
        %3592 = vmatprep.subr.mxu0 0.0
        %3593 = vmatpush1.msra.mxu0 0.0
        %3594 = vmatprep.subr.mxu0 0.0
        %3595 = vmatpush1.msra.mxu0 0.0
        %3596 = vmatprep.subr.mxu0 0.0
        %3597 = vmatpush1.msra.mxu0 0.0
        %3598 = vmatprep.subr.mxu0 0.0
        %3599 = vmatpush1.msra.mxu0 0.0
        %3600 = vmatprep.subr.mxu0 0.0
        %3601 = vmatpush1.msra.mxu0 0.0
        %3602 = vmatprep.subr.mxu0 0.0
        %3603 = vmatpush1.msra.mxu0 0.0
        %3604 = vmatprep.subr.mxu0 0.0
        %3605 = vmatpush1.msra.mxu0 0.0
        %3606 = vmatprep.subr.mxu0 0.0
        %3607 = vmatpush1.msra.mxu0 0.0
        %3608 = vmatprep.subr.mxu0 0.0
        %3609 = vmatpush1.msra.mxu0 0.0
        %3610 = vmatprep.subr.mxu0 0.0
        %3611 = vmatpush1.msra.mxu0 0.0
        %3612 = vmatprep.subr.mxu0 0.0
        %3613 = vmatpush1.msra.mxu0 0.0
        %3614 = vmatprep.subr.mxu0 0.0
        %3615 = vmatpush1.msra.mxu0 0.0
        %3616 = vmatprep.subr.mxu0 0.0
        %3617 = vmatpush1.msra.mxu0 0.0
        %3618 = vmatprep.subr.mxu0 0.0
        %3619 = vmatpush1.msra.mxu0 0.0
        %3620 = vmatprep.subr.mxu0 0.0
        %3621 = vmatpush1.msra.mxu0 0.0
        %3622 = vmatprep.subr.mxu0 0.0
        %3623 = vmatpush1.msra.mxu0 0.0
        %3624 = vmatprep.subr.mxu0 0.0
        %3625 = vmatpush1.msra.mxu0 0.0
        %3626 = vmatprep.mubr.f32.mxu0 0.0
        %v3627 = vand.u32 %v3221, 4294901760
        %3628 = vmatmul.mubr.f32.gmra.mrb[0].mxu0 %v3627
        %v3629 = vpop.f32.mrb[0].mxu0
        %v3630 = vadd.f32 %v3547, %v3629
        %v3631 = vpop.f32.mrb[0].mxu0
        %3632 = vdwg.mxu0
        %3633 = vmatprep.subr.mxu0 0.0
        %v3634 = vand.u32 %v1640, 4294901760
        %3635 = vmatpush1.msra.mxu0 %v3634
        %3636 = vmatprep.subr.mxu0 0.0
        %v3637 = vand.u32 %v1641, 4294901760
        %3638 = vmatpush1.msra.mxu0 %v3637
        %3639 = vmatprep.subr.mxu0 0.0
        %v3640 = vand.u32 %v1642, 4294901760
        %3641 = vmatpush1.msra.mxu0 %v3640
        %3642 = vmatprep.subr.mxu0 0.0
        %v3643 = vand.u32 %v1643, 4294901760
        %3644 = vmatpush1.msra.mxu0 %v3643
        %3645 = vmatprep.subr.mxu0 0.0
        %3646 = vmatpush1.msra.mxu0 0.0
        %3647 = vmatprep.subr.mxu0 0.0
        %3648 = vmatpush1.msra.mxu0 0.0
        %3649 = vmatprep.subr.mxu0 0.0
        %3650 = vmatpush1.msra.mxu0 0.0
        %3651 = vmatprep.subr.mxu0 0.0
        %3652 = vmatpush1.msra.mxu0 0.0
        %3653 = vmatprep.subr.mxu0 0.0
        %3654 = vmatpush1.msra.mxu0 0.0
        %3655 = vmatprep.subr.mxu0 0.0
        %3656 = vmatpush1.msra.mxu0 0.0
        %3657 = vmatprep.subr.mxu0 0.0
        %3658 = vmatpush1.msra.mxu0 0.0
        %3659 = vmatprep.subr.mxu0 0.0
        %3660 = vmatpush1.msra.mxu0 0.0
        %3661 = vmatprep.subr.mxu0 0.0
        %3662 = vmatpush1.msra.mxu0 0.0
        %3663 = vmatprep.subr.mxu0 0.0
        %3664 = vmatpush1.msra.mxu0 0.0
        %3665 = vmatprep.subr.mxu0 0.0
        %3666 = vmatpush1.msra.mxu0 0.0
        %3667 = vmatprep.subr.mxu0 0.0
        %3668 = vmatpush1.msra.mxu0 0.0
        %3669 = vmatprep.subr.mxu0 0.0
        %3670 = vmatpush1.msra.mxu0 0.0
        %3671 = vmatprep.subr.mxu0 0.0
        %3672 = vmatpush1.msra.mxu0 0.0
        %3673 = vmatprep.subr.mxu0 0.0
        %3674 = vmatpush1.msra.mxu0 0.0
        %3675 = vmatprep.subr.mxu0 0.0
        %3676 = vmatpush1.msra.mxu0 0.0
        %3677 = vmatprep.subr.mxu0 0.0
        %3678 = vmatpush1.msra.mxu0 0.0
        %3679 = vmatprep.subr.mxu0 0.0
        %3680 = vmatpush1.msra.mxu0 0.0
        %3681 = vmatprep.subr.mxu0 0.0
        %3682 = vmatpush1.msra.mxu0 0.0
        %3683 = vmatprep.subr.mxu0 0.0
        %3684 = vmatpush1.msra.mxu0 0.0
        %3685 = vmatprep.subr.mxu0 0.0
        %3686 = vmatpush1.msra.mxu0 0.0
        %3687 = vmatprep.subr.mxu0 0.0
        %3688 = vmatpush1.msra.mxu0 0.0
        %3689 = vmatprep.subr.mxu0 0.0
        %3690 = vmatpush1.msra.mxu0 0.0
        %3691 = vmatprep.subr.mxu0 0.0
        %3692 = vmatpush1.msra.mxu0 0.0
        %3693 = vmatprep.subr.mxu0 0.0
        %3694 = vmatpush1.msra.mxu0 0.0
        %3695 = vmatprep.subr.mxu0 0.0
        %3696 = vmatpush1.msra.mxu0 0.0
        %3697 = vmatprep.subr.mxu0 0.0
        %3698 = vmatpush1.msra.mxu0 0.0
        %3699 = vmatprep.subr.mxu0 0.0
        %3700 = vmatpush1.msra.mxu0 0.0
        %3701 = vmatprep.mubr.f32.mxu0 0.0
        %v3702 = vand.u32 %v3221, 4294901760
        %3703 = vmatmul.mubr.f32.gmra.mrb[0].mxu0 %v3702
        %v3704 = vpop.f32.mrb[0].mxu0
        %v3705 = vadd.f32 %v3630, %v3704
        %v3706 = vpop.f32.mrb[0].mxu0
        %3707 = vdwg.mxu0
        %v3708 = vadd.f32 %v1633, %v3705
        %v3709 = vxor.u32 %v3708, 2147483648
        %v3710 = vmul.f32 %v3709, 1.442695
        %v3711 = vpow.pop %v3710
        %v3712 = vadd.f32 %v3711, 1.0
        %v3713 = vrcp.pop %v3712
        %v3714 = vmul.f32 1.0, %v3713
        %v3715 = vtanh.pop %v3708
        %v3716 = vmul.f32 %v3714, %v3214
        %3718 = vrot.lane.b32.xlu0 %v3715, 64
        %v3719 = vpop.permute.xlu0 %3718
        %v3721 = vmul.f32 %v3714, %v3719
        %3723 = vrot.lane.b32.xlu0 %v3721, 32
        %v3724 = vpop.permute.xlu0 %3723
        %v3726 = vadd.f32 %v3716, %v3724
        %v3727 = vtanh.pop %v3726
        %3729 = vrot.lane.b32.xlu0 %v3727, 64
        %v3730 = vpop.permute.xlu0 %3729
        %v3732 = vmul.f32 %v3714, %v3730
        %v3733 = vsub.f32 %v3732, %v3217
        %3735 = vset.pattern.permute.xlu0 0
        %3736 = vperm.xlu0 %3735, %v1639
        %v3737 = vpop.permute.xlu0 %3736
        %v3739 = vmul.f32 %v3737, %v3733
        %v3740 = vadd.f32 %v3217, %v3739
        %v3741 = vld [vmem:[%s360] sm:$0xff]
        %v3742 = vld [vmem:[%s360 + $0x8] sm:$0xff]
        %v3743 = vld [vmem:[%s360 + $0x10] sm:$0xff]
        %3745 = vrot.lane.b32.xlu0 %v3740, 32
        %v3746 = vpop.permute.xlu0 %3745
        %vm3748 = vcmask 64512
        %v3750 = vsel %vm3748, %v3741, 0
        %v3753 = vsel %vm3748, %v3742, 0
        %v3756 = vsel %vm3748, %v3743, 0
        %3758 = vmatprep.subr.mxu0 0.0
        %v3759 = vand.u32 %v3746, 4294901760
        %3760 = vmatpush1.msra.mxu0 %v3759
        %3761 = vmatprep.subr.mxu0 0.0
        %3762 = vmatpush1.msra.mxu0 0.0
        %3763 = vmatprep.subr.mxu0 0.0
        %3764 = vmatpush1.msra.mxu0 0.0
        %3765 = vmatprep.subr.mxu0 0.0
        %3766 = vmatpush1.msra.mxu0 0.0
        %3767 = vmatprep.subr.mxu0 0.0
        %3768 = vmatpush1.msra.mxu0 0.0
        %3769 = vmatprep.subr.mxu0 0.0
        %3770 = vmatpush1.msra.mxu0 0.0
        %3771 = vmatprep.subr.mxu0 0.0
        %3772 = vmatpush1.msra.mxu0 0.0
        %3773 = vmatprep.subr.mxu0 0.0
        %3774 = vmatpush1.msra.mxu0 0.0
        %3775 = vmatprep.subr.mxu0 0.0
        %3776 = vmatpush1.msra.mxu0 0.0
        %3777 = vmatprep.subr.mxu0 0.0
        %3778 = vmatpush1.msra.mxu0 0.0
        %3779 = vmatprep.subr.mxu0 0.0
        %3780 = vmatpush1.msra.mxu0 0.0
        %3781 = vmatprep.subr.mxu0 0.0
        %3782 = vmatpush1.msra.mxu0 0.0
        %3783 = vmatprep.subr.mxu0 0.0
        %3784 = vmatpush1.msra.mxu0 0.0
        %3785 = vmatprep.subr.mxu0 0.0
        %3786 = vmatpush1.msra.mxu0 0.0
        %3787 = vmatprep.subr.mxu0 0.0
        %3788 = vmatpush1.msra.mxu0 0.0
        %3789 = vmatprep.subr.mxu0 0.0
        %3790 = vmatpush1.msra.mxu0 0.0
        %3791 = vmatprep.subr.mxu0 0.0
        %3792 = vmatpush1.msra.mxu0 0.0
        %3793 = vmatprep.subr.mxu0 0.0
        %3794 = vmatpush1.msra.mxu0 0.0
        %3795 = vmatprep.subr.mxu0 0.0
        %3796 = vmatpush1.msra.mxu0 0.0
        %3797 = vmatprep.subr.mxu0 0.0
        %3798 = vmatpush1.msra.mxu0 0.0
        %3799 = vmatprep.subr.mxu0 0.0
        %3800 = vmatpush1.msra.mxu0 0.0
        %3801 = vmatprep.subr.mxu0 0.0
        %3802 = vmatpush1.msra.mxu0 0.0
        %3803 = vmatprep.subr.mxu0 0.0
        %3804 = vmatpush1.msra.mxu0 0.0
        %3805 = vmatprep.subr.mxu0 0.0
        %3806 = vmatpush1.msra.mxu0 0.0
        %3807 = vmatprep.subr.mxu0 0.0
        %3808 = vmatpush1.msra.mxu0 0.0
        %3809 = vmatprep.subr.mxu0 0.0
        %3810 = vmatpush1.msra.mxu0 0.0
        %3811 = vmatprep.subr.mxu0 0.0
        %3812 = vmatpush1.msra.mxu0 0.0
        %3813 = vmatprep.subr.mxu0 0.0
        %3814 = vmatpush1.msra.mxu0 0.0
        %3815 = vmatprep.subr.mxu0 0.0
        %3816 = vmatpush1.msra.mxu0 0.0
        %3817 = vmatprep.subr.mxu0 0.0
        %3818 = vmatpush1.msra.mxu0 0.0
        %3819 = vmatprep.subr.mxu0 0.0
        %3820 = vmatpush1.msra.mxu0 0.0
        %3821 = vmatprep.subr.mxu0 0.0
        %3822 = vmatpush1.msra.mxu0 0.0
        %3823 = vmatprep.mubr.f32.mxu0 0.0
        %v3824 = vand.u32 %v3750, 4294901760
        %v3825 = vsub.f32 %v3750, %v3824
        %v3826 = vand.u32 %v3825, 4294901760
        %v3827 = vsub.f32 %v3825, %v3826
        %v3828 = vand.u32 %v3827, 4294901760
        %3829 = vmatmul.mubr.f32.gmra.mrb[0].mxu0 %v3828
        %v3830 = vpop.f32.mrb[0].mxu0
        %v3831 = vadd.f32 0.0, %v3830
        %v3832 = vpop.f32.mrb[0].mxu0
        %3833 = vmatprep.mubr.f32.mxu0 0.0
        %v3834 = vand.u32 %v3753, 4294901760
        %v3835 = vsub.f32 %v3753, %v3834
        %v3836 = vand.u32 %v3835, 4294901760
        %v3837 = vsub.f32 %v3835, %v3836
        %v3838 = vand.u32 %v3837, 4294901760
        %3839 = vmatmul.mubr.f32.gmra.mrb[0].mxu0 %v3838
        %v3840 = vpop.f32.mrb[0].mxu0
        %v3841 = vadd.f32 0.0, %v3840
        %v3842 = vpop.f32.mrb[0].mxu0
        %3843 = vmatprep.mubr.f32.mxu0 0.0
        %v3844 = vand.u32 %v3756, 4294901760
        %v3845 = vsub.f32 %v3756, %v3844
        %v3846 = vand.u32 %v3845, 4294901760
        %v3847 = vsub.f32 %v3845, %v3846
        %v3848 = vand.u32 %v3847, 4294901760
        %3849 = vmatmul.mubr.f32.gmra.mrb[0].mxu0 %v3848
        %v3850 = vpop.f32.mrb[0].mxu0
        %v3851 = vadd.f32 0.0, %v3850
        %v3852 = vpop.f32.mrb[0].mxu0
        %3853 = vdwg.mxu0
        %3854 = vmatprep.subr.mxu0 0.0
        %v3855 = vand.u32 %v3746, 4294901760
        %v3856 = vsub.f32 %v3746, %v3855
        %v3857 = vand.u32 %v3856, 4294901760
        %v3858 = vsub.f32 %v3856, %v3857
        %v3859 = vand.u32 %v3858, 4294901760
        %3860 = vmatpush1.msra.mxu0 %v3859
        %3861 = vmatprep.subr.mxu0 0.0
        %3862 = vmatpush1.msra.mxu0 0.0
        %3863 = vmatprep.subr.mxu0 0.0
        %3864 = vmatpush1.msra.mxu0 0.0
        %3865 = vmatprep.subr.mxu0 0.0
        %3866 = vmatpush1.msra.mxu0 0.0
        %3867 = vmatprep.subr.mxu0 0.0
        %3868 = vmatpush1.msra.mxu0 0.0
        %3869 = vmatprep.subr.mxu0 0.0
        %3870 = vmatpush1.msra.mxu0 0.0
        %3871 = vmatprep.subr.mxu0 0.0
        %3872 = vmatpush1.msra.mxu0 0.0
        %3873 = vmatprep.subr.mxu0 0.0
        %3874 = vmatpush1.msra.mxu0 0.0
        %3875 = vmatprep.subr.mxu0 0.0
        %3876 = vmatpush1.msra.mxu0 0.0
        %3877 = vmatprep.subr.mxu0 0.0
        %3878 = vmatpush1.msra.mxu0 0.0
        %3879 = vmatprep.subr.mxu0 0.0
        %3880 = vmatpush1.msra.mxu0 0.0
        %3881 = vmatprep.subr.mxu0 0.0
        %3882 = vmatpush1.msra.mxu0 0.0
        %3883 = vmatprep.subr.mxu0 0.0
        %3884 = vmatpush1.msra.mxu0 0.0
        %3885 = vmatprep.subr.mxu0 0.0
        %3886 = vmatpush1.msra.mxu0 0.0
        %3887 = vmatprep.subr.mxu0 0.0
        %3888 = vmatpush1.msra.mxu0 0.0
        %3889 = vmatprep.subr.mxu0 0.0
        %3890 = vmatpush1.msra.mxu0 0.0
        %3891 = vmatprep.subr.mxu0 0.0
        %3892 = vmatpush1.msra.mxu0 0.0
        %3893 = vmatprep.subr.mxu0 0.0
        %3894 = vmatpush1.msra.mxu0 0.0
        %3895 = vmatprep.subr.mxu0 0.0
        %3896 = vmatpush1.msra.mxu0 0.0
        %3897 = vmatprep.subr.mxu0 0.0
        %3898 = vmatpush1.msra.mxu0 0.0
        %3899 = vmatprep.subr.mxu0 0.0
        %3900 = vmatpush1.msra.mxu0 0.0
        %3901 = vmatprep.subr.mxu0 0.0
        %3902 = vmatpush1.msra.mxu0 0.0
        %3903 = vmatprep.subr.mxu0 0.0
        %3904 = vmatpush1.msra.mxu0 0.0
        %3905 = vmatprep.subr.mxu0 0.0
        %3906 = vmatpush1.msra.mxu0 0.0
        %3907 = vmatprep.subr.mxu0 0.0
        %3908 = vmatpush1.msra.mxu0 0.0
        %3909 = vmatprep.subr.mxu0 0.0
        %3910 = vmatpush1.msra.mxu0 0.0
        %3911 = vmatprep.subr.mxu0 0.0
        %3912 = vmatpush1.msra.mxu0 0.0
        %3913 = vmatprep.subr.mxu0 0.0
        %3914 = vmatpush1.msra.mxu0 0.0
        %3915 = vmatprep.subr.mxu0 0.0
        %3916 = vmatpush1.msra.mxu0 0.0
        %3917 = vmatprep.subr.mxu0 0.0
        %3918 = vmatpush1.msra.mxu0 0.0
        %3919 = vmatprep.subr.mxu0 0.0
        %3920 = vmatpush1.msra.mxu0 0.0
        %3921 = vmatprep.subr.mxu0 0.0
        %3922 = vmatpush1.msra.mxu0 0.0
        %3923 = vmatprep.mubr.f32.mxu0 0.0
        %v3924 = vand.u32 %v3750, 4294901760
        %3925 = vmatmul.mubr.f32.gmra.mrb[0].mxu0 %v3924
        %v3926 = vpop.f32.mrb[0].mxu0
        %v3927 = vadd.f32 %v3831, %v3926
        %v3928 = vpop.f32.mrb[0].mxu0
        %3929 = vmatprep.mubr.f32.mxu0 0.0
        %v3930 = vand.u32 %v3753, 4294901760
        %3931 = vmatmul.mubr.f32.gmra.mrb[0].mxu0 %v3930
        %v3932 = vpop.f32.mrb[0].mxu0
        %v3933 = vadd.f32 %v3841, %v3932
        %v3934 = vpop.f32.mrb[0].mxu0
        %3935 = vmatprep.mubr.f32.mxu0 0.0
        %v3936 = vand.u32 %v3756, 4294901760
        %3937 = vmatmul.mubr.f32.gmra.mrb[0].mxu0 %v3936
        %v3938 = vpop.f32.mrb[0].mxu0
        %v3939 = vadd.f32 %v3851, %v3938
        %v3940 = vpop.f32.mrb[0].mxu0
        %3941 = vdwg.mxu0
        %3942 = vmatprep.subr.mxu0 0.0
        %v3943 = vand.u32 %v3746, 4294901760
        %v3944 = vsub.f32 %v3746, %v3943
        %3945 = vmatpush1.msra.mxu0 %v3944
        %3946 = vmatprep.subr.mxu0 0.0
        %3947 = vmatpush1.msra.mxu0 0.0
        %3948 = vmatprep.subr.mxu0 0.0
        %3949 = vmatpush1.msra.mxu0 0.0
        %3950 = vmatprep.subr.mxu0 0.0
        %3951 = vmatpush1.msra.mxu0 0.0
        %3952 = vmatprep.subr.mxu0 0.0
        %3953 = vmatpush1.msra.mxu0 0.0
        %3954 = vmatprep.subr.mxu0 0.0
        %3955 = vmatpush1.msra.mxu0 0.0
        %3956 = vmatprep.subr.mxu0 0.0
        %3957 = vmatpush1.msra.mxu0 0.0
        %3958 = vmatprep.subr.mxu0 0.0
        %3959 = vmatpush1.msra.mxu0 0.0
        %3960 = vmatprep.subr.mxu0 0.0
        %3961 = vmatpush1.msra.mxu0 0.0
        %3962 = vmatprep.subr.mxu0 0.0
        %3963 = vmatpush1.msra.mxu0 0.0
        %3964 = vmatprep.subr.mxu0 0.0
        %3965 = vmatpush1.msra.mxu0 0.0
        %3966 = vmatprep.subr.mxu0 0.0
        %3967 = vmatpush1.msra.mxu0 0.0
        %3968 = vmatprep.subr.mxu0 0.0
        %3969 = vmatpush1.msra.mxu0 0.0
        %3970 = vmatprep.subr.mxu0 0.0
        %3971 = vmatpush1.msra.mxu0 0.0
        %3972 = vmatprep.subr.mxu0 0.0
        %3973 = vmatpush1.msra.mxu0 0.0
        %3974 = vmatprep.subr.mxu0 0.0
        %3975 = vmatpush1.msra.mxu0 0.0
        %3976 = vmatprep.subr.mxu0 0.0
        %3977 = vmatpush1.msra.mxu0 0.0
        %3978 = vmatprep.subr.mxu0 0.0
        %3979 = vmatpush1.msra.mxu0 0.0
        %3980 = vmatprep.subr.mxu0 0.0
        %3981 = vmatpush1.msra.mxu0 0.0
        %3982 = vmatprep.subr.mxu0 0.0
        %3983 = vmatpush1.msra.mxu0 0.0
        %3984 = vmatprep.subr.mxu0 0.0
        %3985 = vmatpush1.msra.mxu0 0.0
        %3986 = vmatprep.subr.mxu0 0.0
        %3987 = vmatpush1.msra.mxu0 0.0
        %3988 = vmatprep.subr.mxu0 0.0
        %3989 = vmatpush1.msra.mxu0 0.0
        %3990 = vmatprep.subr.mxu0 0.0
        %3991 = vmatpush1.msra.mxu0 0.0
        %3992 = vmatprep.subr.mxu0 0.0
        %3993 = vmatpush1.msra.mxu0 0.0
        %3994 = vmatprep.subr.mxu0 0.0
        %3995 = vmatpush1.msra.mxu0 0.0
        %3996 = vmatprep.subr.mxu0 0.0
        %3997 = vmatpush1.msra.mxu0 0.0
        %3998 = vmatprep.subr.mxu0 0.0
        %3999 = vmatpush1.msra.mxu0 0.0
        %4000 = vmatprep.subr.mxu0 0.0
        %4001 = vmatpush1.msra.mxu0 0.0
        %4002 = vmatprep.subr.mxu0 0.0
        %4003 = vmatpush1.msra.mxu0 0.0
        %4004 = vmatprep.subr.mxu0 0.0
        %4005 = vmatpush1.msra.mxu0 0.0
        %4006 = vmatprep.subr.mxu0 0.0
        %4007 = vmatpush1.msra.mxu0 0.0
        %4008 = vmatprep.mubr.f32.mxu0 0.0
        %v4009 = vand.u32 %v3750, 4294901760
        %v4010 = vsub.f32 %v3750, %v4009
        %4011 = vmatmul.mubr.f32.gmra.mrb[0].mxu0 %v4010
        %v4012 = vpop.f32.mrb[0].mxu0
        %v4013 = vadd.f32 %v3927, %v4012
        %v4014 = vpop.f32.mrb[0].mxu0
        %4015 = vmatprep.mubr.f32.mxu0 0.0
        %v4016 = vand.u32 %v3753, 4294901760
        %v4017 = vsub.f32 %v3753, %v4016
        %4018 = vmatmul.mubr.f32.gmra.mrb[0].mxu0 %v4017
        %v4019 = vpop.f32.mrb[0].mxu0
        %v4020 = vadd.f32 %v3933, %v4019
        %v4021 = vpop.f32.mrb[0].mxu0
        %4022 = vmatprep.mubr.f32.mxu0 0.0
        %v4023 = vand.u32 %v3756, 4294901760
        %v4024 = vsub.f32 %v3756, %v4023
        %4025 = vmatmul.mubr.f32.gmra.mrb[0].mxu0 %v4024
        %v4026 = vpop.f32.mrb[0].mxu0
        %v4027 = vadd.f32 %v3939, %v4026
        %v4028 = vpop.f32.mrb[0].mxu0
        %4029 = vdwg.mxu0
        %4030 = vmatprep.subr.mxu0 0.0
        %v4031 = vand.u32 %v3746, 4294901760
        %4032 = vmatpush1.msra.mxu0 %v4031
        %4033 = vmatprep.subr.mxu0 0.0
        %4034 = vmatpush1.msra.mxu0 0.0
        %4035 = vmatprep.subr.mxu0 0.0
        %4036 = vmatpush1.msra.mxu0 0.0
        %4037 = vmatprep.subr.mxu0 0.0
        %4038 = vmatpush1.msra.mxu0 0.0
        %4039 = vmatprep.subr.mxu0 0.0
        %4040 = vmatpush1.msra.mxu0 0.0
        %4041 = vmatprep.subr.mxu0 0.0
        %4042 = vmatpush1.msra.mxu0 0.0
        %4043 = vmatprep.subr.mxu0 0.0
        %4044 = vmatpush1.msra.mxu0 0.0
        %4045 = vmatprep.subr.mxu0 0.0
        %4046 = vmatpush1.msra.mxu0 0.0
        %4047 = vmatprep.subr.mxu0 0.0
        %4048 = vmatpush1.msra.mxu0 0.0
        %4049 = vmatprep.subr.mxu0 0.0
        %4050 = vmatpush1.msra.mxu0 0.0
        %4051 = vmatprep.subr.mxu0 0.0
        %4052 = vmatpush1.msra.mxu0 0.0
        %4053 = vmatprep.subr.mxu0 0.0
        %4054 = vmatpush1.msra.mxu0 0.0
        %4055 = vmatprep.subr.mxu0 0.0
        %4056 = vmatpush1.msra.mxu0 0.0
        %4057 = vmatprep.subr.mxu0 0.0
        %4058 = vmatpush1.msra.mxu0 0.0
        %4059 = vmatprep.subr.mxu0 0.0
        %4060 = vmatpush1.msra.mxu0 0.0
        %4061 = vmatprep.subr.mxu0 0.0
        %4062 = vmatpush1.msra.mxu0 0.0
        %4063 = vmatprep.subr.mxu0 0.0
        %4064 = vmatpush1.msra.mxu0 0.0
        %4065 = vmatprep.subr.mxu0 0.0
        %4066 = vmatpush1.msra.mxu0 0.0
        %4067 = vmatprep.subr.mxu0 0.0
        %4068 = vmatpush1.msra.mxu0 0.0
        %4069 = vmatprep.subr.mxu0 0.0
        %4070 = vmatpush1.msra.mxu0 0.0
        %4071 = vmatprep.subr.mxu0 0.0
        %4072 = vmatpush1.msra.mxu0 0.0
        %4073 = vmatprep.subr.mxu0 0.0
        %4074 = vmatpush1.msra.mxu0 0.0
        %4075 = vmatprep.subr.mxu0 0.0
        %4076 = vmatpush1.msra.mxu0 0.0
        %4077 = vmatprep.subr.mxu0 0.0
        %4078 = vmatpush1.msra.mxu0 0.0
        %4079 = vmatprep.subr.mxu0 0.0
        %4080 = vmatpush1.msra.mxu0 0.0
        %4081 = vmatprep.subr.mxu0 0.0
        %4082 = vmatpush1.msra.mxu0 0.0
        %4083 = vmatprep.subr.mxu0 0.0
        %4084 = vmatpush1.msra.mxu0 0.0
        %4085 = vmatprep.subr.mxu0 0.0
        %4086 = vmatpush1.msra.mxu0 0.0
        %4087 = vmatprep.subr.mxu0 0.0
        %4088 = vmatpush1.msra.mxu0 0.0
        %4089 = vmatprep.subr.mxu0 0.0
        %4090 = vmatpush1.msra.mxu0 0.0
        %4091 = vmatprep.subr.mxu0 0.0
        %4092 = vmatpush1.msra.mxu0 0.0
        %4093 = vmatprep.subr.mxu0 0.0
        %4094 = vmatpush1.msra.mxu0 0.0
        %4095 = vmatprep.mubr.f32.mxu0 0.0
        %v4096 = vand.u32 %v3750, 4294901760
        %v4097 = vsub.f32 %v3750, %v4096
        %v4098 = vand.u32 %v4097, 4294901760
        %4099 = vmatmul.mubr.f32.gmra.mrb[0].mxu0 %v4098
        %v4100 = vpop.f32.mrb[0].mxu0
        %v4101 = vadd.f32 %v4013, %v4100
        %v4102 = vpop.f32.mrb[0].mxu0
        %4103 = vmatprep.mubr.f32.mxu0 0.0
        %v4104 = vand.u32 %v3753, 4294901760
        %v4105 = vsub.f32 %v3753, %v4104
        %v4106 = vand.u32 %v4105, 4294901760
        %4107 = vmatmul.mubr.f32.gmra.mrb[0].mxu0 %v4106
        %v4108 = vpop.f32.mrb[0].mxu0
        %v4109 = vadd.f32 %v4020, %v4108
        %v4110 = vpop.f32.mrb[0].mxu0
        %4111 = vmatprep.mubr.f32.mxu0 0.0
        %v4112 = vand.u32 %v3756, 4294901760
        %v4113 = vsub.f32 %v3756, %v4112
        %v4114 = vand.u32 %v4113, 4294901760
        %4115 = vmatmul.mubr.f32.gmra.mrb[0].mxu0 %v4114
        %v4116 = vpop.f32.mrb[0].mxu0
        %v4117 = vadd.f32 %v4027, %v4116
        %v4118 = vpop.f32.mrb[0].mxu0
        %4119 = vdwg.mxu0
        %4120 = vmatprep.subr.mxu0 0.0
        %v4121 = vand.u32 %v3746, 4294901760
        %v4122 = vsub.f32 %v3746, %v4121
        %v4123 = vand.u32 %v4122, 4294901760
        %4124 = vmatpush1.msra.mxu0 %v4123
        %4125 = vmatprep.subr.mxu0 0.0
        %4126 = vmatpush1.msra.mxu0 0.0
        %4127 = vmatprep.subr.mxu0 0.0
        %4128 = vmatpush1.msra.mxu0 0.0
        %4129 = vmatprep.subr.mxu0 0.0
        %4130 = vmatpush1.msra.mxu0 0.0
        %4131 = vmatprep.subr.mxu0 0.0
        %4132 = vmatpush1.msra.mxu0 0.0
        %4133 = vmatprep.subr.mxu0 0.0
        %4134 = vmatpush1.msra.mxu0 0.0
        %4135 = vmatprep.subr.mxu0 0.0
        %4136 = vmatpush1.msra.mxu0 0.0
        %4137 = vmatprep.subr.mxu0 0.0
        %4138 = vmatpush1.msra.mxu0 0.0
        %4139 = vmatprep.subr.mxu0 0.0
        %4140 = vmatpush1.msra.mxu0 0.0
        %4141 = vmatprep.subr.mxu0 0.0
        %4142 = vmatpush1.msra.mxu0 0.0
        %4143 = vmatprep.subr.mxu0 0.0
        %4144 = vmatpush1.msra.mxu0 0.0
        %4145 = vmatprep.subr.mxu0 0.0
        %4146 = vmatpush1.msra.mxu0 0.0
        %4147 = vmatprep.subr.mxu0 0.0
        %4148 = vmatpush1.msra.mxu0 0.0
        %4149 = vmatprep.subr.mxu0 0.0
        %4150 = vmatpush1.msra.mxu0 0.0
        %4151 = vmatprep.subr.mxu0 0.0
        %4152 = vmatpush1.msra.mxu0 0.0
        %4153 = vmatprep.subr.mxu0 0.0
        %4154 = vmatpush1.msra.mxu0 0.0
        %4155 = vmatprep.subr.mxu0 0.0
        %4156 = vmatpush1.msra.mxu0 0.0
        %4157 = vmatprep.subr.mxu0 0.0
        %4158 = vmatpush1.msra.mxu0 0.0
        %4159 = vmatprep.subr.mxu0 0.0
        %4160 = vmatpush1.msra.mxu0 0.0
        %4161 = vmatprep.subr.mxu0 0.0
        %4162 = vmatpush1.msra.mxu0 0.0
        %4163 = vmatprep.subr.mxu0 0.0
        %4164 = vmatpush1.msra.mxu0 0.0
        %4165 = vmatprep.subr.mxu0 0.0
        %4166 = vmatpush1.msra.mxu0 0.0
        %4167 = vmatprep.subr.mxu0 0.0
        %4168 = vmatpush1.msra.mxu0 0.0
        %4169 = vmatprep.subr.mxu0 0.0
        %4170 = vmatpush1.msra.mxu0 0.0
        %4171 = vmatprep.subr.mxu0 0.0
        %4172 = vmatpush1.msra.mxu0 0.0
        %4173 = vmatprep.subr.mxu0 0.0
        %4174 = vmatpush1.msra.mxu0 0.0
        %4175 = vmatprep.subr.mxu0 0.0
        %4176 = vmatpush1.msra.mxu0 0.0
        %4177 = vmatprep.subr.mxu0 0.0
        %4178 = vmatpush1.msra.mxu0 0.0
        %4179 = vmatprep.subr.mxu0 0.0
        %4180 = vmatpush1.msra.mxu0 0.0
        %4181 = vmatprep.subr.mxu0 0.0
        %4182 = vmatpush1.msra.mxu0 0.0
        %4183 = vmatprep.subr.mxu0 0.0
        %4184 = vmatpush1.msra.mxu0 0.0
        %4185 = vmatprep.subr.mxu0 0.0
        %4186 = vmatpush1.msra.mxu0 0.0
        %4187 = vmatprep.mubr.f32.mxu0 0.0
        %v4188 = vand.u32 %v3750, 4294901760
        %4189 = vmatmul.mubr.f32.gmra.mrb[0].mxu0 %v4188
        %v4190 = vpop.f32.mrb[0].mxu0
        %v4191 = vadd.f32 %v4101, %v4190
        %v4192 = vpop.f32.mrb[0].mxu0
        %4193 = vmatprep.mubr.f32.mxu0 0.0
        %v4194 = vand.u32 %v3753, 4294901760
        %4195 = vmatmul.mubr.f32.gmra.mrb[0].mxu0 %v4194
        %v4196 = vpop.f32.mrb[0].mxu0
        %v4197 = vadd.f32 %v4109, %v4196
        %v4198 = vpop.f32.mrb[0].mxu0
        %4199 = vmatprep.mubr.f32.mxu0 0.0
        %v4200 = vand.u32 %v3756, 4294901760
        %4201 = vmatmul.mubr.f32.gmra.mrb[0].mxu0 %v4200
        %v4202 = vpop.f32.mrb[0].mxu0
        %v4203 = vadd.f32 %v4117, %v4202
        %v4204 = vpop.f32.mrb[0].mxu0
        %4205 = vdwg.mxu0
        %4206 = vmatprep.subr.mxu0 0.0
        %v4207 = vand.u32 %v3746, 4294901760
        %4208 = vmatpush1.msra.mxu0 %v4207
        %4209 = vmatprep.subr.mxu0 0.0
        %4210 = vmatpush1.msra.mxu0 0.0
        %4211 = vmatprep.subr.mxu0 0.0
        %4212 = vmatpush1.msra.mxu0 0.0
        %4213 = vmatprep.subr.mxu0 0.0
        %4214 = vmatpush1.msra.mxu0 0.0
        %4215 = vmatprep.subr.mxu0 0.0
        %4216 = vmatpush1.msra.mxu0 0.0
        %4217 = vmatprep.subr.mxu0 0.0
        %4218 = vmatpush1.msra.mxu0 0.0
        %4219 = vmatprep.subr.mxu0 0.0
        %4220 = vmatpush1.msra.mxu0 0.0
        %4221 = vmatprep.subr.mxu0 0.0
        %4222 = vmatpush1.msra.mxu0 0.0
        %4223 = vmatprep.subr.mxu0 0.0
        %4224 = vmatpush1.msra.mxu0 0.0
        %4225 = vmatprep.subr.mxu0 0.0
        %4226 = vmatpush1.msra.mxu0 0.0
        %4227 = vmatprep.subr.mxu0 0.0
        %4228 = vmatpush1.msra.mxu0 0.0
        %4229 = vmatprep.subr.mxu0 0.0
        %4230 = vmatpush1.msra.mxu0 0.0
        %4231 = vmatprep.subr.mxu0 0.0
        %4232 = vmatpush1.msra.mxu0 0.0
        %4233 = vmatprep.subr.mxu0 0.0
        %4234 = vmatpush1.msra.mxu0 0.0
        %4235 = vmatprep.subr.mxu0 0.0
        %4236 = vmatpush1.msra.mxu0 0.0
        %4237 = vmatprep.subr.mxu0 0.0
        %4238 = vmatpush1.msra.mxu0 0.0
        %4239 = vmatprep.subr.mxu0 0.0
        %4240 = vmatpush1.msra.mxu0 0.0
        %4241 = vmatprep.subr.mxu0 0.0
        %4242 = vmatpush1.msra.mxu0 0.0
        %4243 = vmatprep.subr.mxu0 0.0
        %4244 = vmatpush1.msra.mxu0 0.0
        %4245 = vmatprep.subr.mxu0 0.0
        %4246 = vmatpush1.msra.mxu0 0.0
        %4247 = vmatprep.subr.mxu0 0.0
        %4248 = vmatpush1.msra.mxu0 0.0
        %4249 = vmatprep.subr.mxu0 0.0
        %4250 = vmatpush1.msra.mxu0 0.0
        %4251 = vmatprep.subr.mxu0 0.0
        %4252 = vmatpush1.msra.mxu0 0.0
        %4253 = vmatprep.subr.mxu0 0.0
        %4254 = vmatpush1.msra.mxu0 0.0
        %4255 = vmatprep.subr.mxu0 0.0
        %4256 = vmatpush1.msra.mxu0 0.0
        %4257 = vmatprep.subr.mxu0 0.0
        %4258 = vmatpush1.msra.mxu0 0.0
        %4259 = vmatprep.subr.mxu0 0.0
        %4260 = vmatpush1.msra.mxu0 0.0
        %4261 = vmatprep.subr.mxu0 0.0
        %4262 = vmatpush1.msra.mxu0 0.0
        %4263 = vmatprep.subr.mxu0 0.0
        %4264 = vmatpush1.msra.mxu0 0.0
        %4265 = vmatprep.subr.mxu0 0.0
        %4266 = vmatpush1.msra.mxu0 0.0
        %4267 = vmatprep.subr.mxu0 0.0
        %4268 = vmatpush1.msra.mxu0 0.0
        %4269 = vmatprep.subr.mxu0 0.0
        %4270 = vmatpush1.msra.mxu0 0.0
        %4271 = vmatprep.mubr.f32.mxu0 0.0
        %v4272 = vand.u32 %v3750, 4294901760
        %4273 = vmatmul.mubr.f32.gmra.mrb[0].mxu0 %v4272
        %v4274 = vpop.f32.mrb[0].mxu0
        %v4275 = vadd.f32 %v4191, %v4274
        %v4276 = vpop.f32.mrb[0].mxu0
        %4277 = vmatprep.mubr.f32.mxu0 0.0
        %v4278 = vand.u32 %v3753, 4294901760
        %4279 = vmatmul.mubr.f32.gmra.mrb[0].mxu0 %v4278
        %v4280 = vpop.f32.mrb[0].mxu0
        %v4281 = vadd.f32 %v4197, %v4280
        %v4282 = vpop.f32.mrb[0].mxu0
        %4283 = vmatprep.mubr.f32.mxu0 0.0
        %v4284 = vand.u32 %v3756, 4294901760
        %4285 = vmatmul.mubr.f32.gmra.mrb[0].mxu0 %v4284
        %v4286 = vpop.f32.mrb[0].mxu0
        %v4287 = vadd.f32 %v4203, %v4286
        %v4288 = vpop.f32.mrb[0].mxu0
        %4289 = vdwg.mxu0
        %v4290 = vld [vmem:[%s365] sm:$0xff]
        %v4291 = vld [vmem:[%s365 + $0x8] sm:$0xff]
        %v4292 = vld [vmem:[%s365 + $0x10] sm:$0xff]
        %v4293 = vsub.f32 1.0, %v4290
        %v4294 = vsub.f32 1.0, %v4291
        %v4295 = vsub.f32 1.0, %v4292
        %4297 = vset.pattern.permute.xlu0 0
        %4298 = vperm.xlu0 %4297, %v4293
        %v4299 = vpop.permute.xlu0 %4298
        %4302 = vset.pattern.permute.xlu0 0
        %4303 = vperm.xlu0 %4302, %v4294
        %v4304 = vpop.permute.xlu0 %4303
        %4307 = vset.pattern.permute.xlu0 0
        %4308 = vperm.xlu0 %4307, %v4295
        %v4309 = vpop.permute.xlu0 %4308
        %v4311 = vmul.f32 %v377, %v4299
        %v4312 = vmul.f32 %v378, %v4304
        %v4313 = vmul.f32 %v379, %v4309
        %v4314 = vadd.f32 %v4311, %v4275
        %v4315 = vadd.f32 %v4312, %v4281
        %v4316 = vadd.f32 %v4313, %v4287
        %4317 = vst.msk [vmem:[%s8] sm:$0xff] %vm1009, %v4314
        %4318 = vst.msk [vmem:[%s8 + $0x8] sm:$0xff] %vm1009, %v4315
        %4319 = vst.msk [vmem:[%s8 + $0x10] sm:$0xff] %vm1009, %v4316
        // Predicated region
        $region61: #{forward.1} parent=51 // pred_check
          %p4320 = pneg %p221
        $region62: #{forward.1} parent=51 // pred_check_branch
          %4322 = sbr.rel (%p4320) target = $region64
        $region63: #{forward.1} parent=51 // pred_region
          _
        $region64: #{forward.1} parent=51 // pred_fallthru
          _
        // Predicated region
        $region65: #{forward.1} parent=51 // pred_check
          %p4323 = pneg %p221
        $region66: #{forward.1} parent=51 // pred_check_branch
          %4325 = sbr.rel (%p4323) target = $region68
        $region67: #{forward.1} parent=51 // pred_region
          _
        $region68: #{forward.1} parent=51 // pred_fallthru
          _
      $region52: #{forward.1} parent=5 // pred_fallthru
        _
      %p4326 = scmp.le.s32.totalorder 2, %s15
      // Predicated region
      $region69: #{forward.1} parent=5 // pred_check
        %p4327 = pneg %p4326
      $region70: #{forward.1} parent=5 // pred_check_branch
        %4329 = sbr.rel (%p4327) target = $region72
      $region71: #{forward.1} parent=5 // pred_region
        %s4330 = ssub.s32 %s15, 2
      $region72: #{forward.1} parent=5 // pred_fallthru
        _
    $region6: #{forward.1} parent=1 // loop_footer
      %s19 = sadd.s32 1, %s15
    $region7: #{forward.1} parent=1 // loop_footer_branch
      %14 = sbr.rel target = $region3
    $region8: #{forward.1} parent=1 // loop_exit
      _
    %4331 = vsyncpa [#allocation3], 1
    %s4332 = scalar_lea.sflag [#allocation3], 1
    %4333 = vsyncpa %s4332, 1

</llo_original>
